<compile_context>
chip_gen: v7x
topology: tpu7x:2x2x1
jax: 0.10.0
libtpu: 0.0.40
codegen_flags: <defaults>
</compile_context>

<pallas_src>
import functools

import jax
import jax.numpy as jnp
from jax.experimental import pallas as pl
from jax.experimental.pallas import tpu as pltpu

LN_EPS = 1e-6  # LayerNorm2d eps used by NAFBlock


# ----------------------------------------------------------------------------
# Fused NAFBlock kernel (one batch element per grid step)
# ----------------------------------------------------------------------------
def _nafblock_kernel(x_ref,
                     ln1_w_ref, ln1_b_ref,
                     w1t_ref, b1_ref,
                     w2_ref, b2_ref,
                     sca_wt_ref, sca_b_ref,
                     w3t_ref, b3_ref,
                     beta_ref,
                     ln2_w_ref, ln2_b_ref,
                     w4t_ref, b4_ref,
                     w5t_ref, b5_ref,
                     gamma_ref,
                     o_ref,
                     pad_ref,
                     *, H, W, C, PAD):
    HW = H * W
    C2 = 2 * C
    f32 = jnp.float32
    bf16 = jnp.bfloat16

    def layer_norm(v, w_r, b_r):
        # Per-pixel LayerNorm over channels; channels live on sublanes so this
        # is a cheap sublane reduction (VPU adds + small XLU), not a lane reduce.
        mu = jnp.mean(v, axis=0, keepdims=True)
        vc = v - mu
        var = jnp.mean(vc * vc, axis=0, keepdims=True)
        return vc * jax.lax.rsqrt(var + LN_EPS) * w_r[...] + b_r[...]

    def conv1x1(wt_r, v, b_r):
        # 1x1 conv == MXU matmul; bf16 operands, f32 accumulation.
        return jnp.dot(wt_r[...], v.astype(bf16),
                       preferred_element_type=f32) + b_r[...]

    # ---------------- norm1 + conv1 (C -> 2C) ----------------
    xn = layer_norm(x_ref[0], ln1_w_ref, ln1_b_ref)          # (C, HW)  f32
    d = conv1x1(w1t_ref, xn, b1_ref)                          # (2C, HW) f32

    # ---------------- depthwise 3x3, padding = 1 ----------------
    # Scratch lane layout: [ left halo PAD | image HW | right halo PAD ].
    # Only the constant-size halos are zeroed each step (the interior is fully
    # overwritten).  NOTE: zeroing once under program_id==0 would be wrong when
    # the "parallel" batch axis is split across TensorCores (megacore), since
    # the second core never executes step 0 -> zero the halo every step (O(1)).
    pad_ref[:, 0:PAD] = jnp.zeros((C2, PAD), f32)
    pad_ref[:, PAD + HW:PAD + HW + PAD] = jnp.zeros((C2, PAD), f32)
    pad_ref[:, PAD:PAD + HW] = d            # 128-aligned -> unmasked full vst

    lane = jax.lax.broadcasted_iota(jnp.int32, (1, HW), 1)
    col = lane % W
    left_ok = (col != 0).astype(f32)        # source column x-1 exists
    right_ok = (col != W - 1).astype(f32)   # source column x+1 exists

    w2v = w2_ref[...]                        # (2C, 9) taps, read once
    acc = jnp.zeros((C2, HW), f32)
    for dy in range(3):
        # One slab load per dy; the three dx taps are static slices of it.
        start = PAD + (dy - 1) * W - 1
        slab = pad_ref[:, start:start + HW + 2]               # (2C, HW + 2)
        for dx in range(3):
            tap = d if (dy == 1 and dx == 1) else slab[:, dx:dx + HW]
            if dx == 0:
                tap = tap * left_ok
            elif dx == 2:
                tap = tap * right_ok
            k = dy * 3 + dx
            acc = acc + tap * w2v[:, k:k + 1]
    dw = acc + b2_ref[...]                                    # (2C, HW)

    # ---------------- SimpleGate (free sublane-slab split) ----------------
    g = dw[:C, :] * dw[C:, :]                                 # (C, HW)

    # ---------------- SCA: global avg pool -> 1x1 conv -> scale -----------
    pooled = jnp.mean(g, axis=1, keepdims=True)               # (C, 1)
    pooled8 = jnp.broadcast_to(pooled, (C, 8)).astype(bf16)   # pad N for MXU
    sca = jnp.dot(sca_wt_ref[...], pooled8,
                  preferred_element_type=f32)[:, 0:1] + sca_b_ref[...]
    g = g * sca

    # ---------------- conv3 + residual (beta); dropout1 = identity --------
    x3 = conv1x1(w3t_ref, g, b3_ref)
    y = x_ref[0] + x3 * beta_ref[...]                         # (C, HW)
    o_ref[0] = y                    # stage y through the output block

    # ---------------- norm2 + conv4 -> SimpleGate -> conv5 ----------------
    # Single (2C, C) matmul; the gate split is again a free sublane slab.
    yn = layer_norm(y, ln2_w_ref, ln2_b_ref)
    ff = conv1x1(w4t_ref, yn, b4_ref)                         # (2C, HW)
    fg = ff[:C, :] * ff[C:, :]
    x5 = conv1x1(w5t_ref, fg, b5_ref)

    # ---------------- final residual (gamma); dropout2 = identity ---------
    o_ref[0] = o_ref[0] + x5 * gamma_ref[...]


# ----------------------------------------------------------------------------
# Wrapper: NCHW in / NCHW out (only free reshapes, no transposes)
# ----------------------------------------------------------------------------
def nafblock_forward(params, x_nchw):
    x = x_nchw.astype(jnp.float32)
    B, C, H, W = x.shape
    HW = H * W
    C2 = 2 * C
    assert C % 8 == 0, "C must be a multiple of 8 (pad channels otherwise)"
    # TODO(synk): for very large H*W (e.g. 256x256) add spatial row-tiling with
    # a 1-row halo + two-pass SCA so v7x's 64 MiB VMEM holds the working set and
    # B=1 still yields >=2 parallel grid steps for megacore.
    pad = ((W + 1 + 127) // 128) * 128      # 128-aligned halo >= W + 1 lanes

    f32, bf16 = jnp.float32, jnp.bfloat16
    x2 = x.reshape(B, C, HW)                # free reshape (NCHW is contiguous)

    def colvec(p):
        return p.reshape(-1, 1).astype(f32)

    args = (
        x2,
        colvec(params['ln1_w']), colvec(params['ln1_b']),
        params['w1'].T.astype(bf16), colvec(params['b1']),
        params['w2'].T.astype(f32), colvec(params['b2']),
        params['sca_w'].T.astype(bf16), colvec(params['sca_b']),
        params['w3'].T.astype(bf16), colvec(params['b3']),
        colvec(params['beta']),
        colvec(params['ln2_w']), colvec(params['ln2_b']),
        params['w4'].T.astype(bf16), colvec(params['b4']),
        params['w5'].T.astype(bf16), colvec(params['b5']),
        colvec(params['gamma']),
    )

    def bcast(a):
        zeros = (0,) * a.ndim
        return pl.BlockSpec(a.shape, lambda b: zeros)   # resident weight block

    in_specs = ([pl.BlockSpec((1, C, HW), lambda b: (b, 0, 0))]
                + [bcast(a) for a in args[1:]])

    kern = functools.partial(_nafblock_kernel, H=H, W=W, C=C, PAD=pad)
    out = pl.pallas_call(
        kern,
        grid=(B,),
        in_specs=in_specs,
        out_specs=pl.BlockSpec((1, C, HW), lambda b: (b, 0, 0)),
        out_shape=jax.ShapeDtypeStruct((B, C, HW), jnp.float32),
        scratch_shapes=[pltpu.VMEM((C2, 2 * pad + HW), jnp.float32)],
        compiler_params=pltpu.CompilerParams(
            dimension_semantics=("parallel",),
            vmem_limit_bytes=32 * 1024 * 1024),
    )(*args)
    return out.reshape(B, C, H, W)


# ----------------------------------------------------------------------------
# Pure-JAX reference (same math, same parameter layout) for verification
# ----------------------------------------------------------------------------
def nafblock_reference(params, x_nchw):
    x = jnp.transpose(x_nchw, (0, 2, 3, 1)).astype(jnp.float32)   # NHWC
    B, H, W, C = x.shape
    hp = jax.lax.Precision.HIGHEST

    def ln(t, w, b):
        mu = jnp.mean(t, -1, keepdims=True)
        var = jnp.mean((t - mu) ** 2, -1, keepdims=True)
        return (t - mu) * jax.lax.rsqrt(var + LN_EPS) * w.reshape(-1) + b.reshape(-1)

    def mm(t, w, b):
        return jnp.einsum('bhwc,cd->bhwd', t, w, precision=hp) + b.reshape(-1)

    def dw3x3(t, w, b):
        tp = jnp.pad(t, ((0, 0), (1, 1), (1, 1), (0, 0)))
        acc = jnp.zeros_like(t)
        for dy in range(3):
            for dx in range(3):
                acc = acc + tp[:, dy:dy + H, dx:dx + W, :] * w[dy * 3 + dx]
        return acc + b.reshape(-1)

    xn = ln(x, params['ln1_w'], params['ln1_b'])
    d = mm(xn, params['w1'], params['b1'])
    d = dw3x3(d, params['w2'], params['b2'])
    g = d[..., :C] * d[..., C:]
    pooled = jnp.mean(g, axis=(1, 2))                                     # (B, C)
    scale = (jnp.einsum('bc,cd->bd', pooled, params['sca_w'], precision=hp)
             + params['sca_b'].reshape(-1))
    g = g * scale[:, None, None, :]
    x3 = mm(g, params['w3'], params['b3'])
    y = x + x3 * params['beta'].reshape(-1)

    yn = ln(y, params['ln2_w'], params['ln2_b'])
    f = mm(yn, params['w4'], params['b4'])
    fg = f[..., :C] * f[..., C:]
    x5 = mm(fg, params['w5'], params['b5'])
    out = y + x5 * params['gamma'].reshape(-1)
    return jnp.transpose(out, (0, 3, 1, 2))


# ----------------------------------------------------------------------------
# Deterministic synthetic parameters (1x1 convs as (Cin, Cout) matmuls,
# depthwise 3x3 as (9, C2) taps) — equivalent to the PyTorch NAFBlock weights.
# ----------------------------------------------------------------------------
def init_params(key, c):
    c2 = 2 * c
    keys = iter(jax.random.split(key, 24))

    def nrm(shape, scale):
        return jax.random.normal(next(keys), shape, jnp.float32) * scale

    return dict(
        ln1_w=1.0 + nrm((1, c), 0.05), ln1_b=nrm((1, c), 0.05),
        w1=nrm((c, c2), 0.2), b1=nrm((1, c2), 0.02),
        w2=nrm((9, c2), 0.2), b2=nrm((1, c2), 0.02),
        sca_w=nrm((c, c), 0.2), sca_b=1.0 + nrm((1, c), 0.1),
        w3=nrm((c, c), 0.2), b3=nrm((1, c), 0.02),
        beta=nrm((1, c), 0.5),
        ln2_w=1.0 + nrm((1, c), 0.05), ln2_b=nrm((1, c), 0.05),
        w4=nrm((c, c2), 0.2), b4=nrm((1, c2), 0.02),
        w5=nrm((c, c), 0.2), b5=nrm((1, c), 0.02),
        gamma=nrm((1, c), 0.5),
    )


if __name__ == "__main__":
    key = jax.random.PRNGKey(0)
    pkey, xkey = jax.random.split(key)

    B, C, H, W = 2, 32, 16, 16
    params = init_params(pkey, C)
    x = jax.random.normal(xkey, (B, C, H, W), jnp.float32)   # NCHW like PyTorch

    fwd = jax.jit(nafblock_forward)
    out = jax.block_until_ready(fwd(params, x))
    ref = jax.block_until_ready(nafblock_reference(params, x))

    assert out.shape == (B, C, H, W), out.shape
    assert bool(jnp.all(jnp.isfinite(out)))
    max_err = float(jnp.max(jnp.abs(out - ref)))
    # bf16 MXU operands (f32 accumulate) vs. f32-HIGHEST reference -> allow ~2%
    # of the output dynamic range.
    tol = 2e-2 * (1.0 + float(jnp.max(jnp.abs(ref))))
    assert max_err < tol, (max_err, tol)
    print("KERNEL_OK")
</pallas_src>

<mosaic_0001>
module attributes {stable_mosaic.version = 11 : i64} {
  func.func @_nafblock_kernel(%arg0: i32, %arg1: memref<1x32x256xf32, #tpu.memory_space<vmem>>, %arg2: memref<32x1xf32, #tpu.memory_space<vmem>>, %arg3: memref<32x1xf32, #tpu.memory_space<vmem>>, %arg4: memref<64x32xbf16, #tpu.memory_space<vmem>>, %arg5: memref<64x1xf32, #tpu.memory_space<vmem>>, %arg6: memref<64x9xf32, #tpu.memory_space<vmem>>, %arg7: memref<64x1xf32, #tpu.memory_space<vmem>>, %arg8: memref<32x32xbf16, #tpu.memory_space<vmem>>, %arg9: memref<32x1xf32, #tpu.memory_space<vmem>>, %arg10: memref<32x32xbf16, #tpu.memory_space<vmem>>, %arg11: memref<32x1xf32, #tpu.memory_space<vmem>>, %arg12: memref<32x1xf32, #tpu.memory_space<vmem>>, %arg13: memref<32x1xf32, #tpu.memory_space<vmem>>, %arg14: memref<32x1xf32, #tpu.memory_space<vmem>>, %arg15: memref<64x32xbf16, #tpu.memory_space<vmem>>, %arg16: memref<64x1xf32, #tpu.memory_space<vmem>>, %arg17: memref<32x32xbf16, #tpu.memory_space<vmem>>, %arg18: memref<32x1xf32, #tpu.memory_space<vmem>>, %arg19: memref<32x1xf32, #tpu.memory_space<vmem>>, %arg20: memref<1x32x256xf32, #tpu.memory_space<vmem>>, %arg21: memref<64x512xf32, #tpu.memory_space<vmem>>) attributes {dimension_semantics = [#tpu.dimension_semantics<parallel>], iteration_bounds = array<i64: 2>, scalar_prefetch = 0 : i64, scratch_operands = 1 : i64, tpu.core_type = #tpu.core_type<tc>, window_params = [{transform_indices = @transform_0, window_bounds = array<i64: 1, 32, 256>}, {pipeline_mode = #tpu.pipeline_mode<synchronous>, transform_indices = @transform_1, window_bounds = array<i64: 32, 1>}, {pipeline_mode = #tpu.pipeline_mode<synchronous>, transform_indices = @transform_2, window_bounds = array<i64: 32, 1>}, {pipeline_mode = #tpu.pipeline_mode<synchronous>, transform_indices = @transform_3, window_bounds = array<i64: 64, 32>}, {pipeline_mode = #tpu.pipeline_mode<synchronous>, transform_indices = @transform_4, window_bounds = array<i64: 64, 1>}, {pipeline_mode = #tpu.pipeline_mode<synchronous>, transform_indices = @transform_5, window_bounds = array<i64: 64, 9>}, {pipeline_mode = #tpu.pipeline_mode<synchronous>, transform_indices = @transform_6, window_bounds = array<i64: 64, 1>}, {pipeline_mode = #tpu.pipeline_mode<synchronous>, transform_indices = @transform_7, window_bounds = array<i64: 32, 32>}, {pipeline_mode = #tpu.pipeline_mode<synchronous>, transform_indices = @transform_8, window_bounds = array<i64: 32, 1>}, {pipeline_mode = #tpu.pipeline_mode<synchronous>, transform_indices = @transform_9, window_bounds = array<i64: 32, 32>}, {pipeline_mode = #tpu.pipeline_mode<synchronous>, transform_indices = @transform_10, window_bounds = array<i64: 32, 1>}, {pipeline_mode = #tpu.pipeline_mode<synchronous>, transform_indices = @transform_11, window_bounds = array<i64: 32, 1>}, {pipeline_mode = #tpu.pipeline_mode<synchronous>, transform_indices = @transform_12, window_bounds = array<i64: 32, 1>}, {pipeline_mode = #tpu.pipeline_mode<synchronous>, transform_indices = @transform_13, window_bounds = array<i64: 32, 1>}, {pipeline_mode = #tpu.pipeline_mode<synchronous>, transform_indices = @transform_14, window_bounds = array<i64: 64, 32>}, {pipeline_mode = #tpu.pipeline_mode<synchronous>, transform_indices = @transform_15, window_bounds = array<i64: 64, 1>}, {pipeline_mode = #tpu.pipeline_mode<synchronous>, transform_indices = @transform_16, window_bounds = array<i64: 32, 32>}, {pipeline_mode = #tpu.pipeline_mode<synchronous>, transform_indices = @transform_17, window_bounds = array<i64: 32, 1>}, {pipeline_mode = #tpu.pipeline_mode<synchronous>, transform_indices = @transform_18, window_bounds = array<i64: 32, 1>}, {transform_indices = @transform_19, window_bounds = array<i64: 1, 32, 256>}]} {
    %c0 = arith.constant 0 : index
    %c0_0 = arith.constant 0 : index
    %c0_1 = arith.constant 0 : index
    %0 = vector.load %arg1[%c0, %c0_0, %c0_1] : memref<1x32x256xf32, #tpu.memory_space<vmem>>, vector<1x32x256xf32>
    %1 = vector.shape_cast %0 : vector<1x32x256xf32> to vector<32x256xf32>
    %cst = arith.constant dense<0.000000e+00> : vector<256xf32>
    %2 = vector.multi_reduction <add>, %1, %cst [0] : vector<32x256xf32> to vector<256xf32>
    %3 = vector.shape_cast %2 : vector<256xf32> to vector<1x256xf32>
    %cst_2 = arith.constant 3.200000e+01 : f32
    %4 = vector.broadcast %cst_2 : f32 to vector<1x256xf32>
    %5 = arith.divf %3, %4 : vector<1x256xf32>
    %6 = vector.broadcast %5 : vector<1x256xf32> to vector<32x256xf32>
    %7 = arith.subf %1, %6 : vector<32x256xf32>
    %8 = arith.mulf %7, %7 : vector<32x256xf32>
    %cst_3 = arith.constant dense<0.000000e+00> : vector<256xf32>
    %9 = vector.multi_reduction <add>, %8, %cst_3 [0] : vector<32x256xf32> to vector<256xf32>
    %10 = vector.shape_cast %9 : vector<256xf32> to vector<1x256xf32>
    %cst_4 = arith.constant 3.200000e+01 : f32
    %11 = vector.broadcast %cst_4 : f32 to vector<1x256xf32>
    %12 = arith.divf %10, %11 : vector<1x256xf32>
    %cst_5 = arith.constant 9.99999997E-7 : f32
    %13 = vector.broadcast %cst_5 : f32 to vector<1x256xf32>
    %14 = arith.addf %12, %13 : vector<1x256xf32>
    %15 = math.rsqrt %14 : vector<1x256xf32>
    %16 = vector.broadcast %15 : vector<1x256xf32> to vector<32x256xf32>
    %17 = arith.mulf %7, %16 : vector<32x256xf32>
    %c0_6 = arith.constant 0 : index
    %c0_7 = arith.constant 0 : index
    %18 = vector.load %arg2[%c0_6, %c0_7] : memref<32x1xf32, #tpu.memory_space<vmem>>, vector<32x1xf32>
    %19 = vector.broadcast %18 : vector<32x1xf32> to vector<32x256xf32>
    %20 = arith.mulf %17, %19 : vector<32x256xf32>
    %c0_8 = arith.constant 0 : index
    %c0_9 = arith.constant 0 : index
    %21 = vector.load %arg3[%c0_8, %c0_9] : memref<32x1xf32, #tpu.memory_space<vmem>>, vector<32x1xf32>
    %22 = vector.broadcast %21 : vector<32x1xf32> to vector<32x256xf32>
    %23 = arith.addf %20, %22 : vector<32x256xf32>
    %c0_10 = arith.constant 0 : index
    %c0_11 = arith.constant 0 : index
    %24 = vector.load %arg4[%c0_10, %c0_11] : memref<64x32xbf16, #tpu.memory_space<vmem>>, vector<64x32xbf16>
    %25 = arith.truncf %23 : vector<32x256xf32> to vector<32x256xbf16>
    %cst_12 = arith.constant dense<0.000000e+00> : vector<64x256xf32>
    %26 = tpu.matmul %24, %25, %cst_12 {dimension_numbers = #tpu.dot_dimension_numbers<[1], [0], [0], [1], [0, 0, 1, 1], [], []>} : vector<64x32xbf16>, vector<32x256xbf16>, vector<64x256xf32> -> vector<64x256xf32>
    %c0_13 = arith.constant 0 : index
    %c0_14 = arith.constant 0 : index
    %27 = vector.load %arg5[%c0_13, %c0_14] : memref<64x1xf32, #tpu.memory_space<vmem>>, vector<64x1xf32>
    %28 = vector.broadcast %27 : vector<64x1xf32> to vector<64x256xf32>
    %29 = arith.addf %26, %28 : vector<64x256xf32>
    %cst_15 = arith.constant 0.000000e+00 : f32
    %30 = vector.broadcast %cst_15 : f32 to vector<64x128xf32>
    %c0_16 = arith.constant 0 : index
    %c0_17 = arith.constant 0 : index
    %31 = vector.load %arg21[%c0_16, %c0_17] : memref<64x512xf32, #tpu.memory_space<vmem>>, vector<64x128xf32>
    tpu.vector_store %arg21[%c0_16, %c0_17], %30 {strides = array<i32>} : memref<64x512xf32, #tpu.memory_space<vmem>>, vector<64x128xf32>,
    %cst_18 = arith.constant 0.000000e+00 : f32
    %32 = vector.broadcast %cst_18 : f32 to vector<64x128xf32>
    %c0_19 = arith.constant 0 : index
    %c384 = arith.constant 384 : index
    %33 = vector.load %arg21[%c0_19, %c384] : memref<64x512xf32, #tpu.memory_space<vmem>>, vector<64x128xf32>
    tpu.vector_store %arg21[%c0_19, %c384], %32 {strides = array<i32>} : memref<64x512xf32, #tpu.memory_space<vmem>>, vector<64x128xf32>,
    %c0_20 = arith.constant 0 : index
    %c128 = arith.constant 128 : index
    %34 = vector.load %arg21[%c0_20, %c128] : memref<64x512xf32, #tpu.memory_space<vmem>>, vector<64x256xf32>
    tpu.vector_store %arg21[%c0_20, %c128], %29 {strides = array<i32>} : memref<64x512xf32, #tpu.memory_space<vmem>>, vector<64x256xf32>,
    %35 = tpu.iota {dimensions = array<i32: 1>} : vector<1x256xi32>
    %c16_i32 = arith.constant 16 : i32
    %c0_i32 = arith.constant 0 : i32
    %36 = arith.cmpi eq, %c16_i32, %c0_i32 : i32
    %c1_i32 = arith.constant 1 : i32
    %37 = arith.select %36, %c1_i32, %c16_i32 : i32
    %38 = vector.broadcast %37 : i32 to vector<1x256xi32>
    %39 = arith.remsi %35, %38 : vector<1x256xi32>
    %c0_i32_21 = arith.constant 0 : i32
    %40 = vector.broadcast %c0_i32_21 : i32 to vector<1x256xi32>
    %41 = arith.cmpi ne, %39, %40 : vector<1x256xi32>
    %c0_i32_22 = arith.constant 0 : i32
    %42 = vector.broadcast %c0_i32_22 : i32 to vector<1x256xi32>
    %43 = arith.cmpi slt, %39, %42 : vector<1x256xi32>
    %c0_i32_23 = arith.constant 0 : i32
    %44 = arith.cmpi slt, %37, %c0_i32_23 : i32
    %45 = vector.broadcast %44 : i1 to vector<1x256xi1>
    %46 = vector.broadcast %45 : vector<1x256xi1> to vector<1x256xi1>
    %47 = arith.xori %43, %46 : vector<1x256xi1>
    %48 = arith.andi %47, %41 : vector<1x256xi1>
    %49 = vector.broadcast %37 : i32 to vector<1x256xi32>
    %50 = arith.addi %39, %49 : vector<1x256xi32>
    %51 = arith.select %48, %50, %39 : vector<1x256xi1>, vector<1x256xi32>
    %c0_i32_24 = arith.constant 0 : i32
    %52 = vector.broadcast %c0_i32_24 : i32 to vector<1x256xi32>
    %53 = arith.cmpi ne, %51, %52 : vector<1x256xi32>
    %54 = arith.extui %53 : vector<1x256xi1> to vector<1x256xi32>
    %55 = arith.sitofp %54 : vector<1x256xi32> to vector<1x256xf32>
    %c15_i32 = arith.constant 15 : i32
    %56 = vector.broadcast %c15_i32 : i32 to vector<1x256xi32>
    %57 = arith.cmpi ne, %51, %56 : vector<1x256xi32>
    %58 = arith.extui %57 : vector<1x256xi1> to vector<1x256xi32>
    %59 = arith.sitofp %58 : vector<1x256xi32> to vector<1x256xf32>
    %c0_25 = arith.constant 0 : index
    %c0_26 = arith.constant 0 : index
    %60 = vector.load %arg6[%c0_25, %c0_26] : memref<64x9xf32, #tpu.memory_space<vmem>>, vector<64x9xf32>
    %cst_27 = arith.constant 0.000000e+00 : f32
    %61 = vector.broadcast %cst_27 : f32 to vector<64x256xf32>
    %c0_28 = arith.constant 0 : index
    %c111 = arith.constant 111 : index
    %62 = vector.load %arg21[%c0_28, %c111] : memref<64x512xf32, #tpu.memory_space<vmem>>, vector<64x258xf32>
    %63 = vector.extract_strided_slice %62 {offsets = [0, 0], sizes = [64, 256], strides = [1, 1]} : vector<64x258xf32> to vector<64x256xf32>
    %64 = vector.broadcast %55 : vector<1x256xf32> to vector<64x256xf32>
    %65 = arith.mulf %63, %64 : vector<64x256xf32>
    %66 = vector.extract_strided_slice %60 {offsets = [0, 0], sizes = [64, 1], strides = [1, 1]} : vector<64x9xf32> to vector<64x1xf32>
    %67 = vector.broadcast %66 : vector<64x1xf32> to vector<64x256xf32>
    %68 = arith.mulf %65, %67 : vector<64x256xf32>
    %69 = arith.addf %61, %68 : vector<64x256xf32>
    %70 = vector.extract_strided_slice %62 {offsets = [0, 1], sizes = [64, 256], strides = [1, 1]} : vector<64x258xf32> to vector<64x256xf32>
    %71 = vector.extract_strided_slice %60 {offsets = [0, 1], sizes = [64, 1], strides = [1, 1]} : vector<64x9xf32> to vector<64x1xf32>
    %72 = vector.broadcast %71 : vector<64x1xf32> to vector<64x256xf32>
    %73 = arith.mulf %70, %72 : vector<64x256xf32>
    %74 = arith.addf %69, %73 : vector<64x256xf32>
    %75 = vector.extract_strided_slice %62 {offsets = [0, 2], sizes = [64, 256], strides = [1, 1]} : vector<64x258xf32> to vector<64x256xf32>
    %76 = vector.broadcast %59 : vector<1x256xf32> to vector<64x256xf32>
    %77 = arith.mulf %75, %76 : vector<64x256xf32>
    %78 = vector.extract_strided_slice %60 {offsets = [0, 2], sizes = [64, 1], strides = [1, 1]} : vector<64x9xf32> to vector<64x1xf32>
    %79 = vector.broadcast %78 : vector<64x1xf32> to vector<64x256xf32>
    %80 = arith.mulf %77, %79 : vector<64x256xf32>
    %81 = arith.addf %74, %80 : vector<64x256xf32>
    %c0_29 = arith.constant 0 : index
    %c127 = arith.constant 127 : index
    %82 = vector.load %arg21[%c0_29, %c127] : memref<64x512xf32, #tpu.memory_space<vmem>>, vector<64x258xf32>
    %83 = vector.extract_strided_slice %82 {offsets = [0, 0], sizes = [64, 256], strides = [1, 1]} : vector<64x258xf32> to vector<64x256xf32>
    %84 = vector.broadcast %55 : vector<1x256xf32> to vector<64x256xf32>
    %85 = arith.mulf %83, %84 : vector<64x256xf32>
    %86 = vector.extract_strided_slice %60 {offsets = [0, 3], sizes = [64, 1], strides = [1, 1]} : vector<64x9xf32> to vector<64x1xf32>
    %87 = vector.broadcast %86 : vector<64x1xf32> to vector<64x256xf32>
    %88 = arith.mulf %85, %87 : vector<64x256xf32>
    %89 = arith.addf %81, %88 : vector<64x256xf32>
    %90 = vector.extract_strided_slice %60 {offsets = [0, 4], sizes = [64, 1], strides = [1, 1]} : vector<64x9xf32> to vector<64x1xf32>
    %91 = vector.broadcast %90 : vector<64x1xf32> to vector<64x256xf32>
    %92 = arith.mulf %29, %91 : vector<64x256xf32>
    %93 = arith.addf %89, %92 : vector<64x256xf32>
    %94 = vector.extract_strided_slice %82 {offsets = [0, 2], sizes = [64, 256], strides = [1, 1]} : vector<64x258xf32> to vector<64x256xf32>
    %95 = vector.broadcast %59 : vector<1x256xf32> to vector<64x256xf32>
    %96 = arith.mulf %94, %95 : vector<64x256xf32>
    %97 = vector.extract_strided_slice %60 {offsets = [0, 5], sizes = [64, 1], strides = [1, 1]} : vector<64x9xf32> to vector<64x1xf32>
    %98 = vector.broadcast %97 : vector<64x1xf32> to vector<64x256xf32>
    %99 = arith.mulf %96, %98 : vector<64x256xf32>
    %100 = arith.addf %93, %99 : vector<64x256xf32>
    %c0_30 = arith.constant 0 : index
    %c143 = arith.constant 143 : index
    %101 = vector.load %arg21[%c0_30, %c143] : memref<64x512xf32, #tpu.memory_space<vmem>>, vector<64x258xf32>
    %102 = vector.extract_strided_slice %101 {offsets = [0, 0], sizes = [64, 256], strides = [1, 1]} : vector<64x258xf32> to vector<64x256xf32>
    %103 = vector.broadcast %55 : vector<1x256xf32> to vector<64x256xf32>
    %104 = arith.mulf %102, %103 : vector<64x256xf32>
    %105 = vector.extract_strided_slice %60 {offsets = [0, 6], sizes = [64, 1], strides = [1, 1]} : vector<64x9xf32> to vector<64x1xf32>
    %106 = vector.broadcast %105 : vector<64x1xf32> to vector<64x256xf32>
    %107 = arith.mulf %104, %106 : vector<64x256xf32>
    %108 = arith.addf %100, %107 : vector<64x256xf32>
    %109 = vector.extract_strided_slice %101 {offsets = [0, 1], sizes = [64, 256], strides = [1, 1]} : vector<64x258xf32> to vector<64x256xf32>
    %110 = vector.extract_strided_slice %60 {offsets = [0, 7], sizes = [64, 1], strides = [1, 1]} : vector<64x9xf32> to vector<64x1xf32>
    %111 = vector.broadcast %110 : vector<64x1xf32> to vector<64x256xf32>
    %112 = arith.mulf %109, %111 : vector<64x256xf32>
    %113 = arith.addf %108, %112 : vector<64x256xf32>
    %114 = vector.extract_strided_slice %101 {offsets = [0, 2], sizes = [64, 256], strides = [1, 1]} : vector<64x258xf32> to vector<64x256xf32>
    %115 = vector.broadcast %59 : vector<1x256xf32> to vector<64x256xf32>
    %116 = arith.mulf %114, %115 : vector<64x256xf32>
    %117 = vector.extract_strided_slice %60 {offsets = [0, 8], sizes = [64, 1], strides = [1, 1]} : vector<64x9xf32> to vector<64x1xf32>
    %118 = vector.broadcast %117 : vector<64x1xf32> to vector<64x256xf32>
    %119 = arith.mulf %116, %118 : vector<64x256xf32>
    %120 = arith.addf %113, %119 : vector<64x256xf32>
    %c0_31 = arith.constant 0 : index
    %c0_32 = arith.constant 0 : index
    %121 = vector.load %arg7[%c0_31, %c0_32] : memref<64x1xf32, #tpu.memory_space<vmem>>, vector<64x1xf32>
    %122 = vector.broadcast %121 : vector<64x1xf32> to vector<64x256xf32>
    %123 = arith.addf %120, %122 : vector<64x256xf32>
    %124 = vector.extract_strided_slice %123 {offsets = [0, 0], sizes = [32, 256], strides = [1, 1]} : vector<64x256xf32> to vector<32x256xf32>
    %125 = vector.extract_strided_slice %123 {offsets = [32, 0], sizes = [32, 256], strides = [1, 1]} : vector<64x256xf32> to vector<32x256xf32>
    %126 = arith.mulf %124, %125 : vector<32x256xf32>
    %cst_33 = arith.constant dense<0.000000e+00> : vector<32xf32>
    %127 = vector.multi_reduction <add>, %126, %cst_33 [1] : vector<32x256xf32> to vector<32xf32>
    %128 = vector.shape_cast %127 : vector<32xf32> to vector<32x1xf32>
    %cst_34 = arith.constant 2.560000e+02 : f32
    %129 = vector.broadcast %cst_34 : f32 to vector<32x1xf32>
    %130 = arith.divf %128, %129 : vector<32x1xf32>
    %131 = vector.shape_cast %130 : vector<32x1xf32> to vector<32x1xf32>
    %132 = vector.broadcast %131 : vector<32x1xf32> to vector<32x8xf32>
    %133 = arith.truncf %132 : vector<32x8xf32> to vector<32x8xbf16>
    %c0_35 = arith.constant 0 : index
    %c0_36 = arith.constant 0 : index
    %134 = vector.load %arg8[%c0_35, %c0_36] : memref<32x32xbf16, #tpu.memory_space<vmem>>, vector<32x32xbf16>
    %cst_37 = arith.constant dense<0.000000e+00> : vector<32x8xf32>
    %135 = tpu.matmul %134, %133, %cst_37 {dimension_numbers = #tpu.dot_dimension_numbers<[1], [0], [0], [1], [0, 0, 1, 1], [], []>} : vector<32x32xbf16>, vector<32x8xbf16>, vector<32x8xf32> -> vector<32x8xf32>
    %136 = vector.extract_strided_slice %135 {offsets = [0, 0], sizes = [32, 1], strides = [1, 1]} : vector<32x8xf32> to vector<32x1xf32>
    %c0_38 = arith.constant 0 : index
    %c0_39 = arith.constant 0 : index
    %137 = vector.load %arg9[%c0_38, %c0_39] : memref<32x1xf32, #tpu.memory_space<vmem>>, vector<32x1xf32>
    %138 = arith.addf %136, %137 : vector<32x1xf32>
    %139 = vector.broadcast %138 : vector<32x1xf32> to vector<32x256xf32>
    %140 = arith.mulf %126, %139 : vector<32x256xf32>
    %c0_40 = arith.constant 0 : index
    %c0_41 = arith.constant 0 : index
    %141 = vector.load %arg10[%c0_40, %c0_41] : memref<32x32xbf16, #tpu.memory_space<vmem>>, vector<32x32xbf16>
    %142 = arith.truncf %140 : vector<32x256xf32> to vector<32x256xbf16>
    %cst_42 = arith.constant dense<0.000000e+00> : vector<32x256xf32>
    %143 = tpu.matmul %141, %142, %cst_42 {dimension_numbers = #tpu.dot_dimension_numbers<[1], [0], [0], [1], [0, 0, 1, 1], [], []>} : vector<32x32xbf16>, vector<32x256xbf16>, vector<32x256xf32> -> vector<32x256xf32>
    %c0_43 = arith.constant 0 : index
    %c0_44 = arith.constant 0 : index
    %144 = vector.load %arg11[%c0_43, %c0_44] : memref<32x1xf32, #tpu.memory_space<vmem>>, vector<32x1xf32>
    %145 = vector.broadcast %144 : vector<32x1xf32> to vector<32x256xf32>
    %146 = arith.addf %143, %145 : vector<32x256xf32>
    %c0_45 = arith.constant 0 : index
    %c0_46 = arith.constant 0 : index
    %c0_47 = arith.constant 0 : index
    %147 = vector.load %arg1[%c0_45, %c0_46, %c0_47] : memref<1x32x256xf32, #tpu.memory_space<vmem>>, vector<1x32x256xf32>
    %148 = vector.shape_cast %147 : vector<1x32x256xf32> to vector<32x256xf32>
    %c0_48 = arith.constant 0 : index
    %c0_49 = arith.constant 0 : index
    %149 = vector.load %arg12[%c0_48, %c0_49] : memref<32x1xf32, #tpu.memory_space<vmem>>, vector<32x1xf32>
    %150 = vector.broadcast %149 : vector<32x1xf32> to vector<32x256xf32>
    %151 = arith.mulf %146, %150 : vector<32x256xf32>
    %152 = arith.addf %148, %151 : vector<32x256xf32>
    %c0_50 = arith.constant 0 : index
    %c0_51 = arith.constant 0 : index
    %c0_52 = arith.constant 0 : index
    %153 = vector.load %arg20[%c0_50, %c0_51, %c0_52] : memref<1x32x256xf32, #tpu.memory_space<vmem>>, vector<1x32x256xf32>
    %154 = vector.shape_cast %153 : vector<1x32x256xf32> to vector<32x256xf32>
    %155 = vector.shape_cast %152 : vector<32x256xf32> to vector<1x32x256xf32>
    tpu.vector_store %arg20[%c0_50, %c0_51, %c0_52], %155 {strides = array<i32>} : memref<1x32x256xf32, #tpu.memory_space<vmem>>, vector<1x32x256xf32>,
    %cst_53 = arith.constant dense<0.000000e+00> : vector<256xf32>
    %156 = vector.multi_reduction <add>, %152, %cst_53 [0] : vector<32x256xf32> to vector<256xf32>
    %157 = vector.shape_cast %156 : vector<256xf32> to vector<1x256xf32>
    %cst_54 = arith.constant 3.200000e+01 : f32
    %158 = vector.broadcast %cst_54 : f32 to vector<1x256xf32>
    %159 = arith.divf %157, %158 : vector<1x256xf32>
    %160 = vector.broadcast %159 : vector<1x256xf32> to vector<32x256xf32>
    %161 = arith.subf %152, %160 : vector<32x256xf32>
    %162 = arith.mulf %161, %161 : vector<32x256xf32>
    %cst_55 = arith.constant dense<0.000000e+00> : vector<256xf32>
    %163 = vector.multi_reduction <add>, %162, %cst_55 [0] : vector<32x256xf32> to vector<256xf32>
    %164 = vector.shape_cast %163 : vector<256xf32> to vector<1x256xf32>
    %cst_56 = arith.constant 3.200000e+01 : f32
    %165 = vector.broadcast %cst_56 : f32 to vector<1x256xf32>
    %166 = arith.divf %164, %165 : vector<1x256xf32>
    %cst_57 = arith.constant 9.99999997E-7 : f32
    %167 = vector.broadcast %cst_57 : f32 to vector<1x256xf32>
    %168 = arith.addf %166, %167 : vector<1x256xf32>
    %169 = math.rsqrt %168 : vector<1x256xf32>
    %170 = vector.broadcast %169 : vector<1x256xf32> to vector<32x256xf32>
    %171 = arith.mulf %161, %170 : vector<32x256xf32>
    %c0_58 = arith.constant 0 : index
    %c0_59 = arith.constant 0 : index
    %172 = vector.load %arg13[%c0_58, %c0_59] : memref<32x1xf32, #tpu.memory_space<vmem>>, vector<32x1xf32>
    %173 = vector.broadcast %172 : vector<32x1xf32> to vector<32x256xf32>
    %174 = arith.mulf %171, %173 : vector<32x256xf32>
    %c0_60 = arith.constant 0 : index
    %c0_61 = arith.constant 0 : index
    %175 = vector.load %arg14[%c0_60, %c0_61] : memref<32x1xf32, #tpu.memory_space<vmem>>, vector<32x1xf32>
    %176 = vector.broadcast %175 : vector<32x1xf32> to vector<32x256xf32>
    %177 = arith.addf %174, %176 : vector<32x256xf32>
    %c0_62 = arith.constant 0 : index
    %c0_63 = arith.constant 0 : index
    %178 = vector.load %arg15[%c0_62, %c0_63] : memref<64x32xbf16, #tpu.memory_space<vmem>>, vector<64x32xbf16>
    %179 = arith.truncf %177 : vector<32x256xf32> to vector<32x256xbf16>
    %cst_64 = arith.constant dense<0.000000e+00> : vector<64x256xf32>
    %180 = tpu.matmul %178, %179, %cst_64 {dimension_numbers = #tpu.dot_dimension_numbers<[1], [0], [0], [1], [0, 0, 1, 1], [], []>} : vector<64x32xbf16>, vector<32x256xbf16>, vector<64x256xf32> -> vector<64x256xf32>
    %c0_65 = arith.constant 0 : index
    %c0_66 = arith.constant 0 : index
    %181 = vector.load %arg16[%c0_65, %c0_66] : memref<64x1xf32, #tpu.memory_space<vmem>>, vector<64x1xf32>
    %182 = vector.broadcast %181 : vector<64x1xf32> to vector<64x256xf32>
    %183 = arith.addf %180, %182 : vector<64x256xf32>
    %184 = vector.extract_strided_slice %183 {offsets = [0, 0], sizes = [32, 256], strides = [1, 1]} : vector<64x256xf32> to vector<32x256xf32>
    %185 = vector.extract_strided_slice %183 {offsets = [32, 0], sizes = [32, 256], strides = [1, 1]} : vector<64x256xf32> to vector<32x256xf32>
    %186 = arith.mulf %184, %185 : vector<32x256xf32>
    %c0_67 = arith.constant 0 : index
    %c0_68 = arith.constant 0 : index
    %187 = vector.load %arg17[%c0_67, %c0_68] : memref<32x32xbf16, #tpu.memory_space<vmem>>, vector<32x32xbf16>
    %188 = arith.truncf %186 : vector<32x256xf32> to vector<32x256xbf16>
    %cst_69 = arith.constant dense<0.000000e+00> : vector<32x256xf32>
    %189 = tpu.matmul %187, %188, %cst_69 {dimension_numbers = #tpu.dot_dimension_numbers<[1], [0], [0], [1], [0, 0, 1, 1], [], []>} : vector<32x32xbf16>, vector<32x256xbf16>, vector<32x256xf32> -> vector<32x256xf32>
    %c0_70 = arith.constant 0 : index
    %c0_71 = arith.constant 0 : index
    %190 = vector.load %arg18[%c0_70, %c0_71] : memref<32x1xf32, #tpu.memory_space<vmem>>, vector<32x1xf32>
    %191 = vector.broadcast %190 : vector<32x1xf32> to vector<32x256xf32>
    %192 = arith.addf %189, %191 : vector<32x256xf32>
    %c0_72 = arith.constant 0 : index
    %c0_73 = arith.constant 0 : index
    %c0_74 = arith.constant 0 : index
    %193 = vector.load %arg20[%c0_72, %c0_73, %c0_74] : memref<1x32x256xf32, #tpu.memory_space<vmem>>, vector<1x32x256xf32>
    %194 = vector.shape_cast %193 : vector<1x32x256xf32> to vector<32x256xf32>
    %c0_75 = arith.constant 0 : index
    %c0_76 = arith.constant 0 : index
    %195 = vector.load %arg19[%c0_75, %c0_76] : memref<32x1xf32, #tpu.memory_space<vmem>>, vector<32x1xf32>
    %196 = vector.broadcast %195 : vector<32x1xf32> to vector<32x256xf32>
    %197 = arith.mulf %192, %196 : vector<32x256xf32>
    %198 = arith.addf %194, %197 : vector<32x256xf32>
    %c0_77 = arith.constant 0 : index
    %c0_78 = arith.constant 0 : index
    %c0_79 = arith.constant 0 : index
    %199 = vector.load %arg20[%c0_77, %c0_78, %c0_79] : memref<1x32x256xf32, #tpu.memory_space<vmem>>, vector<1x32x256xf32>
    %200 = vector.shape_cast %199 : vector<1x32x256xf32> to vector<32x256xf32>
    %201 = vector.shape_cast %198 : vector<32x256xf32> to vector<1x32x256xf32>
    tpu.vector_store %arg20[%c0_77, %c0_78, %c0_79], %201 {strides = array<i32>} : memref<1x32x256xf32, #tpu.memory_space<vmem>>, vector<1x32x256xf32>,
    return
  }
  func.func @transform_0(%arg0: i32) -> (i32, i32, i32) {
    %c0_i32 = arith.constant 0 : i32
    %c0_i32_0 = arith.constant 0 : i32
    %c0_i32_1 = arith.constant 0 : i32
    return %arg0, %c0_i32, %c0_i32_0 : i32, i32, i32
  }
  func.func @transform_1(%arg0: i32) -> (i32, i32) {
    %c0_i32 = arith.constant 0 : i32
    %c0_i32_0 = arith.constant 0 : i32
    %c0_i32_1 = arith.constant 0 : i32
    return %c0_i32, %c0_i32_0 : i32, i32
  }
  func.func @transform_2(%arg0: i32) -> (i32, i32) {
    %c0_i32 = arith.constant 0 : i32
    %c0_i32_0 = arith.constant 0 : i32
    %c0_i32_1 = arith.constant 0 : i32
    return %c0_i32, %c0_i32_0 : i32, i32
  }
  func.func @transform_3(%arg0: i32) -> (i32, i32) {
    %c0_i32 = arith.constant 0 : i32
    %c0_i32_0 = arith.constant 0 : i32
    %c0_i32_1 = arith.constant 0 : i32
    return %c0_i32, %c0_i32_0 : i32, i32
  }
  func.func @transform_4(%arg0: i32) -> (i32, i32) {
    %c0_i32 = arith.constant 0 : i32
    %c0_i32_0 = arith.constant 0 : i32
    %c0_i32_1 = arith.constant 0 : i32
    return %c0_i32, %c0_i32_0 : i32, i32
  }
  func.func @transform_5(%arg0: i32) -> (i32, i32) {
    %c0_i32 = arith.constant 0 : i32
    %c0_i32_0 = arith.constant 0 : i32
    %c0_i32_1 = arith.constant 0 : i32
    return %c0_i32, %c0_i32_0 : i32, i32
  }
  func.func @transform_6(%arg0: i32) -> (i32, i32) {
    %c0_i32 = arith.constant 0 : i32
    %c0_i32_0 = arith.constant 0 : i32
    %c0_i32_1 = arith.constant 0 : i32
    return %c0_i32, %c0_i32_0 : i32, i32
  }
  func.func @transform_7(%arg0: i32) -> (i32, i32) {
    %c0_i32 = arith.constant 0 : i32
    %c0_i32_0 = arith.constant 0 : i32
    %c0_i32_1 = arith.constant 0 : i32
    return %c0_i32, %c0_i32_0 : i32, i32
  }
  func.func @transform_8(%arg0: i32) -> (i32, i32) {
    %c0_i32 = arith.constant 0 : i32
    %c0_i32_0 = arith.constant 0 : i32
    %c0_i32_1 = arith.constant 0 : i32
    return %c0_i32, %c0_i32_0 : i32, i32
  }
  func.func @transform_9(%arg0: i32) -> (i32, i32) {
    %c0_i32 = arith.constant 0 : i32
    %c0_i32_0 = arith.constant 0 : i32
    %c0_i32_1 = arith.constant 0 : i32
    return %c0_i32, %c0_i32_0 : i32, i32
  }
  func.func @transform_10(%arg0: i32) -> (i32, i32) {
    %c0_i32 = arith.constant 0 : i32
    %c0_i32_0 = arith.constant 0 : i32
    %c0_i32_1 = arith.constant 0 : i32
    return %c0_i32, %c0_i32_0 : i32, i32
  }
  func.func @transform_11(%arg0: i32) -> (i32, i32) {
    %c0_i32 = arith.constant 0 : i32
    %c0_i32_0 = arith.constant 0 : i32
    %c0_i32_1 = arith.constant 0 : i32
    return %c0_i32, %c0_i32_0 : i32, i32
  }
  func.func @transform_12(%arg0: i32) -> (i32, i32) {
    %c0_i32 = arith.constant 0 : i32
    %c0_i32_0 = arith.constant 0 : i32
    %c0_i32_1 = arith.constant 0 : i32
    return %c0_i32, %c0_i32_0 : i32, i32
  }
  func.func @transform_13(%arg0: i32) -> (i32, i32) {
    %c0_i32 = arith.constant 0 : i32
    %c0_i32_0 = arith.constant 0 : i32
    %c0_i32_1 = arith.constant 0 : i32
    return %c0_i32, %c0_i32_0 : i32, i32
  }
  func.func @transform_14(%arg0: i32) -> (i32, i32) {
    %c0_i32 = arith.constant 0 : i32
    %c0_i32_0 = arith.constant 0 : i32
    %c0_i32_1 = arith.constant 0 : i32
    return %c0_i32, %c0_i32_0 : i32, i32
  }
  func.func @transform_15(%arg0: i32) -> (i32, i32) {
    %c0_i32 = arith.constant 0 : i32
    %c0_i32_0 = arith.constant 0 : i32
    %c0_i32_1 = arith.constant 0 : i32
    return %c0_i32, %c0_i32_0 : i32, i32
  }
  func.func @transform_16(%arg0: i32) -> (i32, i32) {
    %c0_i32 = arith.constant 0 : i32
    %c0_i32_0 = arith.constant 0 : i32
    %c0_i32_1 = arith.constant 0 : i32
    return %c0_i32, %c0_i32_0 : i32, i32
  }
  func.func @transform_17(%arg0: i32) -> (i32, i32) {
    %c0_i32 = arith.constant 0 : i32
    %c0_i32_0 = arith.constant 0 : i32
    %c0_i32_1 = arith.constant 0 : i32
    return %c0_i32, %c0_i32_0 : i32, i32
  }
  func.func @transform_18(%arg0: i32) -> (i32, i32) {
    %c0_i32 = arith.constant 0 : i32
    %c0_i32_0 = arith.constant 0 : i32
    %c0_i32_1 = arith.constant 0 : i32
    return %c0_i32, %c0_i32_0 : i32, i32
  }
  func.func @transform_19(%arg0: i32) -> (i32, i32, i32) {
    %c0_i32 = arith.constant 0 : i32
    %c0_i32_0 = arith.constant 0 : i32
    %c0_i32_1 = arith.constant 0 : i32
    return %arg0, %c0_i32, %c0_i32_0 : i32, i32, i32
  }
}

</mosaic_0001>

<llo_original>
// kernel: nafblock_forward.1
$region0: #{nafblock_forward.1}
  #allocation0 [shape = 'u32[]', space=smem, size = 0x4, offset = 0x4, fixed_abs, tag = 'smem constant byte address 0x4 - core index']
  #allocation1 [shape = 'u32[144,128]{1,0:T(1,128)}', space=vmem, size = 0x12000, scoped, tag = 'internal scratch']
  #allocation2 [shape = 'f32[64,512]{1,0:T(8,128)}', space=vmem, size = 0x20000, scoped, tag = 'scratch operand']
  %s0 = inlined_call_operand.vmem [shape: f32[2,32,256], index: 0, kind: input, shape index: {}]
  %s1 = inlined_call_operand.vmem [shape: f32[32,1], index: 1, kind: input, shape index: {}]
  %s2 = inlined_call_operand.vmem [shape: f32[32,1], index: 2, kind: input, shape index: {}]
  %s3 = inlined_call_operand.vmem [shape: bf16[64,32], index: 3, kind: input, shape index: {}]
  %s4 = inlined_call_operand.vmem [shape: f32[64,1], index: 4, kind: input, shape index: {}]
  %s5 = inlined_call_operand.vmem [shape: f32[64,9], index: 5, kind: input, shape index: {}]
  %s6 = inlined_call_operand.vmem [shape: f32[64,1], index: 6, kind: input, shape index: {}]
  %s7 = inlined_call_operand.vmem [shape: bf16[32,32], index: 7, kind: input, shape index: {}]
  %s8 = inlined_call_operand.vmem [shape: f32[32,1], index: 8, kind: input, shape index: {}]
  %s9 = inlined_call_operand.vmem [shape: bf16[32,32], index: 9, kind: input, shape index: {}]
  %s10 = inlined_call_operand.vmem [shape: f32[32,1], index: 10, kind: input, shape index: {}]
  %s11 = inlined_call_operand.vmem [shape: f32[32,1], index: 11, kind: input, shape index: {}]
  %s12 = inlined_call_operand.vmem [shape: f32[32,1], index: 12, kind: input, shape index: {}]
  %s13 = inlined_call_operand.vmem [shape: f32[32,1], index: 13, kind: input, shape index: {}]
  %s14 = inlined_call_operand.vmem [shape: bf16[64,32], index: 14, kind: input, shape index: {}]
  %s15 = inlined_call_operand.vmem [shape: f32[64,1], index: 15, kind: input, shape index: {}]
  %s16 = inlined_call_operand.vmem [shape: bf16[32,32], index: 16, kind: input, shape index: {}]
  %s17 = inlined_call_operand.vmem [shape: f32[32,1], index: 17, kind: input, shape index: {}]
  %s18 = inlined_call_operand.vmem [shape: f32[32,1], index: 18, kind: input, shape index: {}]
  %s19 = inlined_call_operand.vmem [shape: f32[2,32,256], index: 19, kind: output, shape index: {}]
  %s20 = sld [smem:[#allocation0]]
  $region109: #{nafblock_forward.1} parent=0
    _
  %s22 = ssub.s32 1, %s20
  %s23 = scalar_select 0, %s22, %s20
  loop: start=0, step=1, limit=4
  $region2: #{nafblock_forward.1} parent=0 // loop_pre_header
    _
  $region3: #{nafblock_forward.1} parent=0 // loop_header
    %s25 = sphi 0, %s29
    %p26 = scmp.ge.s32.totalorder %s25, 4
    %s35 = sphi 0, %s37
    %s38 = sphi 0, %s35
    %s39 = sphi 0, %s38
    %s55 = sphi 0, %s39
    %s59 = sphi 0, %s59
    %s61 = sphi 0, %s59
    %s62 = sphi 0, %s61
    %s76 = sphi 0, %s62
    %s80 = sphi 0, %s80
    %s82 = sphi 0, %s80
    %s83 = sphi 0, %s82
    %s97 = sphi 0, %s83
    %s101 = sphi 0, %s101
    %s103 = sphi 0, %s101
    %s104 = sphi 0, %s103
    %s118 = sphi 0, %s104
    %s122 = sphi 0, %s122
    %s124 = sphi 0, %s122
    %s125 = sphi 0, %s124
    %s139 = sphi 0, %s125
    %s143 = sphi 0, %s143
    %s145 = sphi 0, %s143
    %s146 = sphi 0, %s145
    %s160 = sphi 0, %s146
    %s164 = sphi 0, %s164
    %s166 = sphi 0, %s164
    %s167 = sphi 0, %s166
    %s181 = sphi 0, %s167
    %s185 = sphi 0, %s185
    %s187 = sphi 0, %s185
    %s188 = sphi 0, %s187
    %s202 = sphi 0, %s188
    %s206 = sphi 0, %s206
    %s208 = sphi 0, %s206
    %s209 = sphi 0, %s208
    %s223 = sphi 0, %s209
    %s227 = sphi 0, %s227
    %s229 = sphi 0, %s227
    %s230 = sphi 0, %s229
    %s244 = sphi 0, %s230
    %s248 = sphi 0, %s248
    %s250 = sphi 0, %s248
    %s251 = sphi 0, %s250
    %s265 = sphi 0, %s251
    %s269 = sphi 0, %s269
    %s271 = sphi 0, %s269
    %s272 = sphi 0, %s271
    %s286 = sphi 0, %s272
    %s290 = sphi 0, %s290
    %s292 = sphi 0, %s290
    %s293 = sphi 0, %s292
    %s307 = sphi 0, %s293
    %s311 = sphi 0, %s311
    %s313 = sphi 0, %s311
    %s314 = sphi 0, %s313
    %s328 = sphi 0, %s314
    %s332 = sphi 0, %s332
    %s334 = sphi 0, %s332
    %s335 = sphi 0, %s334
    %s349 = sphi 0, %s335
    %s353 = sphi 0, %s353
    %s355 = sphi 0, %s353
    %s356 = sphi 0, %s355
    %s370 = sphi 0, %s356
    %s374 = sphi 0, %s374
    %s376 = sphi 0, %s374
    %s377 = sphi 0, %s376
    %s391 = sphi 0, %s377
    %s395 = sphi 0, %s395
    %s397 = sphi 0, %s395
    %s398 = sphi 0, %s397
    %s412 = sphi 0, %s398
    %s416 = sphi 0, %s416
    %s418 = sphi 0, %s416
    %s419 = sphi 0, %s418
    %s433 = sphi 0, %s419
    %s439 = sphi 0, %s441
    %s442 = sphi 0, %s439
    %s443 = sphi 0, %s442
    %s459 = sphi 0, %s443
  $region4: #{nafblock_forward.1} parent=0 // loop_header_branch
    %28 = sbr.rel (%p26) target = $region8
  $region5: #{nafblock_forward.1} parent=0 // loop_body
    %s30 = ssub.s32 %s25, 1
    %s31 = ssub.s32 %s25, 2
    %s32 = sadd.s32 %s25, 1
    %s33 = ssub.s32 %s25, %s32
    %p34 = scmp.eq.s32.totalorder %s33, 0
    %s36 = sadd.s32 %s35, 1
    %s37 = scalar_select %p34, %s35, %s36
    %p40 = pneg %p34
    %p41 = scmp.eq.s32.totalorder %s25, 1
    %p42 = por %p40, %p41
    %p43 = scmp.ne.s32.totalorder %s35, %s38
    %p44 = scmp.eq.s32.totalorder %s25, 0
    %p45 = por %p43, %p44
    %p46 = scmp.ne.s32.totalorder %s35, %s38
    %p47 = scmp.eq.s32.totalorder %s30, 1
    %p48 = por %p46, %p47
    %p49 = scmp.ne.s32.totalorder %s38, %s39
    %p50 = scmp.eq.s32.totalorder %s30, 0
    %p51 = por %p49, %p50
    %p52 = scmp.ne.s32.totalorder %s38, %s39
    %p53 = scmp.eq.s32.totalorder %s31, 1
    %p54 = por %p52, %p53
    %p56 = scmp.ne.s32.totalorder %s39, %s55
    %p57 = scmp.eq.s32.totalorder %s31, 0
    %p58 = por %p56, %p57
    %s60 = sadd.s32 %s59, 1
    %p63 = scmp.eq.s32.totalorder %s25, 1
    %p64 = scmp.ne.s32.totalorder %s59, %s61
    %p65 = scmp.eq.s32.totalorder %s25, 0
    %p66 = por %p64, %p65
    %p67 = scmp.ne.s32.totalorder %s59, %s61
    %p68 = scmp.eq.s32.totalorder %s30, 1
    %p69 = por %p67, %p68
    %p70 = scmp.ne.s32.totalorder %s61, %s62
    %p71 = scmp.eq.s32.totalorder %s30, 0
    %p72 = por %p70, %p71
    %p73 = scmp.ne.s32.totalorder %s61, %s62
    %p74 = scmp.eq.s32.totalorder %s31, 1
    %p75 = por %p73, %p74
    %p77 = scmp.ne.s32.totalorder %s62, %s76
    %p78 = scmp.eq.s32.totalorder %s31, 0
    %p79 = por %p77, %p78
    %s81 = sadd.s32 %s80, 1
    %p84 = scmp.eq.s32.totalorder %s25, 1
    %p85 = scmp.ne.s32.totalorder %s80, %s82
    %p86 = scmp.eq.s32.totalorder %s25, 0
    %p87 = por %p85, %p86
    %p88 = scmp.ne.s32.totalorder %s80, %s82
    %p89 = scmp.eq.s32.totalorder %s30, 1
    %p90 = por %p88, %p89
    %p91 = scmp.ne.s32.totalorder %s82, %s83
    %p92 = scmp.eq.s32.totalorder %s30, 0
    %p93 = por %p91, %p92
    %p94 = scmp.ne.s32.totalorder %s82, %s83
    %p95 = scmp.eq.s32.totalorder %s31, 1
    %p96 = por %p94, %p95
    %p98 = scmp.ne.s32.totalorder %s83, %s97
    %p99 = scmp.eq.s32.totalorder %s31, 0
    %p100 = por %p98, %p99
    %s102 = sadd.s32 %s101, 1
    %p105 = scmp.eq.s32.totalorder %s25, 1
    %p106 = scmp.ne.s32.totalorder %s101, %s103
    %p107 = scmp.eq.s32.totalorder %s25, 0
    %p108 = por %p106, %p107
    %p109 = scmp.ne.s32.totalorder %s101, %s103
    %p110 = scmp.eq.s32.totalorder %s30, 1
    %p111 = por %p109, %p110
    %p112 = scmp.ne.s32.totalorder %s103, %s104
    %p113 = scmp.eq.s32.totalorder %s30, 0
    %p114 = por %p112, %p113
    %p115 = scmp.ne.s32.totalorder %s103, %s104
    %p116 = scmp.eq.s32.totalorder %s31, 1
    %p117 = por %p115, %p116
    %p119 = scmp.ne.s32.totalorder %s104, %s118
    %p120 = scmp.eq.s32.totalorder %s31, 0
    %p121 = por %p119, %p120
    %s123 = sadd.s32 %s122, 1
    %p126 = scmp.eq.s32.totalorder %s25, 1
    %p127 = scmp.ne.s32.totalorder %s122, %s124
    %p128 = scmp.eq.s32.totalorder %s25, 0
    %p129 = por %p127, %p128
    %p130 = scmp.ne.s32.totalorder %s122, %s124
    %p131 = scmp.eq.s32.totalorder %s30, 1
    %p132 = por %p130, %p131
    %p133 = scmp.ne.s32.totalorder %s124, %s125
    %p134 = scmp.eq.s32.totalorder %s30, 0
    %p135 = por %p133, %p134
    %p136 = scmp.ne.s32.totalorder %s124, %s125
    %p137 = scmp.eq.s32.totalorder %s31, 1
    %p138 = por %p136, %p137
    %p140 = scmp.ne.s32.totalorder %s125, %s139
    %p141 = scmp.eq.s32.totalorder %s31, 0
    %p142 = por %p140, %p141
    %s144 = sadd.s32 %s143, 1
    %p147 = scmp.eq.s32.totalorder %s25, 1
    %p148 = scmp.ne.s32.totalorder %s143, %s145
    %p149 = scmp.eq.s32.totalorder %s25, 0
    %p150 = por %p148, %p149
    %p151 = scmp.ne.s32.totalorder %s143, %s145
    %p152 = scmp.eq.s32.totalorder %s30, 1
    %p153 = por %p151, %p152
    %p154 = scmp.ne.s32.totalorder %s145, %s146
    %p155 = scmp.eq.s32.totalorder %s30, 0
    %p156 = por %p154, %p155
    %p157 = scmp.ne.s32.totalorder %s145, %s146
    %p158 = scmp.eq.s32.totalorder %s31, 1
    %p159 = por %p157, %p158
    %p161 = scmp.ne.s32.totalorder %s146, %s160
    %p162 = scmp.eq.s32.totalorder %s31, 0
    %p163 = por %p161, %p162
    %s165 = sadd.s32 %s164, 1
    %p168 = scmp.eq.s32.totalorder %s25, 1
    %p169 = scmp.ne.s32.totalorder %s164, %s166
    %p170 = scmp.eq.s32.totalorder %s25, 0
    %p171 = por %p169, %p170
    %p172 = scmp.ne.s32.totalorder %s164, %s166
    %p173 = scmp.eq.s32.totalorder %s30, 1
    %p174 = por %p172, %p173
    %p175 = scmp.ne.s32.totalorder %s166, %s167
    %p176 = scmp.eq.s32.totalorder %s30, 0
    %p177 = por %p175, %p176
    %p178 = scmp.ne.s32.totalorder %s166, %s167
    %p179 = scmp.eq.s32.totalorder %s31, 1
    %p180 = por %p178, %p179
    %p182 = scmp.ne.s32.totalorder %s167, %s181
    %p183 = scmp.eq.s32.totalorder %s31, 0
    %p184 = por %p182, %p183
    %s186 = sadd.s32 %s185, 1
    %p189 = scmp.eq.s32.totalorder %s25, 1
    %p190 = scmp.ne.s32.totalorder %s185, %s187
    %p191 = scmp.eq.s32.totalorder %s25, 0
    %p192 = por %p190, %p191
    %p193 = scmp.ne.s32.totalorder %s185, %s187
    %p194 = scmp.eq.s32.totalorder %s30, 1
    %p195 = por %p193, %p194
    %p196 = scmp.ne.s32.totalorder %s187, %s188
    %p197 = scmp.eq.s32.totalorder %s30, 0
    %p198 = por %p196, %p197
    %p199 = scmp.ne.s32.totalorder %s187, %s188
    %p200 = scmp.eq.s32.totalorder %s31, 1
    %p201 = por %p199, %p200
    %p203 = scmp.ne.s32.totalorder %s188, %s202
    %p204 = scmp.eq.s32.totalorder %s31, 0
    %p205 = por %p203, %p204
    %s207 = sadd.s32 %s206, 1
    %p210 = scmp.eq.s32.totalorder %s25, 1
    %p211 = scmp.ne.s32.totalorder %s206, %s208
    %p212 = scmp.eq.s32.totalorder %s25, 0
    %p213 = por %p211, %p212
    %p214 = scmp.ne.s32.totalorder %s206, %s208
    %p215 = scmp.eq.s32.totalorder %s30, 1
    %p216 = por %p214, %p215
    %p217 = scmp.ne.s32.totalorder %s208, %s209
    %p218 = scmp.eq.s32.totalorder %s30, 0
    %p219 = por %p217, %p218
    %p220 = scmp.ne.s32.totalorder %s208, %s209
    %p221 = scmp.eq.s32.totalorder %s31, 1
    %p222 = por %p220, %p221
    %p224 = scmp.ne.s32.totalorder %s209, %s223
    %p225 = scmp.eq.s32.totalorder %s31, 0
    %p226 = por %p224, %p225
    %s228 = sadd.s32 %s227, 1
    %p231 = scmp.eq.s32.totalorder %s25, 1
    %p232 = scmp.ne.s32.totalorder %s227, %s229
    %p233 = scmp.eq.s32.totalorder %s25, 0
    %p234 = por %p232, %p233
    %p235 = scmp.ne.s32.totalorder %s227, %s229
    %p236 = scmp.eq.s32.totalorder %s30, 1
    %p237 = por %p235, %p236
    %p238 = scmp.ne.s32.totalorder %s229, %s230
    %p239 = scmp.eq.s32.totalorder %s30, 0
    %p240 = por %p238, %p239
    %p241 = scmp.ne.s32.totalorder %s229, %s230
    %p242 = scmp.eq.s32.totalorder %s31, 1
    %p243 = por %p241, %p242
    %p245 = scmp.ne.s32.totalorder %s230, %s244
    %p246 = scmp.eq.s32.totalorder %s31, 0
    %p247 = por %p245, %p246
    %s249 = sadd.s32 %s248, 1
    %p252 = scmp.eq.s32.totalorder %s25, 1
    %p253 = scmp.ne.s32.totalorder %s248, %s250
    %p254 = scmp.eq.s32.totalorder %s25, 0
    %p255 = por %p253, %p254
    %p256 = scmp.ne.s32.totalorder %s248, %s250
    %p257 = scmp.eq.s32.totalorder %s30, 1
    %p258 = por %p256, %p257
    %p259 = scmp.ne.s32.totalorder %s250, %s251
    %p260 = scmp.eq.s32.totalorder %s30, 0
    %p261 = por %p259, %p260
    %p262 = scmp.ne.s32.totalorder %s250, %s251
    %p263 = scmp.eq.s32.totalorder %s31, 1
    %p264 = por %p262, %p263
    %p266 = scmp.ne.s32.totalorder %s251, %s265
    %p267 = scmp.eq.s32.totalorder %s31, 0
    %p268 = por %p266, %p267
    %s270 = sadd.s32 %s269, 1
    %p273 = scmp.eq.s32.totalorder %s25, 1
    %p274 = scmp.ne.s32.totalorder %s269, %s271
    %p275 = scmp.eq.s32.totalorder %s25, 0
    %p276 = por %p274, %p275
    %p277 = scmp.ne.s32.totalorder %s269, %s271
    %p278 = scmp.eq.s32.totalorder %s30, 1
    %p279 = por %p277, %p278
    %p280 = scmp.ne.s32.totalorder %s271, %s272
    %p281 = scmp.eq.s32.totalorder %s30, 0
    %p282 = por %p280, %p281
    %p283 = scmp.ne.s32.totalorder %s271, %s272
    %p284 = scmp.eq.s32.totalorder %s31, 1
    %p285 = por %p283, %p284
    %p287 = scmp.ne.s32.totalorder %s272, %s286
    %p288 = scmp.eq.s32.totalorder %s31, 0
    %p289 = por %p287, %p288
    %s291 = sadd.s32 %s290, 1
    %p294 = scmp.eq.s32.totalorder %s25, 1
    %p295 = scmp.ne.s32.totalorder %s290, %s292
    %p296 = scmp.eq.s32.totalorder %s25, 0
    %p297 = por %p295, %p296
    %p298 = scmp.ne.s32.totalorder %s290, %s292
    %p299 = scmp.eq.s32.totalorder %s30, 1
    %p300 = por %p298, %p299
    %p301 = scmp.ne.s32.totalorder %s292, %s293
    %p302 = scmp.eq.s32.totalorder %s30, 0
    %p303 = por %p301, %p302
    %p304 = scmp.ne.s32.totalorder %s292, %s293
    %p305 = scmp.eq.s32.totalorder %s31, 1
    %p306 = por %p304, %p305
    %p308 = scmp.ne.s32.totalorder %s293, %s307
    %p309 = scmp.eq.s32.totalorder %s31, 0
    %p310 = por %p308, %p309
    %s312 = sadd.s32 %s311, 1
    %p315 = scmp.eq.s32.totalorder %s25, 1
    %p316 = scmp.ne.s32.totalorder %s311, %s313
    %p317 = scmp.eq.s32.totalorder %s25, 0
    %p318 = por %p316, %p317
    %p319 = scmp.ne.s32.totalorder %s311, %s313
    %p320 = scmp.eq.s32.totalorder %s30, 1
    %p321 = por %p319, %p320
    %p322 = scmp.ne.s32.totalorder %s313, %s314
    %p323 = scmp.eq.s32.totalorder %s30, 0
    %p324 = por %p322, %p323
    %p325 = scmp.ne.s32.totalorder %s313, %s314
    %p326 = scmp.eq.s32.totalorder %s31, 1
    %p327 = por %p325, %p326
    %p329 = scmp.ne.s32.totalorder %s314, %s328
    %p330 = scmp.eq.s32.totalorder %s31, 0
    %p331 = por %p329, %p330
    %s333 = sadd.s32 %s332, 1
    %p336 = scmp.eq.s32.totalorder %s25, 1
    %p337 = scmp.ne.s32.totalorder %s332, %s334
    %p338 = scmp.eq.s32.totalorder %s25, 0
    %p339 = por %p337, %p338
    %p340 = scmp.ne.s32.totalorder %s332, %s334
    %p341 = scmp.eq.s32.totalorder %s30, 1
    %p342 = por %p340, %p341
    %p343 = scmp.ne.s32.totalorder %s334, %s335
    %p344 = scmp.eq.s32.totalorder %s30, 0
    %p345 = por %p343, %p344
    %p346 = scmp.ne.s32.totalorder %s334, %s335
    %p347 = scmp.eq.s32.totalorder %s31, 1
    %p348 = por %p346, %p347
    %p350 = scmp.ne.s32.totalorder %s335, %s349
    %p351 = scmp.eq.s32.totalorder %s31, 0
    %p352 = por %p350, %p351
    %s354 = sadd.s32 %s353, 1
    %p357 = scmp.eq.s32.totalorder %s25, 1
    %p358 = scmp.ne.s32.totalorder %s353, %s355
    %p359 = scmp.eq.s32.totalorder %s25, 0
    %p360 = por %p358, %p359
    %p361 = scmp.ne.s32.totalorder %s353, %s355
    %p362 = scmp.eq.s32.totalorder %s30, 1
    %p363 = por %p361, %p362
    %p364 = scmp.ne.s32.totalorder %s355, %s356
    %p365 = scmp.eq.s32.totalorder %s30, 0
    %p366 = por %p364, %p365
    %p367 = scmp.ne.s32.totalorder %s355, %s356
    %p368 = scmp.eq.s32.totalorder %s31, 1
    %p369 = por %p367, %p368
    %p371 = scmp.ne.s32.totalorder %s356, %s370
    %p372 = scmp.eq.s32.totalorder %s31, 0
    %p373 = por %p371, %p372
    %s375 = sadd.s32 %s374, 1
    %p378 = scmp.eq.s32.totalorder %s25, 1
    %p379 = scmp.ne.s32.totalorder %s374, %s376
    %p380 = scmp.eq.s32.totalorder %s25, 0
    %p381 = por %p379, %p380
    %p382 = scmp.ne.s32.totalorder %s374, %s376
    %p383 = scmp.eq.s32.totalorder %s30, 1
    %p384 = por %p382, %p383
    %p385 = scmp.ne.s32.totalorder %s376, %s377
    %p386 = scmp.eq.s32.totalorder %s30, 0
    %p387 = por %p385, %p386
    %p388 = scmp.ne.s32.totalorder %s376, %s377
    %p389 = scmp.eq.s32.totalorder %s31, 1
    %p390 = por %p388, %p389
    %p392 = scmp.ne.s32.totalorder %s377, %s391
    %p393 = scmp.eq.s32.totalorder %s31, 0
    %p394 = por %p392, %p393
    %s396 = sadd.s32 %s395, 1
    %p399 = scmp.eq.s32.totalorder %s25, 1
    %p400 = scmp.ne.s32.totalorder %s395, %s397
    %p401 = scmp.eq.s32.totalorder %s25, 0
    %p402 = por %p400, %p401
    %p403 = scmp.ne.s32.totalorder %s395, %s397
    %p404 = scmp.eq.s32.totalorder %s30, 1
    %p405 = por %p403, %p404
    %p406 = scmp.ne.s32.totalorder %s397, %s398
    %p407 = scmp.eq.s32.totalorder %s30, 0
    %p408 = por %p406, %p407
    %p409 = scmp.ne.s32.totalorder %s397, %s398
    %p410 = scmp.eq.s32.totalorder %s31, 1
    %p411 = por %p409, %p410
    %p413 = scmp.ne.s32.totalorder %s398, %s412
    %p414 = scmp.eq.s32.totalorder %s31, 0
    %p415 = por %p413, %p414
    %s417 = sadd.s32 %s416, 1
    %p420 = scmp.eq.s32.totalorder %s25, 1
    %p421 = scmp.ne.s32.totalorder %s416, %s418
    %p422 = scmp.eq.s32.totalorder %s25, 0
    %p423 = por %p421, %p422
    %p424 = scmp.ne.s32.totalorder %s416, %s418
    %p425 = scmp.eq.s32.totalorder %s30, 1
    %p426 = por %p424, %p425
    %p427 = scmp.ne.s32.totalorder %s418, %s419
    %p428 = scmp.eq.s32.totalorder %s30, 0
    %p429 = por %p427, %p428
    %p430 = scmp.ne.s32.totalorder %s418, %s419
    %p431 = scmp.eq.s32.totalorder %s31, 1
    %p432 = por %p430, %p431
    %p434 = scmp.ne.s32.totalorder %s419, %s433
    %p435 = scmp.eq.s32.totalorder %s31, 0
    %p436 = por %p434, %p435
    %s437 = ssub.s32 %s25, %s32
    %p438 = scmp.eq.s32.totalorder %s437, 0
    %s440 = sadd.s32 %s439, 1
    %s441 = scalar_select %p438, %s439, %s440
    %p444 = pneg %p438
    %p445 = scmp.eq.s32.totalorder %s25, 1
    %p446 = por %p444, %p445
    %p447 = scmp.ne.s32.totalorder %s439, %s442
    %p448 = scmp.eq.s32.totalorder %s25, 0
    %p449 = por %p447, %p448
    %p450 = scmp.ne.s32.totalorder %s439, %s442
    %p451 = scmp.eq.s32.totalorder %s30, 1
    %p452 = por %p450, %p451
    %p453 = scmp.ne.s32.totalorder %s442, %s443
    %p454 = scmp.eq.s32.totalorder %s30, 0
    %p455 = por %p453, %p454
    %p456 = scmp.ne.s32.totalorder %s442, %s443
    %p457 = scmp.eq.s32.totalorder %s31, 1
    %p458 = por %p456, %p457
    %p460 = scmp.ne.s32.totalorder %s443, %s459
    %p461 = scmp.eq.s32.totalorder %s31, 0
    %p462 = por %p460, %p461
    %p463 = scmp.le.s32.totalorder 1, %s25
    %p464 = scmp.lt.s32.totalorder %s25, 3
    %p465 = pnand %p463, %p464
    %p466 = pneg %p465
    // Predicated region
    $region9: #{nafblock_forward.1} parent=5 // pred_check
      _
    $region10: #{nafblock_forward.1} parent=5 // pred_check_branch
      %468 = sbr.rel (%p465) target = $region12
    $region11: #{nafblock_forward.1} parent=5 // pred_region
      %s469 = ssub.s32 %s25, 1
      // Predicated region
      $region13: #{nafblock_forward.1} parent=11 // pred_check
        %p470 = pneg %p72
      $region14: #{nafblock_forward.1} parent=11 // pred_check_branch
        %472 = sbr.rel (%p470) target = $region16
      $region15: #{nafblock_forward.1} parent=11 // pred_region
        _
      $region16: #{nafblock_forward.1} parent=11 // pred_fallthru
        _
      // Predicated region
      $region17: #{nafblock_forward.1} parent=11 // pred_check
        %p473 = pneg %p93
      $region18: #{nafblock_forward.1} parent=11 // pred_check_branch
        %475 = sbr.rel (%p473) target = $region20
      $region19: #{nafblock_forward.1} parent=11 // pred_region
        _
      $region20: #{nafblock_forward.1} parent=11 // pred_fallthru
        _
      // Predicated region
      $region21: #{nafblock_forward.1} parent=11 // pred_check
        %p476 = pneg %p114
      $region22: #{nafblock_forward.1} parent=11 // pred_check_branch
        %478 = sbr.rel (%p476) target = $region24
      $region23: #{nafblock_forward.1} parent=11 // pred_region
        _
      $region24: #{nafblock_forward.1} parent=11 // pred_fallthru
        _
      // Predicated region
      $region25: #{nafblock_forward.1} parent=11 // pred_check
        %p479 = pneg %p135
      $region26: #{nafblock_forward.1} parent=11 // pred_check_branch
        %481 = sbr.rel (%p479) target = $region28
      $region27: #{nafblock_forward.1} parent=11 // pred_region
        _
      $region28: #{nafblock_forward.1} parent=11 // pred_fallthru
        _
      // Predicated region
      $region29: #{nafblock_forward.1} parent=11 // pred_check
        %p482 = pneg %p156
      $region30: #{nafblock_forward.1} parent=11 // pred_check_branch
        %484 = sbr.rel (%p482) target = $region32
      $region31: #{nafblock_forward.1} parent=11 // pred_region
        _
      $region32: #{nafblock_forward.1} parent=11 // pred_fallthru
        _
      // Predicated region
      $region33: #{nafblock_forward.1} parent=11 // pred_check
        %p485 = pneg %p177
      $region34: #{nafblock_forward.1} parent=11 // pred_check_branch
        %487 = sbr.rel (%p485) target = $region36
      $region35: #{nafblock_forward.1} parent=11 // pred_region
        _
      $region36: #{nafblock_forward.1} parent=11 // pred_fallthru
        _
      // Predicated region
      $region37: #{nafblock_forward.1} parent=11 // pred_check
        %p488 = pneg %p198
      $region38: #{nafblock_forward.1} parent=11 // pred_check_branch
        %490 = sbr.rel (%p488) target = $region40
      $region39: #{nafblock_forward.1} parent=11 // pred_region
        _
      $region40: #{nafblock_forward.1} parent=11 // pred_fallthru
        _
      // Predicated region
      $region41: #{nafblock_forward.1} parent=11 // pred_check
        %p491 = pneg %p219
      $region42: #{nafblock_forward.1} parent=11 // pred_check_branch
        %493 = sbr.rel (%p491) target = $region44
      $region43: #{nafblock_forward.1} parent=11 // pred_region
        _
      $region44: #{nafblock_forward.1} parent=11 // pred_fallthru
        _
      // Predicated region
      $region45: #{nafblock_forward.1} parent=11 // pred_check
        %p494 = pneg %p240
      $region46: #{nafblock_forward.1} parent=11 // pred_check_branch
        %496 = sbr.rel (%p494) target = $region48
      $region47: #{nafblock_forward.1} parent=11 // pred_region
        _
      $region48: #{nafblock_forward.1} parent=11 // pred_fallthru
        _
      // Predicated region
      $region49: #{nafblock_forward.1} parent=11 // pred_check
        %p497 = pneg %p261
      $region50: #{nafblock_forward.1} parent=11 // pred_check_branch
        %499 = sbr.rel (%p497) target = $region52
      $region51: #{nafblock_forward.1} parent=11 // pred_region
        _
      $region52: #{nafblock_forward.1} parent=11 // pred_fallthru
        _
      // Predicated region
      $region53: #{nafblock_forward.1} parent=11 // pred_check
        %p500 = pneg %p282
      $region54: #{nafblock_forward.1} parent=11 // pred_check_branch
        %502 = sbr.rel (%p500) target = $region56
      $region55: #{nafblock_forward.1} parent=11 // pred_region
        _
      $region56: #{nafblock_forward.1} parent=11 // pred_fallthru
        _
      // Predicated region
      $region57: #{nafblock_forward.1} parent=11 // pred_check
        %p503 = pneg %p303
      $region58: #{nafblock_forward.1} parent=11 // pred_check_branch
        %505 = sbr.rel (%p503) target = $region60
      $region59: #{nafblock_forward.1} parent=11 // pred_region
        _
      $region60: #{nafblock_forward.1} parent=11 // pred_fallthru
        _
      // Predicated region
      $region61: #{nafblock_forward.1} parent=11 // pred_check
        %p506 = pneg %p324
      $region62: #{nafblock_forward.1} parent=11 // pred_check_branch
        %508 = sbr.rel (%p506) target = $region64
      $region63: #{nafblock_forward.1} parent=11 // pred_region
        _
      $region64: #{nafblock_forward.1} parent=11 // pred_fallthru
        _
      // Predicated region
      $region65: #{nafblock_forward.1} parent=11 // pred_check
        %p509 = pneg %p345
      $region66: #{nafblock_forward.1} parent=11 // pred_check_branch
        %511 = sbr.rel (%p509) target = $region68
      $region67: #{nafblock_forward.1} parent=11 // pred_region
        _
      $region68: #{nafblock_forward.1} parent=11 // pred_fallthru
        _
      // Predicated region
      $region69: #{nafblock_forward.1} parent=11 // pred_check
        %p512 = pneg %p366
      $region70: #{nafblock_forward.1} parent=11 // pred_check_branch
        %514 = sbr.rel (%p512) target = $region72
      $region71: #{nafblock_forward.1} parent=11 // pred_region
        _
      $region72: #{nafblock_forward.1} parent=11 // pred_fallthru
        _
      // Predicated region
      $region73: #{nafblock_forward.1} parent=11 // pred_check
        %p515 = pneg %p387
      $region74: #{nafblock_forward.1} parent=11 // pred_check_branch
        %517 = sbr.rel (%p515) target = $region76
      $region75: #{nafblock_forward.1} parent=11 // pred_region
        _
      $region76: #{nafblock_forward.1} parent=11 // pred_fallthru
        _
      // Predicated region
      $region77: #{nafblock_forward.1} parent=11 // pred_check
        %p518 = pneg %p408
      $region78: #{nafblock_forward.1} parent=11 // pred_check_branch
        %520 = sbr.rel (%p518) target = $region80
      $region79: #{nafblock_forward.1} parent=11 // pred_region
        _
      $region80: #{nafblock_forward.1} parent=11 // pred_fallthru
        _
      // Predicated region
      $region81: #{nafblock_forward.1} parent=11 // pred_check
        %p521 = pneg %p429
      $region82: #{nafblock_forward.1} parent=11 // pred_check_branch
        %523 = sbr.rel (%p521) target = $region84
      $region83: #{nafblock_forward.1} parent=11 // pred_region
        _
      $region84: #{nafblock_forward.1} parent=11 // pred_fallthru
        _
    $region12: #{nafblock_forward.1} parent=5 // pred_fallthru
      _
    %p524 = scmp.lt.s32.totalorder %s25, 2
    // Predicated region
    $region85: #{nafblock_forward.1} parent=5 // pred_check
      %p525 = pneg %p524
    $region86: #{nafblock_forward.1} parent=5 // pred_check_branch
      %527 = sbr.rel (%p525) target = $region88
    $region87: #{nafblock_forward.1} parent=5 // pred_region
      // Predicated region
      $region89: #{nafblock_forward.1} parent=87 // pred_check
        %p528 = pneg %p45
      $region90: #{nafblock_forward.1} parent=87 // pred_check_branch
        %530 = sbr.rel (%p528) target = $region92
      $region91: #{nafblock_forward.1} parent=87 // pred_region
        %p531 = scmp.lt.s32.totalorder %s25, 1
        %s532 = scalar_select %p531, %s25, 1
        %s533 = smul.addr %s532, 8
        %s534 = smul.addr %s533, 8
        %s535 = scalar_lea.vmem %s0, %s534
      $region92: #{nafblock_forward.1} parent=87 // pred_fallthru
        _
    $region88: #{nafblock_forward.1} parent=5 // pred_fallthru
      _
    %p536 = scmp.le.s32.totalorder 1, %s25
    %p537 = scmp.lt.s32.totalorder %s25, 3
    %p538 = pnand %p536, %p537
    %p539 = pneg %p538
    // Predicated region
    $region93: #{nafblock_forward.1} parent=5 // pred_check
      _
    $region94: #{nafblock_forward.1} parent=5 // pred_check_branch
      %541 = sbr.rel (%p538) target = $region96
    $region95: #{nafblock_forward.1} parent=5 // pred_region
      %s542 = ssub.s32 %s25, 1
      %p543 = scmp.lt.s32.totalorder %s30, 1
      %s544 = scalar_select %p543, %s30, 1
      %s545 = smul.addr %s544, 8
      %s546 = smul.addr %s545, 8
      %s547 = scalar_lea.vmem %s0, %s546
      %p548 = pneg %p51
      %p549 = pneg %p48
      %p550 = pneg %p72
      %p551 = pneg %p69
      %p552 = pneg %p93
      %p553 = pneg %p90
      %p554 = pneg %p114
      %p555 = pneg %p111
      %p556 = pneg %p135
      %p557 = pneg %p132
      %p558 = pneg %p156
      %p559 = pneg %p153
      %p560 = pneg %p177
      %p561 = pneg %p174
      %p562 = pneg %p198
      %p563 = pneg %p195
      %p564 = pneg %p219
      %p565 = pneg %p216
      %p566 = pneg %p240
      %p567 = pneg %p237
      %p568 = pneg %p261
      %p569 = pneg %p258
      %p570 = pneg %p282
      %p571 = pneg %p279
      %p572 = pneg %p303
      %p573 = pneg %p300
      %p574 = pneg %p324
      %p575 = pneg %p321
      %p576 = pneg %p345
      %p577 = pneg %p342
      %p578 = pneg %p366
      %p579 = pneg %p363
      %p580 = pneg %p387
      %p581 = pneg %p384
      %p582 = pneg %p408
      %p583 = pneg %p405
      %p584 = pneg %p429
      %p585 = pneg %p426
      %p586 = pneg %p455
      %p587 = pneg %p452
      %p588 = scmp.lt.s32.totalorder %s30, 1
      %s589 = scalar_select %p588, %s30, 1
      %s590 = smul.addr %s589, 8
      %s591 = smul.addr %s590, 8
      %s592 = scalar_lea.vmem %s19, %s591
      %p593 = scmp.lt.s32.totalorder %s30, 1
      %s594 = scalar_select %p593, %s30, 1
      %s595 = smul.addr %s594, 8
      %s596 = smul.addr %s595, 8
      %s597 = scalar_lea.vmem %s0, %s596
      %p598 = scmp.lt.s32.totalorder %s30, 1
      %s599 = scalar_select %p598, %s30, 1
      %s600 = smul.addr %s599, 8
      %s601 = smul.addr %s600, 8
      %s602 = scalar_lea.vmem %s19, %s601
      %v604 = vld [vmem:[%s597] sm:$0xff]
      %v605 = vld [vmem:[%s597 + $0x8] sm:$0xff]
      %v606 = vld [vmem:[%s597 + $0x10] sm:$0xff]
      %v607 = vld [vmem:[%s597 + $0x18] sm:$0xff]
      %v608 = vld [vmem:[%s597 + $0x20] sm:$0xff]
      %v609 = vld [vmem:[%s597 + $0x28] sm:$0xff]
      %v610 = vld [vmem:[%s597 + $0x30] sm:$0xff]
      %v611 = vld [vmem:[%s597 + $0x38] sm:$0xff]
      %v612 = vadd.f32 %v604, %v606
      %v613 = vadd.f32 %v612, %v608
      %v614 = vadd.f32 %v613, %v610
      %v615 = vrot.slane %v614, 4
      %v616 = vadd.f32 %v614, %v615
      %v617 = vrot.slane %v616, 2
      %v618 = vadd.f32 %v616, %v617
      %v619 = vrot.slane %v618, 1
      %v620 = vadd.f32 %v618, %v619
      %v621 = vadd.f32 %v605, %v607
      %v622 = vadd.f32 %v621, %v609
      %v623 = vadd.f32 %v622, %v611
      %v624 = vrot.slane %v623, 4
      %v625 = vadd.f32 %v623, %v624
      %v626 = vrot.slane %v625, 2
      %v627 = vadd.f32 %v625, %v626
      %v628 = vrot.slane %v627, 1
      %v629 = vadd.f32 %v627, %v628
      %v630 = vrcp.pop 32.0
      %v631 = vmul.f32 %v620, %v630
      %v632 = vmul.f32 %v629, %v630
      %v633 = vsub.f32 %v604, %v631
      %v634 = vsub.f32 %v605, %v632
      %v635 = vsub.f32 %v606, %v631
      %v636 = vsub.f32 %v607, %v632
      %v637 = vsub.f32 %v608, %v631
      %v638 = vsub.f32 %v609, %v632
      %v639 = vsub.f32 %v610, %v631
      %v640 = vsub.f32 %v611, %v632
      %v641 = vmul.f32 %v633, %v633
      %v642 = vmul.f32 %v634, %v634
      %v643 = vmul.f32 %v635, %v635
      %v644 = vmul.f32 %v636, %v636
      %v645 = vmul.f32 %v637, %v637
      %v646 = vmul.f32 %v638, %v638
      %v647 = vmul.f32 %v639, %v639
      %v648 = vmul.f32 %v640, %v640
      %v649 = vadd.f32 %v641, %v643
      %v650 = vadd.f32 %v649, %v645
      %v651 = vadd.f32 %v650, %v647
      %v652 = vrot.slane %v651, 4
      %v653 = vadd.f32 %v651, %v652
      %v654 = vrot.slane %v653, 2
      %v655 = vadd.f32 %v653, %v654
      %v656 = vrot.slane %v655, 1
      %v657 = vadd.f32 %v655, %v656
      %v658 = vadd.f32 %v642, %v644
      %v659 = vadd.f32 %v658, %v646
      %v660 = vadd.f32 %v659, %v648
      %v661 = vrot.slane %v660, 4
      %v662 = vadd.f32 %v660, %v661
      %v663 = vrot.slane %v662, 2
      %v664 = vadd.f32 %v662, %v663
      %v665 = vrot.slane %v664, 1
      %v666 = vadd.f32 %v664, %v665
      %v667 = vmul.f32 %v657, %v630
      %v668 = vmul.f32 %v666, %v630
      %v669 = vadd.f32 %v667, 1e-06
      %v670 = vadd.f32 %v668, 1e-06
      %v671 = vrsqrt.pop %v669
      %v672 = vrsqrt.pop %v670
      %v673 = vmul.f32 %v633, %v671
      %v674 = vmul.f32 %v634, %v672
      %v675 = vmul.f32 %v635, %v671
      %v676 = vmul.f32 %v636, %v672
      %v677 = vmul.f32 %v637, %v671
      %v678 = vmul.f32 %v638, %v672
      %v679 = vmul.f32 %v639, %v671
      %v680 = vmul.f32 %v640, %v672
      %v681 = vld [vmem:[%s1] sm:$0xff]
      %v682 = vld [vmem:[%s1 + $0x8] sm:$0xff]
      %v683 = vld [vmem:[%s1 + $0x10] sm:$0xff]
      %v684 = vld [vmem:[%s1 + $0x18] sm:$0xff]
      %686 = vset.pattern.permute.xlu0 0
      %687 = vperm.xlu0 %686, %v681
      %v688 = vpop.permute.xlu0 %687
      %691 = vset.pattern.permute.xlu0 0
      %692 = vperm.xlu0 %691, %v682
      %v693 = vpop.permute.xlu0 %692
      %696 = vset.pattern.permute.xlu0 0
      %697 = vperm.xlu0 %696, %v683
      %v698 = vpop.permute.xlu0 %697
      %701 = vset.pattern.permute.xlu0 0
      %702 = vperm.xlu0 %701, %v684
      %v703 = vpop.permute.xlu0 %702
      %v705 = vmul.f32 %v673, %v688
      %v706 = vmul.f32 %v674, %v688
      %v707 = vmul.f32 %v675, %v693
      %v708 = vmul.f32 %v676, %v693
      %v709 = vmul.f32 %v677, %v698
      %v710 = vmul.f32 %v678, %v698
      %v711 = vmul.f32 %v679, %v703
      %v712 = vmul.f32 %v680, %v703
      %v713 = vld [vmem:[%s2] sm:$0xff]
      %v714 = vld [vmem:[%s2 + $0x8] sm:$0xff]
      %v715 = vld [vmem:[%s2 + $0x10] sm:$0xff]
      %v716 = vld [vmem:[%s2 + $0x18] sm:$0xff]
      %718 = vset.pattern.permute.xlu0 0
      %719 = vperm.xlu0 %718, %v713
      %v720 = vpop.permute.xlu0 %719
      %723 = vset.pattern.permute.xlu0 0
      %724 = vperm.xlu0 %723, %v714
      %v725 = vpop.permute.xlu0 %724
      %728 = vset.pattern.permute.xlu0 0
      %729 = vperm.xlu0 %728, %v715
      %v730 = vpop.permute.xlu0 %729
      %733 = vset.pattern.permute.xlu0 0
      %734 = vperm.xlu0 %733, %v716
      %v735 = vpop.permute.xlu0 %734
      %v737 = vadd.f32 %v705, %v720
      %v738 = vadd.f32 %v706, %v720
      %v739 = vadd.f32 %v707, %v725
      %v740 = vadd.f32 %v708, %v725
      %v741 = vadd.f32 %v709, %v730
      %v742 = vadd.f32 %v710, %v730
      %v743 = vadd.f32 %v711, %v735
      %v744 = vadd.f32 %v712, %v735
      %v745 = vld [vmem:[%s3] sm:$0xf]
      %v746 = vld [vmem:[%s3 + $0x4] sm:$0xf]
      %v747 = vld [vmem:[%s3 + $0x8] sm:$0xf]
      %v748 = vld [vmem:[%s3 + $0xc] sm:$0xf]
      %v749 = vld [vmem:[%s3 + $0x10] sm:$0xf]
      %v750 = vld [vmem:[%s3 + $0x14] sm:$0xf]
      %v751 = vld [vmem:[%s3 + $0x18] sm:$0xf]
      %v752 = vld [vmem:[%s3 + $0x1c] sm:$0xf]
      %v753 = vpack.c.bf16 %v739, %v737
      %v754 = vpack.c.bf16 %v740, %v738
      %v755 = vpack.c.bf16 %v743, %v741
      %v756 = vpack.c.bf16 %v744, %v742
      %v757 = vld [vmem:[%s4] sm:$0xff]
      %v758 = vld [vmem:[%s4 + $0x8] sm:$0xff]
      %v759 = vld [vmem:[%s4 + $0x10] sm:$0xff]
      %v760 = vld [vmem:[%s4 + $0x18] sm:$0xff]
      %v761 = vld [vmem:[%s4 + $0x20] sm:$0xff]
      %v762 = vld [vmem:[%s4 + $0x28] sm:$0xff]
      %v763 = vld [vmem:[%s4 + $0x30] sm:$0xff]
      %v764 = vld [vmem:[%s4 + $0x38] sm:$0xff]
      %766 = vset.pattern.permute.xlu0 0
      %767 = vperm.xlu0 %766, %v757
      %v768 = vpop.permute.xlu0 %767
      %771 = vset.pattern.permute.xlu0 0
      %772 = vperm.xlu0 %771, %v758
      %v773 = vpop.permute.xlu0 %772
      %776 = vset.pattern.permute.xlu0 0
      %777 = vperm.xlu0 %776, %v759
      %v778 = vpop.permute.xlu0 %777
      %781 = vset.pattern.permute.xlu0 0
      %782 = vperm.xlu0 %781, %v760
      %v783 = vpop.permute.xlu0 %782
      %786 = vset.pattern.permute.xlu0 0
      %787 = vperm.xlu0 %786, %v761
      %v788 = vpop.permute.xlu0 %787
      %791 = vset.pattern.permute.xlu0 0
      %792 = vperm.xlu0 %791, %v762
      %v793 = vpop.permute.xlu0 %792
      %796 = vset.pattern.permute.xlu0 0
      %797 = vperm.xlu0 %796, %v763
      %v798 = vpop.permute.xlu0 %797
      %801 = vset.pattern.permute.xlu0 0
      %802 = vperm.xlu0 %801, %v764
      %v803 = vpop.permute.xlu0 %802
      %v813 = vunpack.c.l.b16 %v745
      %v814 = vunpack.c.l.b16 %v746
      %v815 = vunpack.c.l.b16 %v747
      %v816 = vunpack.c.l.b16 %v748
      %v817 = vunpack.c.l.b16 %v749
      %v818 = vunpack.c.l.b16 %v750
      %v819 = vunpack.c.l.b16 %v751
      %v820 = vunpack.c.l.b16 %v752
      %v821 = vpack.c.b16 %v814, %v813
      %v822 = vpack.c.b16 %v816, %v815
      %v823 = vpack.c.b16 %v818, %v817
      %v824 = vpack.c.b16 %v820, %v819
      %vm825 = vcmask 261120
      %v827 = vsel %vm825, %v821, 0
      %v830 = vsel %vm825, %v822, 0
      %v833 = vsel %vm825, %v823, 0
      %v836 = vsel %vm825, %v824, 0
      %838 = vmatprep.subr.bf16.mxu0 %v754
      %839 = vmatpush1.bf16.msra.mxu0 %v753
      %840 = vmatprep.subr.bf16.mxu0 %v756
      %841 = vmatpush1.bf16.msra.mxu0 %v755
      %842 = vmatprep.subr.bf16.mxu0 0
      %843 = vmatpush1.bf16.msra.mxu0 0
      %844 = vmatprep.subr.bf16.mxu0 0
      %845 = vmatpush1.bf16.msra.mxu0 0
      %846 = vmatprep.subr.bf16.mxu0 0
      %847 = vmatpush1.bf16.msra.mxu0 0
      %848 = vmatprep.subr.bf16.mxu0 0
      %849 = vmatpush1.bf16.msra.mxu0 0
      %850 = vmatprep.subr.bf16.mxu0 0
      %851 = vmatpush1.bf16.msra.mxu0 0
      %852 = vmatprep.subr.bf16.mxu0 0
      %853 = vmatpush1.bf16.msra.mxu0 0
      %854 = vmatprep.subr.bf16.mxu0 0
      %855 = vmatpush1.bf16.msra.mxu0 0
      %856 = vmatprep.subr.bf16.mxu0 0
      %857 = vmatpush1.bf16.msra.mxu0 0
      %858 = vmatprep.subr.bf16.mxu0 0
      %859 = vmatpush1.bf16.msra.mxu0 0
      %860 = vmatprep.subr.bf16.mxu0 0
      %861 = vmatpush1.bf16.msra.mxu0 0
      %862 = vmatprep.subr.bf16.mxu0 0
      %863 = vmatpush1.bf16.msra.mxu0 0
      %864 = vmatprep.subr.bf16.mxu0 0
      %865 = vmatpush1.bf16.msra.mxu0 0
      %866 = vmatprep.subr.bf16.mxu0 0
      %867 = vmatpush1.bf16.msra.mxu0 0
      %868 = vmatprep.subr.bf16.mxu0 0
      %869 = vmatpush1.bf16.msra.mxu0 0
      %870 = vmatprep.mubr.bf16.mxu0 0
      %871 = vmatmul.mubr.bf16.gmra.mrb[0].mxu0 %v827
      %v872 = vpop.f32.mrb[0].mxu0
      %v873 = vadd.f32 %v768, %v872
      %v874 = vpop.f32.mrb[0].mxu0
      %v875 = vadd.f32 %v768, %v874
      %v876 = vpop.f32.mrb[0].mxu0
      %v877 = vadd.f32 %v773, %v876
      %v878 = vpop.f32.mrb[0].mxu0
      %v879 = vadd.f32 %v773, %v878
      %880 = vmatprep.mubr.bf16.mxu0 0
      %881 = vmatmul.mubr.bf16.gmra.mrb[0].mxu0 %v830
      %v882 = vpop.f32.mrb[0].mxu0
      %v883 = vadd.f32 %v778, %v882
      %v884 = vpop.f32.mrb[0].mxu0
      %v885 = vadd.f32 %v778, %v884
      %v886 = vpop.f32.mrb[0].mxu0
      %v887 = vadd.f32 %v783, %v886
      %v888 = vpop.f32.mrb[0].mxu0
      %v889 = vadd.f32 %v783, %v888
      %890 = vmatprep.mubr.bf16.mxu0 0
      %891 = vmatmul.mubr.bf16.gmra.mrb[0].mxu0 %v833
      %v892 = vpop.f32.mrb[0].mxu0
      %v893 = vadd.f32 %v788, %v892
      %v894 = vpop.f32.mrb[0].mxu0
      %v895 = vadd.f32 %v788, %v894
      %v896 = vpop.f32.mrb[0].mxu0
      %v897 = vadd.f32 %v793, %v896
      %v898 = vpop.f32.mrb[0].mxu0
      %v899 = vadd.f32 %v793, %v898
      %900 = vmatprep.mubr.bf16.mxu0 0
      %901 = vmatmul.mubr.bf16.gmra.mrb[0].mxu0 %v836
      %v902 = vpop.f32.mrb[0].mxu0
      %v903 = vadd.f32 %v798, %v902
      %v904 = vpop.f32.mrb[0].mxu0
      %v905 = vadd.f32 %v798, %v904
      %v906 = vpop.f32.mrb[0].mxu0
      %v907 = vadd.f32 %v803, %v906
      %v908 = vpop.f32.mrb[0].mxu0
      %v909 = vadd.f32 %v803, %v908
      %910 = vdwg.mxu0
      %911 = vst [vmem:[#allocation2] sm:$0xff] 0.0
      %912 = vst [vmem:[#allocation2 + $0x20] sm:$0xff] 0.0
      %913 = vst [vmem:[#allocation2 + $0x40] sm:$0xff] 0.0
      %914 = vst [vmem:[#allocation2 + $0x60] sm:$0xff] 0.0
      %915 = vst [vmem:[#allocation2 + $0x80] sm:$0xff] 0.0
      %916 = vst [vmem:[#allocation2 + $0xa0] sm:$0xff] 0.0
      %917 = vst [vmem:[#allocation2 + $0xc0] sm:$0xff] 0.0
      %918 = vst [vmem:[#allocation2 + $0xe0] sm:$0xff] 0.0
      %919 = vst [vmem:[#allocation2 + $0x18] sm:$0xff] 0.0
      %920 = vst [vmem:[#allocation2 + $0x38] sm:$0xff] 0.0
      %921 = vst [vmem:[#allocation2 + $0x58] sm:$0xff] 0.0
      %922 = vst [vmem:[#allocation2 + $0x78] sm:$0xff] 0.0
      %923 = vst [vmem:[#allocation2 + $0x98] sm:$0xff] 0.0
      %924 = vst [vmem:[#allocation2 + $0xb8] sm:$0xff] 0.0
      %925 = vst [vmem:[#allocation2 + $0xd8] sm:$0xff] 0.0
      %926 = vst [vmem:[#allocation2 + $0xf8] sm:$0xff] 0.0
      %927 = vst [vmem:[#allocation2 + $0x8] sm:$0xff] %v873
      %928 = vst [vmem:[#allocation2 + $0x10] sm:$0xff] %v875
      %929 = vst [vmem:[#allocation2 + $0x28] sm:$0xff] %v877
      %930 = vst [vmem:[#allocation2 + $0x30] sm:$0xff] %v879
      %931 = vst [vmem:[#allocation2 + $0x48] sm:$0xff] %v883
      %932 = vst [vmem:[#allocation2 + $0x50] sm:$0xff] %v885
      %933 = vst [vmem:[#allocation2 + $0x68] sm:$0xff] %v887
      %934 = vst [vmem:[#allocation2 + $0x70] sm:$0xff] %v889
      %935 = vst [vmem:[#allocation2 + $0x88] sm:$0xff] %v893
      %936 = vst [vmem:[#allocation2 + $0x90] sm:$0xff] %v895
      %937 = vst [vmem:[#allocation2 + $0xa8] sm:$0xff] %v897
      %938 = vst [vmem:[#allocation2 + $0xb0] sm:$0xff] %v899
      %939 = vst [vmem:[#allocation2 + $0xc8] sm:$0xff] %v903
      %940 = vst [vmem:[#allocation2 + $0xd0] sm:$0xff] %v905
      %941 = vst [vmem:[#allocation2 + $0xe8] sm:$0xff] %v907
      %942 = vst [vmem:[#allocation2 + $0xf0] sm:$0xff] %v909
      %v943 = vlaneseq
      %v944 = vand.u32 %v943, 127
      %v945 = vadd.s32 %v944, 128
      %vm946 = vcmp.lt.s32.totalorder %v944, 0
      %v947 = vsub.s32 0, %v944
      %v948 = vsel %vm946, %v947, %v944
      %v949 = vshrl.u32 %v948, 4
      %v950 = vand.u32 %v948, 15
      %v951 = vsub.s32 0, %v950
      %v952 = vsel %vm946, %v951, %v950
      %vm953 = vcmp.lt.s32.totalorder %v945, 0
      %v954 = vsub.s32 0, %v945
      %v955 = vsel %vm953, %v954, %v945
      %v956 = vshrl.u32 %v955, 4
      %v957 = vand.u32 %v955, 15
      %v958 = vsub.s32 0, %v957
      %v959 = vsel %vm953, %v958, %v957
      %vm960 = vcmp.ne.s32.totalorder %v952, 0
      %vm961 = vcmp.ne.s32.totalorder %v959, 0
      %vm962 = vcmp.lt.s32.totalorder %v952, 0
      %vm963 = vcmp.lt.s32.totalorder %v959, 0
      %vm964 = vmand %vm962, %vm960
      %vm965 = vmand %vm963, %vm961
      %v966 = vadd.s32 %v952, 16
      %v967 = vadd.s32 %v959, 16
      %v968 = vsel %vm964, %v966, %v952
      %v969 = vsel %vm965, %v967, %v959
      %vm970 = vcmp.ne.s32.totalorder %v968, 0
      %vm971 = vcmp.ne.s32.totalorder %v969, 0
      %v972 = vsel %vm970, 1, 0
      %v973 = vsel %vm971, 1, 0
      %v974 = vcvt.s32.f32 %v972
      %v975 = vcvt.s32.f32 %v973
      %vm976 = vcmp.ne.s32.totalorder %v968, 15
      %vm977 = vcmp.ne.s32.totalorder %v969, 15
      %v978 = vsel %vm976, 1, 0
      %v979 = vsel %vm977, 1, 0
      %v980 = vcvt.s32.f32 %v978
      %v981 = vcvt.s32.f32 %v979
      %v982 = vld [vmem:[%s5] sm:$0xff]
      %v983 = vld [vmem:[%s5 + $0x8] sm:$0xff]
      %v984 = vld [vmem:[%s5 + $0x10] sm:$0xff]
      %v985 = vld [vmem:[%s5 + $0x18] sm:$0xff]
      %v986 = vld [vmem:[%s5 + $0x20] sm:$0xff]
      %v987 = vld [vmem:[%s5 + $0x28] sm:$0xff]
      %v988 = vld [vmem:[%s5 + $0x30] sm:$0xff]
      %v989 = vld [vmem:[%s5 + $0x38] sm:$0xff]
      %v990 = vld [vmem:[#allocation2] sm:$0xff]
      %v991 = vld [vmem:[#allocation2 + $0x8] sm:$0xff]
      %v992 = vld [vmem:[#allocation2 + $0x10] sm:$0xff]
      %v993 = vld [vmem:[#allocation2 + $0x20] sm:$0xff]
      %v994 = vld [vmem:[#allocation2 + $0x28] sm:$0xff]
      %v995 = vld [vmem:[#allocation2 + $0x30] sm:$0xff]
      %v996 = vld [vmem:[#allocation2 + $0x40] sm:$0xff]
      %v997 = vld [vmem:[#allocation2 + $0x48] sm:$0xff]
      %v998 = vld [vmem:[#allocation2 + $0x50] sm:$0xff]
      %v999 = vld [vmem:[#allocation2 + $0x60] sm:$0xff]
      %v1000 = vld [vmem:[#allocation2 + $0x68] sm:$0xff]
      %v1001 = vld [vmem:[#allocation2 + $0x70] sm:$0xff]
      %v1002 = vld [vmem:[#allocation2 + $0x80] sm:$0xff]
      %v1003 = vld [vmem:[#allocation2 + $0x88] sm:$0xff]
      %v1004 = vld [vmem:[#allocation2 + $0x90] sm:$0xff]
      %v1005 = vld [vmem:[#allocation2 + $0xa0] sm:$0xff]
      %v1006 = vld [vmem:[#allocation2 + $0xa8] sm:$0xff]
      %v1007 = vld [vmem:[#allocation2 + $0xb0] sm:$0xff]
      %v1008 = vld [vmem:[#allocation2 + $0xc0] sm:$0xff]
      %v1009 = vld [vmem:[#allocation2 + $0xc8] sm:$0xff]
      %v1010 = vld [vmem:[#allocation2 + $0xd0] sm:$0xff]
      %v1011 = vld [vmem:[#allocation2 + $0xe0] sm:$0xff]
      %v1012 = vld [vmem:[#allocation2 + $0xe8] sm:$0xff]
      %v1013 = vld [vmem:[#allocation2 + $0xf0] sm:$0xff]
      %1016 = vrot.lane.b32.xlu0 %v974, 111
      %v1017 = vpop.permute.xlu0 %1016
      %1018 = vrot.lane.b32.xlu0 %v975, 111
      %v1019 = vpop.permute.xlu0 %1018
      %vm1020 = vcmask 908288
      %v1021 = vsel %vm1020, %v1017, %v1019
      %v1025 = vmul.f32 %v990, %v1017
      %v1026 = vmul.f32 %v991, %v1021
      %v1027 = vmul.f32 %v992, %v1019
      %v1028 = vmul.f32 %v993, %v1017
      %v1029 = vmul.f32 %v994, %v1021
      %v1030 = vmul.f32 %v995, %v1019
      %v1031 = vmul.f32 %v996, %v1017
      %v1032 = vmul.f32 %v997, %v1021
      %v1033 = vmul.f32 %v998, %v1019
      %v1034 = vmul.f32 %v999, %v1017
      %v1035 = vmul.f32 %v1000, %v1021
      %v1036 = vmul.f32 %v1001, %v1019
      %v1037 = vmul.f32 %v1002, %v1017
      %v1038 = vmul.f32 %v1003, %v1021
      %v1039 = vmul.f32 %v1004, %v1019
      %v1040 = vmul.f32 %v1005, %v1017
      %v1041 = vmul.f32 %v1006, %v1021
      %v1042 = vmul.f32 %v1007, %v1019
      %v1043 = vmul.f32 %v1008, %v1017
      %v1044 = vmul.f32 %v1009, %v1021
      %v1045 = vmul.f32 %v1010, %v1019
      %v1046 = vmul.f32 %v1011, %v1017
      %v1047 = vmul.f32 %v1012, %v1021
      %v1048 = vmul.f32 %v1013, %v1019
      %1050 = vset.pattern.permute.xlu0 0
      %1051 = vperm.xlu0 %1050, %v982
      %v1052 = vpop.permute.xlu0 %1051
      %1055 = vset.pattern.permute.xlu0 0
      %1056 = vperm.xlu0 %1055, %v983
      %v1057 = vpop.permute.xlu0 %1056
      %1060 = vset.pattern.permute.xlu0 0
      %1061 = vperm.xlu0 %1060, %v984
      %v1062 = vpop.permute.xlu0 %1061
      %1065 = vset.pattern.permute.xlu0 0
      %1066 = vperm.xlu0 %1065, %v985
      %v1067 = vpop.permute.xlu0 %1066
      %1070 = vset.pattern.permute.xlu0 0
      %1071 = vperm.xlu0 %1070, %v986
      %v1072 = vpop.permute.xlu0 %1071
      %1075 = vset.pattern.permute.xlu0 0
      %1076 = vperm.xlu0 %1075, %v987
      %v1077 = vpop.permute.xlu0 %1076
      %1080 = vset.pattern.permute.xlu0 0
      %1081 = vperm.xlu0 %1080, %v988
      %v1082 = vpop.permute.xlu0 %1081
      %1085 = vset.pattern.permute.xlu0 0
      %1086 = vperm.xlu0 %1085, %v989
      %v1087 = vpop.permute.xlu0 %1086
      %v1089 = vmul.f32 %v1025, %v1052
      %v1090 = vmul.f32 %v1026, %v1052
      %v1091 = vmul.f32 %v1027, %v1052
      %v1092 = vmul.f32 %v1028, %v1057
      %v1093 = vmul.f32 %v1029, %v1057
      %v1094 = vmul.f32 %v1030, %v1057
      %v1095 = vmul.f32 %v1031, %v1062
      %v1096 = vmul.f32 %v1032, %v1062
      %v1097 = vmul.f32 %v1033, %v1062
      %v1098 = vmul.f32 %v1034, %v1067
      %v1099 = vmul.f32 %v1035, %v1067
      %v1100 = vmul.f32 %v1036, %v1067
      %v1101 = vmul.f32 %v1037, %v1072
      %v1102 = vmul.f32 %v1038, %v1072
      %v1103 = vmul.f32 %v1039, %v1072
      %v1104 = vmul.f32 %v1040, %v1077
      %v1105 = vmul.f32 %v1041, %v1077
      %v1106 = vmul.f32 %v1042, %v1077
      %v1107 = vmul.f32 %v1043, %v1082
      %v1108 = vmul.f32 %v1044, %v1082
      %v1109 = vmul.f32 %v1045, %v1082
      %v1110 = vmul.f32 %v1046, %v1087
      %v1111 = vmul.f32 %v1047, %v1087
      %v1112 = vmul.f32 %v1048, %v1087
      %v1113 = vadd.f32 %v1089, 0.0
      %v1114 = vadd.f32 %v1090, 0.0
      %v1115 = vadd.f32 %v1091, 0.0
      %v1116 = vadd.f32 %v1092, 0.0
      %v1117 = vadd.f32 %v1093, 0.0
      %v1118 = vadd.f32 %v1094, 0.0
      %v1119 = vadd.f32 %v1095, 0.0
      %v1120 = vadd.f32 %v1096, 0.0
      %v1121 = vadd.f32 %v1097, 0.0
      %v1122 = vadd.f32 %v1098, 0.0
      %v1123 = vadd.f32 %v1099, 0.0
      %v1124 = vadd.f32 %v1100, 0.0
      %v1125 = vadd.f32 %v1101, 0.0
      %v1126 = vadd.f32 %v1102, 0.0
      %v1127 = vadd.f32 %v1103, 0.0
      %v1128 = vadd.f32 %v1104, 0.0
      %v1129 = vadd.f32 %v1105, 0.0
      %v1130 = vadd.f32 %v1106, 0.0
      %v1131 = vadd.f32 %v1107, 0.0
      %v1132 = vadd.f32 %v1108, 0.0
      %v1133 = vadd.f32 %v1109, 0.0
      %v1134 = vadd.f32 %v1110, 0.0
      %v1135 = vadd.f32 %v1111, 0.0
      %v1136 = vadd.f32 %v1112, 0.0
      %1137 = vset.pattern.permute.xlu0 1
      %1138 = vperm.xlu0 %1137, %v982
      %v1139 = vpop.permute.xlu0 %1138
      %1141 = vset.pattern.permute.xlu0 1
      %1142 = vperm.xlu0 %1141, %v983
      %v1143 = vpop.permute.xlu0 %1142
      %1145 = vset.pattern.permute.xlu0 1
      %1146 = vperm.xlu0 %1145, %v984
      %v1147 = vpop.permute.xlu0 %1146
      %1149 = vset.pattern.permute.xlu0 1
      %1150 = vperm.xlu0 %1149, %v985
      %v1151 = vpop.permute.xlu0 %1150
      %1153 = vset.pattern.permute.xlu0 1
      %1154 = vperm.xlu0 %1153, %v986
      %v1155 = vpop.permute.xlu0 %1154
      %1157 = vset.pattern.permute.xlu0 1
      %1158 = vperm.xlu0 %1157, %v987
      %v1159 = vpop.permute.xlu0 %1158
      %1161 = vset.pattern.permute.xlu0 1
      %1162 = vperm.xlu0 %1161, %v988
      %v1163 = vpop.permute.xlu0 %1162
      %1165 = vset.pattern.permute.xlu0 1
      %1166 = vperm.xlu0 %1165, %v989
      %v1167 = vpop.permute.xlu0 %1166
      %v1169 = vmul.f32 %v990, %v1139
      %v1170 = vmul.f32 %v991, %v1139
      %v1171 = vmul.f32 %v992, %v1139
      %v1172 = vmul.f32 %v993, %v1143
      %v1173 = vmul.f32 %v994, %v1143
      %v1174 = vmul.f32 %v995, %v1143
      %v1175 = vmul.f32 %v996, %v1147
      %v1176 = vmul.f32 %v997, %v1147
      %v1177 = vmul.f32 %v998, %v1147
      %v1178 = vmul.f32 %v999, %v1151
      %v1179 = vmul.f32 %v1000, %v1151
      %v1180 = vmul.f32 %v1001, %v1151
      %v1181 = vmul.f32 %v1002, %v1155
      %v1182 = vmul.f32 %v1003, %v1155
      %v1183 = vmul.f32 %v1004, %v1155
      %v1184 = vmul.f32 %v1005, %v1159
      %v1185 = vmul.f32 %v1006, %v1159
      %v1186 = vmul.f32 %v1007, %v1159
      %v1187 = vmul.f32 %v1008, %v1163
      %v1188 = vmul.f32 %v1009, %v1163
      %v1189 = vmul.f32 %v1010, %v1163
      %v1190 = vmul.f32 %v1011, %v1167
      %v1191 = vmul.f32 %v1012, %v1167
      %v1192 = vmul.f32 %v1013, %v1167
      %1217 = vrot.lane.b32.xlu0 %v1169, 127
      %v1218 = vpop.permute.xlu0 %1217
      %1219 = vrot.lane.b32.xlu0 %v1170, 127
      %v1220 = vpop.permute.xlu0 %1219
      %1221 = vrot.lane.b32.xlu0 %v1171, 127
      %v1222 = vpop.permute.xlu0 %1221
      %1223 = vrot.lane.b32.xlu0 %v1172, 127
      %v1224 = vpop.permute.xlu0 %1223
      %1225 = vrot.lane.b32.xlu0 %v1173, 127
      %v1226 = vpop.permute.xlu0 %1225
      %1227 = vrot.lane.b32.xlu0 %v1174, 127
      %v1228 = vpop.permute.xlu0 %1227
      %1229 = vrot.lane.b32.xlu0 %v1175, 127
      %v1230 = vpop.permute.xlu0 %1229
      %1231 = vrot.lane.b32.xlu0 %v1176, 127
      %v1232 = vpop.permute.xlu0 %1231
      %1233 = vrot.lane.b32.xlu0 %v1177, 127
      %v1234 = vpop.permute.xlu0 %1233
      %1235 = vrot.lane.b32.xlu0 %v1178, 127
      %v1236 = vpop.permute.xlu0 %1235
      %1237 = vrot.lane.b32.xlu0 %v1179, 127
      %v1238 = vpop.permute.xlu0 %1237
      %1239 = vrot.lane.b32.xlu0 %v1180, 127
      %v1240 = vpop.permute.xlu0 %1239
      %1241 = vrot.lane.b32.xlu0 %v1181, 127
      %v1242 = vpop.permute.xlu0 %1241
      %1243 = vrot.lane.b32.xlu0 %v1182, 127
      %v1244 = vpop.permute.xlu0 %1243
      %1245 = vrot.lane.b32.xlu0 %v1183, 127
      %v1246 = vpop.permute.xlu0 %1245
      %1247 = vrot.lane.b32.xlu0 %v1184, 127
      %v1248 = vpop.permute.xlu0 %1247
      %1249 = vrot.lane.b32.xlu0 %v1185, 127
      %v1250 = vpop.permute.xlu0 %1249
      %1251 = vrot.lane.b32.xlu0 %v1186, 127
      %v1252 = vpop.permute.xlu0 %1251
      %1253 = vrot.lane.b32.xlu0 %v1187, 127
      %v1254 = vpop.permute.xlu0 %1253
      %1255 = vrot.lane.b32.xlu0 %v1188, 127
      %v1256 = vpop.permute.xlu0 %1255
      %1257 = vrot.lane.b32.xlu0 %v1189, 127
      %v1258 = vpop.permute.xlu0 %1257
      %1259 = vrot.lane.b32.xlu0 %v1190, 127
      %v1260 = vpop.permute.xlu0 %1259
      %1261 = vrot.lane.b32.xlu0 %v1191, 127
      %v1262 = vpop.permute.xlu0 %1261
      %1263 = vrot.lane.b32.xlu0 %v1192, 127
      %v1264 = vpop.permute.xlu0 %1263
      %vm1265 = vcmask 1039360
      %v1266 = vsel %vm1265, %v1218, %v1220
      %v1267 = vsel %vm1265, %v1220, %v1222
      %v1268 = vsel %vm1265, %v1224, %v1226
      %v1269 = vsel %vm1265, %v1226, %v1228
      %v1270 = vsel %vm1265, %v1230, %v1232
      %v1271 = vsel %vm1265, %v1232, %v1234
      %v1272 = vsel %vm1265, %v1236, %v1238
      %v1273 = vsel %vm1265, %v1238, %v1240
      %v1274 = vsel %vm1265, %v1242, %v1244
      %v1275 = vsel %vm1265, %v1244, %v1246
      %v1276 = vsel %vm1265, %v1248, %v1250
      %v1277 = vsel %vm1265, %v1250, %v1252
      %v1278 = vsel %vm1265, %v1254, %v1256
      %v1279 = vsel %vm1265, %v1256, %v1258
      %v1280 = vsel %vm1265, %v1260, %v1262
      %v1281 = vsel %vm1265, %v1262, %v1264
      %v1306 = vadd.f32 %v1113, %v1266
      %v1307 = vadd.f32 %v1114, %v1267
      %v1308 = vadd.f32 %v1115, %v1222
      %v1309 = vadd.f32 %v1116, %v1268
      %v1310 = vadd.f32 %v1117, %v1269
      %v1311 = vadd.f32 %v1118, %v1228
      %v1312 = vadd.f32 %v1119, %v1270
      %v1313 = vadd.f32 %v1120, %v1271
      %v1314 = vadd.f32 %v1121, %v1234
      %v1315 = vadd.f32 %v1122, %v1272
      %v1316 = vadd.f32 %v1123, %v1273
      %v1317 = vadd.f32 %v1124, %v1240
      %v1318 = vadd.f32 %v1125, %v1274
      %v1319 = vadd.f32 %v1126, %v1275
      %v1320 = vadd.f32 %v1127, %v1246
      %v1321 = vadd.f32 %v1128, %v1276
      %v1322 = vadd.f32 %v1129, %v1277
      %v1323 = vadd.f32 %v1130, %v1252
      %v1324 = vadd.f32 %v1131, %v1278
      %v1325 = vadd.f32 %v1132, %v1279
      %v1326 = vadd.f32 %v1133, %v1258
      %v1327 = vadd.f32 %v1134, %v1280
      %v1328 = vadd.f32 %v1135, %v1281
      %v1329 = vadd.f32 %v1136, %v1264
      %1332 = vrot.lane.b32.xlu0 %v980, 113
      %v1333 = vpop.permute.xlu0 %1332
      %1334 = vrot.lane.b32.xlu0 %v981, 113
      %v1335 = vpop.permute.xlu0 %1334
      %vm1336 = vcmask 924672
      %v1337 = vsel %vm1336, %v1333, %v1335
      %v1341 = vmul.f32 %v990, %v1333
      %v1342 = vmul.f32 %v991, %v1337
      %v1343 = vmul.f32 %v992, %v1335
      %v1344 = vmul.f32 %v993, %v1333
      %v1345 = vmul.f32 %v994, %v1337
      %v1346 = vmul.f32 %v995, %v1335
      %v1347 = vmul.f32 %v996, %v1333
      %v1348 = vmul.f32 %v997, %v1337
      %v1349 = vmul.f32 %v998, %v1335
      %v1350 = vmul.f32 %v999, %v1333
      %v1351 = vmul.f32 %v1000, %v1337
      %v1352 = vmul.f32 %v1001, %v1335
      %v1353 = vmul.f32 %v1002, %v1333
      %v1354 = vmul.f32 %v1003, %v1337
      %v1355 = vmul.f32 %v1004, %v1335
      %v1356 = vmul.f32 %v1005, %v1333
      %v1357 = vmul.f32 %v1006, %v1337
      %v1358 = vmul.f32 %v1007, %v1335
      %v1359 = vmul.f32 %v1008, %v1333
      %v1360 = vmul.f32 %v1009, %v1337
      %v1361 = vmul.f32 %v1010, %v1335
      %v1362 = vmul.f32 %v1011, %v1333
      %v1363 = vmul.f32 %v1012, %v1337
      %v1364 = vmul.f32 %v1013, %v1335
      %1365 = vset.pattern.permute.xlu0 2
      %1366 = vperm.xlu0 %1365, %v982
      %v1367 = vpop.permute.xlu0 %1366
      %1369 = vset.pattern.permute.xlu0 2
      %1370 = vperm.xlu0 %1369, %v983
      %v1371 = vpop.permute.xlu0 %1370
      %1373 = vset.pattern.permute.xlu0 2
      %1374 = vperm.xlu0 %1373, %v984
      %v1375 = vpop.permute.xlu0 %1374
      %1377 = vset.pattern.permute.xlu0 2
      %1378 = vperm.xlu0 %1377, %v985
      %v1379 = vpop.permute.xlu0 %1378
      %1381 = vset.pattern.permute.xlu0 2
      %1382 = vperm.xlu0 %1381, %v986
      %v1383 = vpop.permute.xlu0 %1382
      %1385 = vset.pattern.permute.xlu0 2
      %1386 = vperm.xlu0 %1385, %v987
      %v1387 = vpop.permute.xlu0 %1386
      %1389 = vset.pattern.permute.xlu0 2
      %1390 = vperm.xlu0 %1389, %v988
      %v1391 = vpop.permute.xlu0 %1390
      %1393 = vset.pattern.permute.xlu0 2
      %1394 = vperm.xlu0 %1393, %v989
      %v1395 = vpop.permute.xlu0 %1394
      %v1397 = vmul.f32 %v1341, %v1367
      %v1398 = vmul.f32 %v1342, %v1367
      %v1399 = vmul.f32 %v1343, %v1367
      %v1400 = vmul.f32 %v1344, %v1371
      %v1401 = vmul.f32 %v1345, %v1371
      %v1402 = vmul.f32 %v1346, %v1371
      %v1403 = vmul.f32 %v1347, %v1375
      %v1404 = vmul.f32 %v1348, %v1375
      %v1405 = vmul.f32 %v1349, %v1375
      %v1406 = vmul.f32 %v1350, %v1379
      %v1407 = vmul.f32 %v1351, %v1379
      %v1408 = vmul.f32 %v1352, %v1379
      %v1409 = vmul.f32 %v1353, %v1383
      %v1410 = vmul.f32 %v1354, %v1383
      %v1411 = vmul.f32 %v1355, %v1383
      %v1412 = vmul.f32 %v1356, %v1387
      %v1413 = vmul.f32 %v1357, %v1387
      %v1414 = vmul.f32 %v1358, %v1387
      %v1415 = vmul.f32 %v1359, %v1391
      %v1416 = vmul.f32 %v1360, %v1391
      %v1417 = vmul.f32 %v1361, %v1391
      %v1418 = vmul.f32 %v1362, %v1395
      %v1419 = vmul.f32 %v1363, %v1395
      %v1420 = vmul.f32 %v1364, %v1395
      %1445 = vrot.lane.b32.xlu0 %v1397, 126
      %v1446 = vpop.permute.xlu0 %1445
      %1447 = vrot.lane.b32.xlu0 %v1398, 126
      %v1448 = vpop.permute.xlu0 %1447
      %1449 = vrot.lane.b32.xlu0 %v1399, 126
      %v1450 = vpop.permute.xlu0 %1449
      %1451 = vrot.lane.b32.xlu0 %v1400, 126
      %v1452 = vpop.permute.xlu0 %1451
      %1453 = vrot.lane.b32.xlu0 %v1401, 126
      %v1454 = vpop.permute.xlu0 %1453
      %1455 = vrot.lane.b32.xlu0 %v1402, 126
      %v1456 = vpop.permute.xlu0 %1455
      %1457 = vrot.lane.b32.xlu0 %v1403, 126
      %v1458 = vpop.permute.xlu0 %1457
      %1459 = vrot.lane.b32.xlu0 %v1404, 126
      %v1460 = vpop.permute.xlu0 %1459
      %1461 = vrot.lane.b32.xlu0 %v1405, 126
      %v1462 = vpop.permute.xlu0 %1461
      %1463 = vrot.lane.b32.xlu0 %v1406, 126
      %v1464 = vpop.permute.xlu0 %1463
      %1465 = vrot.lane.b32.xlu0 %v1407, 126
      %v1466 = vpop.permute.xlu0 %1465
      %1467 = vrot.lane.b32.xlu0 %v1408, 126
      %v1468 = vpop.permute.xlu0 %1467
      %1469 = vrot.lane.b32.xlu0 %v1409, 126
      %v1470 = vpop.permute.xlu0 %1469
      %1471 = vrot.lane.b32.xlu0 %v1410, 126
      %v1472 = vpop.permute.xlu0 %1471
      %1473 = vrot.lane.b32.xlu0 %v1411, 126
      %v1474 = vpop.permute.xlu0 %1473
      %1475 = vrot.lane.b32.xlu0 %v1412, 126
      %v1476 = vpop.permute.xlu0 %1475
      %1477 = vrot.lane.b32.xlu0 %v1413, 126
      %v1478 = vpop.permute.xlu0 %1477
      %1479 = vrot.lane.b32.xlu0 %v1414, 126
      %v1480 = vpop.permute.xlu0 %1479
      %1481 = vrot.lane.b32.xlu0 %v1415, 126
      %v1482 = vpop.permute.xlu0 %1481
      %1483 = vrot.lane.b32.xlu0 %v1416, 126
      %v1484 = vpop.permute.xlu0 %1483
      %1485 = vrot.lane.b32.xlu0 %v1417, 126
      %v1486 = vpop.permute.xlu0 %1485
      %1487 = vrot.lane.b32.xlu0 %v1418, 126
      %v1488 = vpop.permute.xlu0 %1487
      %1489 = vrot.lane.b32.xlu0 %v1419, 126
      %v1490 = vpop.permute.xlu0 %1489
      %1491 = vrot.lane.b32.xlu0 %v1420, 126
      %v1492 = vpop.permute.xlu0 %1491
      %vm1493 = vcmask 1031168
      %v1494 = vsel %vm1493, %v1446, %v1448
      %v1495 = vsel %vm1493, %v1448, %v1450
      %v1496 = vsel %vm1493, %v1452, %v1454
      %v1497 = vsel %vm1493, %v1454, %v1456
      %v1498 = vsel %vm1493, %v1458, %v1460
      %v1499 = vsel %vm1493, %v1460, %v1462
      %v1500 = vsel %vm1493, %v1464, %v1466
      %v1501 = vsel %vm1493, %v1466, %v1468
      %v1502 = vsel %vm1493, %v1470, %v1472
      %v1503 = vsel %vm1493, %v1472, %v1474
      %v1504 = vsel %vm1493, %v1476, %v1478
      %v1505 = vsel %vm1493, %v1478, %v1480
      %v1506 = vsel %vm1493, %v1482, %v1484
      %v1507 = vsel %vm1493, %v1484, %v1486
      %v1508 = vsel %vm1493, %v1488, %v1490
      %v1509 = vsel %vm1493, %v1490, %v1492
      %v1534 = vadd.f32 %v1306, %v1494
      %v1535 = vadd.f32 %v1307, %v1495
      %v1536 = vadd.f32 %v1308, %v1450
      %v1537 = vadd.f32 %v1309, %v1496
      %v1538 = vadd.f32 %v1310, %v1497
      %v1539 = vadd.f32 %v1311, %v1456
      %v1540 = vadd.f32 %v1312, %v1498
      %v1541 = vadd.f32 %v1313, %v1499
      %v1542 = vadd.f32 %v1314, %v1462
      %v1543 = vadd.f32 %v1315, %v1500
      %v1544 = vadd.f32 %v1316, %v1501
      %v1545 = vadd.f32 %v1317, %v1468
      %v1546 = vadd.f32 %v1318, %v1502
      %v1547 = vadd.f32 %v1319, %v1503
      %v1548 = vadd.f32 %v1320, %v1474
      %v1549 = vadd.f32 %v1321, %v1504
      %v1550 = vadd.f32 %v1322, %v1505
      %v1551 = vadd.f32 %v1323, %v1480
      %v1552 = vadd.f32 %v1324, %v1506
      %v1553 = vadd.f32 %v1325, %v1507
      %v1554 = vadd.f32 %v1326, %v1486
      %v1555 = vadd.f32 %v1327, %v1508
      %v1556 = vadd.f32 %v1328, %v1509
      %v1557 = vadd.f32 %v1329, %v1492
      %v1558 = vld [vmem:[#allocation2] sm:$0xff]
      %v1559 = vld [vmem:[#allocation2 + $0x8] sm:$0xff]
      %v1560 = vld [vmem:[#allocation2 + $0x10] sm:$0xff]
      %v1561 = vld [vmem:[#allocation2 + $0x18] sm:$0xff]
      %v1562 = vld [vmem:[#allocation2 + $0x20] sm:$0xff]
      %v1563 = vld [vmem:[#allocation2 + $0x28] sm:$0xff]
      %v1564 = vld [vmem:[#allocation2 + $0x30] sm:$0xff]
      %v1565 = vld [vmem:[#allocation2 + $0x38] sm:$0xff]
      %v1566 = vld [vmem:[#allocation2 + $0x40] sm:$0xff]
      %v1567 = vld [vmem:[#allocation2 + $0x48] sm:$0xff]
      %v1568 = vld [vmem:[#allocation2 + $0x50] sm:$0xff]
      %v1569 = vld [vmem:[#allocation2 + $0x58] sm:$0xff]
      %v1570 = vld [vmem:[#allocation2 + $0x60] sm:$0xff]
      %v1571 = vld [vmem:[#allocation2 + $0x68] sm:$0xff]
      %v1572 = vld [vmem:[#allocation2 + $0x70] sm:$0xff]
      %v1573 = vld [vmem:[#allocation2 + $0x78] sm:$0xff]
      %v1574 = vld [vmem:[#allocation2 + $0x80] sm:$0xff]
      %v1575 = vld [vmem:[#allocation2 + $0x88] sm:$0xff]
      %v1576 = vld [vmem:[#allocation2 + $0x90] sm:$0xff]
      %v1577 = vld [vmem:[#allocation2 + $0x98] sm:$0xff]
      %v1578 = vld [vmem:[#allocation2 + $0xa0] sm:$0xff]
      %v1579 = vld [vmem:[#allocation2 + $0xa8] sm:$0xff]
      %v1580 = vld [vmem:[#allocation2 + $0xb0] sm:$0xff]
      %v1581 = vld [vmem:[#allocation2 + $0xb8] sm:$0xff]
      %v1582 = vld [vmem:[#allocation2 + $0xc0] sm:$0xff]
      %v1583 = vld [vmem:[#allocation2 + $0xc8] sm:$0xff]
      %v1584 = vld [vmem:[#allocation2 + $0xd0] sm:$0xff]
      %v1585 = vld [vmem:[#allocation2 + $0xd8] sm:$0xff]
      %v1586 = vld [vmem:[#allocation2 + $0xe0] sm:$0xff]
      %v1587 = vld [vmem:[#allocation2 + $0xe8] sm:$0xff]
      %v1588 = vld [vmem:[#allocation2 + $0xf0] sm:$0xff]
      %v1589 = vld [vmem:[#allocation2 + $0xf8] sm:$0xff]
      %1590 = vrot.lane.b32.xlu0 %v974, 127
      %v1591 = vpop.permute.xlu0 %1590
      %1592 = vrot.lane.b32.xlu0 %v975, 127
      %v1593 = vpop.permute.xlu0 %1592
      %v1594 = vsel %vm1265, %v1591, %v1593
      %v1598 = vmul.f32 %v1558, %v1591
      %v1599 = vmul.f32 %v1559, %v1594
      %v1600 = vmul.f32 %v1560, %v1593
      %v1601 = vmul.f32 %v1562, %v1591
      %v1602 = vmul.f32 %v1563, %v1594
      %v1603 = vmul.f32 %v1564, %v1593
      %v1604 = vmul.f32 %v1566, %v1591
      %v1605 = vmul.f32 %v1567, %v1594
      %v1606 = vmul.f32 %v1568, %v1593
      %v1607 = vmul.f32 %v1570, %v1591
      %v1608 = vmul.f32 %v1571, %v1594
      %v1609 = vmul.f32 %v1572, %v1593
      %v1610 = vmul.f32 %v1574, %v1591
      %v1611 = vmul.f32 %v1575, %v1594
      %v1612 = vmul.f32 %v1576, %v1593
      %v1613 = vmul.f32 %v1578, %v1591
      %v1614 = vmul.f32 %v1579, %v1594
      %v1615 = vmul.f32 %v1580, %v1593
      %v1616 = vmul.f32 %v1582, %v1591
      %v1617 = vmul.f32 %v1583, %v1594
      %v1618 = vmul.f32 %v1584, %v1593
      %v1619 = vmul.f32 %v1586, %v1591
      %v1620 = vmul.f32 %v1587, %v1594
      %v1621 = vmul.f32 %v1588, %v1593
      %1622 = vset.pattern.permute.xlu0 3
      %1623 = vperm.xlu0 %1622, %v982
      %v1624 = vpop.permute.xlu0 %1623
      %1626 = vset.pattern.permute.xlu0 3
      %1627 = vperm.xlu0 %1626, %v983
      %v1628 = vpop.permute.xlu0 %1627
      %1630 = vset.pattern.permute.xlu0 3
      %1631 = vperm.xlu0 %1630, %v984
      %v1632 = vpop.permute.xlu0 %1631
      %1634 = vset.pattern.permute.xlu0 3
      %1635 = vperm.xlu0 %1634, %v985
      %v1636 = vpop.permute.xlu0 %1635
      %1638 = vset.pattern.permute.xlu0 3
      %1639 = vperm.xlu0 %1638, %v986
      %v1640 = vpop.permute.xlu0 %1639
      %1642 = vset.pattern.permute.xlu0 3
      %1643 = vperm.xlu0 %1642, %v987
      %v1644 = vpop.permute.xlu0 %1643
      %1646 = vset.pattern.permute.xlu0 3
      %1647 = vperm.xlu0 %1646, %v988
      %v1648 = vpop.permute.xlu0 %1647
      %1650 = vset.pattern.permute.xlu0 3
      %1651 = vperm.xlu0 %1650, %v989
      %v1652 = vpop.permute.xlu0 %1651
      %v1654 = vmul.f32 %v1598, %v1624
      %v1655 = vmul.f32 %v1599, %v1624
      %v1656 = vmul.f32 %v1600, %v1624
      %v1657 = vmul.f32 %v1601, %v1628
      %v1658 = vmul.f32 %v1602, %v1628
      %v1659 = vmul.f32 %v1603, %v1628
      %v1660 = vmul.f32 %v1604, %v1632
      %v1661 = vmul.f32 %v1605, %v1632
      %v1662 = vmul.f32 %v1606, %v1632
      %v1663 = vmul.f32 %v1607, %v1636
      %v1664 = vmul.f32 %v1608, %v1636
      %v1665 = vmul.f32 %v1609, %v1636
      %v1666 = vmul.f32 %v1610, %v1640
      %v1667 = vmul.f32 %v1611, %v1640
      %v1668 = vmul.f32 %v1612, %v1640
      %v1669 = vmul.f32 %v1613, %v1644
      %v1670 = vmul.f32 %v1614, %v1644
      %v1671 = vmul.f32 %v1615, %v1644
      %v1672 = vmul.f32 %v1616, %v1648
      %v1673 = vmul.f32 %v1617, %v1648
      %v1674 = vmul.f32 %v1618, %v1648
      %v1675 = vmul.f32 %v1619, %v1652
      %v1676 = vmul.f32 %v1620, %v1652
      %v1677 = vmul.f32 %v1621, %v1652
      %1702 = vrot.lane.b32.xlu0 %v1654, 112
      %v1703 = vpop.permute.xlu0 %1702
      %1704 = vrot.lane.b32.xlu0 %v1655, 112
      %v1705 = vpop.permute.xlu0 %1704
      %1706 = vrot.lane.b32.xlu0 %v1656, 112
      %v1707 = vpop.permute.xlu0 %1706
      %1708 = vrot.lane.b32.xlu0 %v1657, 112
      %v1709 = vpop.permute.xlu0 %1708
      %1710 = vrot.lane.b32.xlu0 %v1658, 112
      %v1711 = vpop.permute.xlu0 %1710
      %1712 = vrot.lane.b32.xlu0 %v1659, 112
      %v1713 = vpop.permute.xlu0 %1712
      %1714 = vrot.lane.b32.xlu0 %v1660, 112
      %v1715 = vpop.permute.xlu0 %1714
      %1716 = vrot.lane.b32.xlu0 %v1661, 112
      %v1717 = vpop.permute.xlu0 %1716
      %1718 = vrot.lane.b32.xlu0 %v1662, 112
      %v1719 = vpop.permute.xlu0 %1718
      %1720 = vrot.lane.b32.xlu0 %v1663, 112
      %v1721 = vpop.permute.xlu0 %1720
      %1722 = vrot.lane.b32.xlu0 %v1664, 112
      %v1723 = vpop.permute.xlu0 %1722
      %1724 = vrot.lane.b32.xlu0 %v1665, 112
      %v1725 = vpop.permute.xlu0 %1724
      %1726 = vrot.lane.b32.xlu0 %v1666, 112
      %v1727 = vpop.permute.xlu0 %1726
      %1728 = vrot.lane.b32.xlu0 %v1667, 112
      %v1729 = vpop.permute.xlu0 %1728
      %1730 = vrot.lane.b32.xlu0 %v1668, 112
      %v1731 = vpop.permute.xlu0 %1730
      %1732 = vrot.lane.b32.xlu0 %v1669, 112
      %v1733 = vpop.permute.xlu0 %1732
      %1734 = vrot.lane.b32.xlu0 %v1670, 112
      %v1735 = vpop.permute.xlu0 %1734
      %1736 = vrot.lane.b32.xlu0 %v1671, 112
      %v1737 = vpop.permute.xlu0 %1736
      %1738 = vrot.lane.b32.xlu0 %v1672, 112
      %v1739 = vpop.permute.xlu0 %1738
      %1740 = vrot.lane.b32.xlu0 %v1673, 112
      %v1741 = vpop.permute.xlu0 %1740
      %1742 = vrot.lane.b32.xlu0 %v1674, 112
      %v1743 = vpop.permute.xlu0 %1742
      %1744 = vrot.lane.b32.xlu0 %v1675, 112
      %v1745 = vpop.permute.xlu0 %1744
      %1746 = vrot.lane.b32.xlu0 %v1676, 112
      %v1747 = vpop.permute.xlu0 %1746
      %1748 = vrot.lane.b32.xlu0 %v1677, 112
      %v1749 = vpop.permute.xlu0 %1748
      %vm1750 = vcmask 916480
      %v1751 = vsel %vm1750, %v1703, %v1705
      %v1752 = vsel %vm1750, %v1705, %v1707
      %v1753 = vsel %vm1750, %v1709, %v1711
      %v1754 = vsel %vm1750, %v1711, %v1713
      %v1755 = vsel %vm1750, %v1715, %v1717
      %v1756 = vsel %vm1750, %v1717, %v1719
      %v1757 = vsel %vm1750, %v1721, %v1723
      %v1758 = vsel %vm1750, %v1723, %v1725
      %v1759 = vsel %vm1750, %v1727, %v1729
      %v1760 = vsel %vm1750, %v1729, %v1731
      %v1761 = vsel %vm1750, %v1733, %v1735
      %v1762 = vsel %vm1750, %v1735, %v1737
      %v1763 = vsel %vm1750, %v1739, %v1741
      %v1764 = vsel %vm1750, %v1741, %v1743
      %v1765 = vsel %vm1750, %v1745, %v1747
      %v1766 = vsel %vm1750, %v1747, %v1749
      %v1791 = vadd.f32 %v1534, %v1751
      %v1792 = vadd.f32 %v1535, %v1752
      %v1793 = vadd.f32 %v1536, %v1707
      %v1794 = vadd.f32 %v1537, %v1753
      %v1795 = vadd.f32 %v1538, %v1754
      %v1796 = vadd.f32 %v1539, %v1713
      %v1797 = vadd.f32 %v1540, %v1755
      %v1798 = vadd.f32 %v1541, %v1756
      %v1799 = vadd.f32 %v1542, %v1719
      %v1800 = vadd.f32 %v1543, %v1757
      %v1801 = vadd.f32 %v1544, %v1758
      %v1802 = vadd.f32 %v1545, %v1725
      %v1803 = vadd.f32 %v1546, %v1759
      %v1804 = vadd.f32 %v1547, %v1760
      %v1805 = vadd.f32 %v1548, %v1731
      %v1806 = vadd.f32 %v1549, %v1761
      %v1807 = vadd.f32 %v1550, %v1762
      %v1808 = vadd.f32 %v1551, %v1737
      %v1809 = vadd.f32 %v1552, %v1763
      %v1810 = vadd.f32 %v1553, %v1764
      %v1811 = vadd.f32 %v1554, %v1743
      %v1812 = vadd.f32 %v1555, %v1765
      %v1813 = vadd.f32 %v1556, %v1766
      %v1814 = vadd.f32 %v1557, %v1749
      %1815 = vset.pattern.permute.xlu0 4
      %1816 = vperm.xlu0 %1815, %v982
      %v1817 = vpop.permute.xlu0 %1816
      %1819 = vset.pattern.permute.xlu0 4
      %1820 = vperm.xlu0 %1819, %v983
      %v1821 = vpop.permute.xlu0 %1820
      %1823 = vset.pattern.permute.xlu0 4
      %1824 = vperm.xlu0 %1823, %v984
      %v1825 = vpop.permute.xlu0 %1824
      %1827 = vset.pattern.permute.xlu0 4
      %1828 = vperm.xlu0 %1827, %v985
      %v1829 = vpop.permute.xlu0 %1828
      %1831 = vset.pattern.permute.xlu0 4
      %1832 = vperm.xlu0 %1831, %v986
      %v1833 = vpop.permute.xlu0 %1832
      %1835 = vset.pattern.permute.xlu0 4
      %1836 = vperm.xlu0 %1835, %v987
      %v1837 = vpop.permute.xlu0 %1836
      %1839 = vset.pattern.permute.xlu0 4
      %1840 = vperm.xlu0 %1839, %v988
      %v1841 = vpop.permute.xlu0 %1840
      %1843 = vset.pattern.permute.xlu0 4
      %1844 = vperm.xlu0 %1843, %v989
      %v1845 = vpop.permute.xlu0 %1844
      %v1847 = vmul.f32 %v873, %v1817
      %v1848 = vmul.f32 %v875, %v1817
      %v1849 = vmul.f32 %v877, %v1821
      %v1850 = vmul.f32 %v879, %v1821
      %v1851 = vmul.f32 %v883, %v1825
      %v1852 = vmul.f32 %v885, %v1825
      %v1853 = vmul.f32 %v887, %v1829
      %v1854 = vmul.f32 %v889, %v1829
      %v1855 = vmul.f32 %v893, %v1833
      %v1856 = vmul.f32 %v895, %v1833
      %v1857 = vmul.f32 %v897, %v1837
      %v1858 = vmul.f32 %v899, %v1837
      %v1859 = vmul.f32 %v903, %v1841
      %v1860 = vmul.f32 %v905, %v1841
      %v1861 = vmul.f32 %v907, %v1845
      %v1862 = vmul.f32 %v909, %v1845
      %1879 = vrot.lane.b32.xlu0 %v1847, 111
      %v1880 = vpop.permute.xlu0 %1879
      %1881 = vrot.lane.b32.xlu0 %v1848, 111
      %v1882 = vpop.permute.xlu0 %1881
      %1883 = vrot.lane.b32.xlu0 %v1849, 111
      %v1884 = vpop.permute.xlu0 %1883
      %1885 = vrot.lane.b32.xlu0 %v1850, 111
      %v1886 = vpop.permute.xlu0 %1885
      %1887 = vrot.lane.b32.xlu0 %v1851, 111
      %v1888 = vpop.permute.xlu0 %1887
      %1889 = vrot.lane.b32.xlu0 %v1852, 111
      %v1890 = vpop.permute.xlu0 %1889
      %1891 = vrot.lane.b32.xlu0 %v1853, 111
      %v1892 = vpop.permute.xlu0 %1891
      %1893 = vrot.lane.b32.xlu0 %v1854, 111
      %v1894 = vpop.permute.xlu0 %1893
      %1895 = vrot.lane.b32.xlu0 %v1855, 111
      %v1896 = vpop.permute.xlu0 %1895
      %1897 = vrot.lane.b32.xlu0 %v1856, 111
      %v1898 = vpop.permute.xlu0 %1897
      %1899 = vrot.lane.b32.xlu0 %v1857, 111
      %v1900 = vpop.permute.xlu0 %1899
      %1901 = vrot.lane.b32.xlu0 %v1858, 111
      %v1902 = vpop.permute.xlu0 %1901
      %1903 = vrot.lane.b32.xlu0 %v1859, 111
      %v1904 = vpop.permute.xlu0 %1903
      %1905 = vrot.lane.b32.xlu0 %v1860, 111
      %v1906 = vpop.permute.xlu0 %1905
      %1907 = vrot.lane.b32.xlu0 %v1861, 111
      %v1908 = vpop.permute.xlu0 %1907
      %1909 = vrot.lane.b32.xlu0 %v1862, 111
      %v1910 = vpop.permute.xlu0 %1909
      %v1911 = vsel %vm1020, %v1880, %v1882
      %v1912 = vsel %vm1020, %v1884, %v1886
      %v1913 = vsel %vm1020, %v1888, %v1890
      %v1914 = vsel %vm1020, %v1892, %v1894
      %v1915 = vsel %vm1020, %v1896, %v1898
      %v1916 = vsel %vm1020, %v1900, %v1902
      %v1917 = vsel %vm1020, %v1904, %v1906
      %v1918 = vsel %vm1020, %v1908, %v1910
      %v1943 = vadd.f32 %v1791, %v1880
      %v1944 = vadd.f32 %v1792, %v1911
      %v1945 = vadd.f32 %v1793, %v1882
      %v1946 = vadd.f32 %v1794, %v1884
      %v1947 = vadd.f32 %v1795, %v1912
      %v1948 = vadd.f32 %v1796, %v1886
      %v1949 = vadd.f32 %v1797, %v1888
      %v1950 = vadd.f32 %v1798, %v1913
      %v1951 = vadd.f32 %v1799, %v1890
      %v1952 = vadd.f32 %v1800, %v1892
      %v1953 = vadd.f32 %v1801, %v1914
      %v1954 = vadd.f32 %v1802, %v1894
      %v1955 = vadd.f32 %v1803, %v1896
      %v1956 = vadd.f32 %v1804, %v1915
      %v1957 = vadd.f32 %v1805, %v1898
      %v1958 = vadd.f32 %v1806, %v1900
      %v1959 = vadd.f32 %v1807, %v1916
      %v1960 = vadd.f32 %v1808, %v1902
      %v1961 = vadd.f32 %v1809, %v1904
      %v1962 = vadd.f32 %v1810, %v1917
      %v1963 = vadd.f32 %v1811, %v1906
      %v1964 = vadd.f32 %v1812, %v1908
      %v1965 = vadd.f32 %v1813, %v1918
      %v1966 = vadd.f32 %v1814, %v1910
      %1967 = vrot.lane.b32.xlu0 %v980, 1
      %v1968 = vpop.permute.xlu0 %1967
      %1969 = vrot.lane.b32.xlu0 %v981, 1
      %v1970 = vpop.permute.xlu0 %1969
      %vm1971 = vcmask 7168
      %v1972 = vsel %vm1971, %v1968, %v1970
      %v1976 = vmul.f32 %v1559, %v1968
      %v1977 = vmul.f32 %v1560, %v1972
      %v1978 = vmul.f32 %v1561, %v1970
      %v1979 = vmul.f32 %v1563, %v1968
      %v1980 = vmul.f32 %v1564, %v1972
      %v1981 = vmul.f32 %v1565, %v1970
      %v1982 = vmul.f32 %v1567, %v1968
      %v1983 = vmul.f32 %v1568, %v1972
      %v1984 = vmul.f32 %v1569, %v1970
      %v1985 = vmul.f32 %v1571, %v1968
      %v1986 = vmul.f32 %v1572, %v1972
      %v1987 = vmul.f32 %v1573, %v1970
      %v1988 = vmul.f32 %v1575, %v1968
      %v1989 = vmul.f32 %v1576, %v1972
      %v1990 = vmul.f32 %v1577, %v1970
      %v1991 = vmul.f32 %v1579, %v1968
      %v1992 = vmul.f32 %v1580, %v1972
      %v1993 = vmul.f32 %v1581, %v1970
      %v1994 = vmul.f32 %v1583, %v1968
      %v1995 = vmul.f32 %v1584, %v1972
      %v1996 = vmul.f32 %v1585, %v1970
      %v1997 = vmul.f32 %v1587, %v1968
      %v1998 = vmul.f32 %v1588, %v1972
      %v1999 = vmul.f32 %v1589, %v1970
      %2000 = vset.pattern.permute.xlu0 5
      %2001 = vperm.xlu0 %2000, %v982
      %v2002 = vpop.permute.xlu0 %2001
      %2004 = vset.pattern.permute.xlu0 5
      %2005 = vperm.xlu0 %2004, %v983
      %v2006 = vpop.permute.xlu0 %2005
      %2008 = vset.pattern.permute.xlu0 5
      %2009 = vperm.xlu0 %2008, %v984
      %v2010 = vpop.permute.xlu0 %2009
      %2012 = vset.pattern.permute.xlu0 5
      %2013 = vperm.xlu0 %2012, %v985
      %v2014 = vpop.permute.xlu0 %2013
      %2016 = vset.pattern.permute.xlu0 5
      %2017 = vperm.xlu0 %2016, %v986
      %v2018 = vpop.permute.xlu0 %2017
      %2020 = vset.pattern.permute.xlu0 5
      %2021 = vperm.xlu0 %2020, %v987
      %v2022 = vpop.permute.xlu0 %2021
      %2024 = vset.pattern.permute.xlu0 5
      %2025 = vperm.xlu0 %2024, %v988
      %v2026 = vpop.permute.xlu0 %2025
      %2028 = vset.pattern.permute.xlu0 5
      %2029 = vperm.xlu0 %2028, %v989
      %v2030 = vpop.permute.xlu0 %2029
      %v2032 = vmul.f32 %v1976, %v2002
      %v2033 = vmul.f32 %v1977, %v2002
      %v2034 = vmul.f32 %v1978, %v2002
      %v2035 = vmul.f32 %v1979, %v2006
      %v2036 = vmul.f32 %v1980, %v2006
      %v2037 = vmul.f32 %v1981, %v2006
      %v2038 = vmul.f32 %v1982, %v2010
      %v2039 = vmul.f32 %v1983, %v2010
      %v2040 = vmul.f32 %v1984, %v2010
      %v2041 = vmul.f32 %v1985, %v2014
      %v2042 = vmul.f32 %v1986, %v2014
      %v2043 = vmul.f32 %v1987, %v2014
      %v2044 = vmul.f32 %v1988, %v2018
      %v2045 = vmul.f32 %v1989, %v2018
      %v2046 = vmul.f32 %v1990, %v2018
      %v2047 = vmul.f32 %v1991, %v2022
      %v2048 = vmul.f32 %v1992, %v2022
      %v2049 = vmul.f32 %v1993, %v2022
      %v2050 = vmul.f32 %v1994, %v2026
      %v2051 = vmul.f32 %v1995, %v2026
      %v2052 = vmul.f32 %v1996, %v2026
      %v2053 = vmul.f32 %v1997, %v2030
      %v2054 = vmul.f32 %v1998, %v2030
      %v2055 = vmul.f32 %v1999, %v2030
      %2080 = vrot.lane.b32.xlu0 %v2032, 110
      %v2081 = vpop.permute.xlu0 %2080
      %2082 = vrot.lane.b32.xlu0 %v2033, 110
      %v2083 = vpop.permute.xlu0 %2082
      %2084 = vrot.lane.b32.xlu0 %v2034, 110
      %v2085 = vpop.permute.xlu0 %2084
      %2086 = vrot.lane.b32.xlu0 %v2035, 110
      %v2087 = vpop.permute.xlu0 %2086
      %2088 = vrot.lane.b32.xlu0 %v2036, 110
      %v2089 = vpop.permute.xlu0 %2088
      %2090 = vrot.lane.b32.xlu0 %v2037, 110
      %v2091 = vpop.permute.xlu0 %2090
      %2092 = vrot.lane.b32.xlu0 %v2038, 110
      %v2093 = vpop.permute.xlu0 %2092
      %2094 = vrot.lane.b32.xlu0 %v2039, 110
      %v2095 = vpop.permute.xlu0 %2094
      %2096 = vrot.lane.b32.xlu0 %v2040, 110
      %v2097 = vpop.permute.xlu0 %2096
      %2098 = vrot.lane.b32.xlu0 %v2041, 110
      %v2099 = vpop.permute.xlu0 %2098
      %2100 = vrot.lane.b32.xlu0 %v2042, 110
      %v2101 = vpop.permute.xlu0 %2100
      %2102 = vrot.lane.b32.xlu0 %v2043, 110
      %v2103 = vpop.permute.xlu0 %2102
      %2104 = vrot.lane.b32.xlu0 %v2044, 110
      %v2105 = vpop.permute.xlu0 %2104
      %2106 = vrot.lane.b32.xlu0 %v2045, 110
      %v2107 = vpop.permute.xlu0 %2106
      %2108 = vrot.lane.b32.xlu0 %v2046, 110
      %v2109 = vpop.permute.xlu0 %2108
      %2110 = vrot.lane.b32.xlu0 %v2047, 110
      %v2111 = vpop.permute.xlu0 %2110
      %2112 = vrot.lane.b32.xlu0 %v2048, 110
      %v2113 = vpop.permute.xlu0 %2112
      %2114 = vrot.lane.b32.xlu0 %v2049, 110
      %v2115 = vpop.permute.xlu0 %2114
      %2116 = vrot.lane.b32.xlu0 %v2050, 110
      %v2117 = vpop.permute.xlu0 %2116
      %2118 = vrot.lane.b32.xlu0 %v2051, 110
      %v2119 = vpop.permute.xlu0 %2118
      %2120 = vrot.lane.b32.xlu0 %v2052, 110
      %v2121 = vpop.permute.xlu0 %2120
      %2122 = vrot.lane.b32.xlu0 %v2053, 110
      %v2123 = vpop.permute.xlu0 %2122
      %2124 = vrot.lane.b32.xlu0 %v2054, 110
      %v2125 = vpop.permute.xlu0 %2124
      %2126 = vrot.lane.b32.xlu0 %v2055, 110
      %v2127 = vpop.permute.xlu0 %2126
      %vm2128 = vcmask 900096
      %v2129 = vsel %vm2128, %v2081, %v2083
      %v2130 = vsel %vm2128, %v2083, %v2085
      %v2131 = vsel %vm2128, %v2087, %v2089
      %v2132 = vsel %vm2128, %v2089, %v2091
      %v2133 = vsel %vm2128, %v2093, %v2095
      %v2134 = vsel %vm2128, %v2095, %v2097
      %v2135 = vsel %vm2128, %v2099, %v2101
      %v2136 = vsel %vm2128, %v2101, %v2103
      %v2137 = vsel %vm2128, %v2105, %v2107
      %v2138 = vsel %vm2128, %v2107, %v2109
      %v2139 = vsel %vm2128, %v2111, %v2113
      %v2140 = vsel %vm2128, %v2113, %v2115
      %v2141 = vsel %vm2128, %v2117, %v2119
      %v2142 = vsel %vm2128, %v2119, %v2121
      %v2143 = vsel %vm2128, %v2123, %v2125
      %v2144 = vsel %vm2128, %v2125, %v2127
      %v2169 = vadd.f32 %v1943, %v2081
      %v2170 = vadd.f32 %v1944, %v2129
      %v2171 = vadd.f32 %v1945, %v2130
      %v2172 = vadd.f32 %v1946, %v2087
      %v2173 = vadd.f32 %v1947, %v2131
      %v2174 = vadd.f32 %v1948, %v2132
      %v2175 = vadd.f32 %v1949, %v2093
      %v2176 = vadd.f32 %v1950, %v2133
      %v2177 = vadd.f32 %v1951, %v2134
      %v2178 = vadd.f32 %v1952, %v2099
      %v2179 = vadd.f32 %v1953, %v2135
      %v2180 = vadd.f32 %v1954, %v2136
      %v2181 = vadd.f32 %v1955, %v2105
      %v2182 = vadd.f32 %v1956, %v2137
      %v2183 = vadd.f32 %v1957, %v2138
      %v2184 = vadd.f32 %v1958, %v2111
      %v2185 = vadd.f32 %v1959, %v2139
      %v2186 = vadd.f32 %v1960, %v2140
      %v2187 = vadd.f32 %v1961, %v2117
      %v2188 = vadd.f32 %v1962, %v2141
      %v2189 = vadd.f32 %v1963, %v2142
      %v2190 = vadd.f32 %v1964, %v2123
      %v2191 = vadd.f32 %v1965, %v2143
      %v2192 = vadd.f32 %v1966, %v2144
      %2193 = vrot.lane.b32.xlu0 %v974, 15
      %v2194 = vpop.permute.xlu0 %2193
      %2195 = vrot.lane.b32.xlu0 %v975, 15
      %v2196 = vpop.permute.xlu0 %2195
      %vm2197 = vcmask 121856
      %v2198 = vsel %vm2197, %v2194, %v2196
      %v2202 = vmul.f32 %v1559, %v2194
      %v2203 = vmul.f32 %v1560, %v2198
      %v2204 = vmul.f32 %v1561, %v2196
      %v2205 = vmul.f32 %v1563, %v2194
      %v2206 = vmul.f32 %v1564, %v2198
      %v2207 = vmul.f32 %v1565, %v2196
      %v2208 = vmul.f32 %v1567, %v2194
      %v2209 = vmul.f32 %v1568, %v2198
      %v2210 = vmul.f32 %v1569, %v2196
      %v2211 = vmul.f32 %v1571, %v2194
      %v2212 = vmul.f32 %v1572, %v2198
      %v2213 = vmul.f32 %v1573, %v2196
      %v2214 = vmul.f32 %v1575, %v2194
      %v2215 = vmul.f32 %v1576, %v2198
      %v2216 = vmul.f32 %v1577, %v2196
      %v2217 = vmul.f32 %v1579, %v2194
      %v2218 = vmul.f32 %v1580, %v2198
      %v2219 = vmul.f32 %v1581, %v2196
      %v2220 = vmul.f32 %v1583, %v2194
      %v2221 = vmul.f32 %v1584, %v2198
      %v2222 = vmul.f32 %v1585, %v2196
      %v2223 = vmul.f32 %v1587, %v2194
      %v2224 = vmul.f32 %v1588, %v2198
      %v2225 = vmul.f32 %v1589, %v2196
      %2226 = vset.pattern.permute.xlu0 6
      %2227 = vperm.xlu0 %2226, %v982
      %v2228 = vpop.permute.xlu0 %2227
      %2230 = vset.pattern.permute.xlu0 6
      %2231 = vperm.xlu0 %2230, %v983
      %v2232 = vpop.permute.xlu0 %2231
      %2234 = vset.pattern.permute.xlu0 6
      %2235 = vperm.xlu0 %2234, %v984
      %v2236 = vpop.permute.xlu0 %2235
      %2238 = vset.pattern.permute.xlu0 6
      %2239 = vperm.xlu0 %2238, %v985
      %v2240 = vpop.permute.xlu0 %2239
      %2242 = vset.pattern.permute.xlu0 6
      %2243 = vperm.xlu0 %2242, %v986
      %v2244 = vpop.permute.xlu0 %2243
      %2246 = vset.pattern.permute.xlu0 6
      %2247 = vperm.xlu0 %2246, %v987
      %v2248 = vpop.permute.xlu0 %2247
      %2250 = vset.pattern.permute.xlu0 6
      %2251 = vperm.xlu0 %2250, %v988
      %v2252 = vpop.permute.xlu0 %2251
      %2254 = vset.pattern.permute.xlu0 6
      %2255 = vperm.xlu0 %2254, %v989
      %v2256 = vpop.permute.xlu0 %2255
      %v2258 = vmul.f32 %v2202, %v2228
      %v2259 = vmul.f32 %v2203, %v2228
      %v2260 = vmul.f32 %v2204, %v2228
      %v2261 = vmul.f32 %v2205, %v2232
      %v2262 = vmul.f32 %v2206, %v2232
      %v2263 = vmul.f32 %v2207, %v2232
      %v2264 = vmul.f32 %v2208, %v2236
      %v2265 = vmul.f32 %v2209, %v2236
      %v2266 = vmul.f32 %v2210, %v2236
      %v2267 = vmul.f32 %v2211, %v2240
      %v2268 = vmul.f32 %v2212, %v2240
      %v2269 = vmul.f32 %v2213, %v2240
      %v2270 = vmul.f32 %v2214, %v2244
      %v2271 = vmul.f32 %v2215, %v2244
      %v2272 = vmul.f32 %v2216, %v2244
      %v2273 = vmul.f32 %v2217, %v2248
      %v2274 = vmul.f32 %v2218, %v2248
      %v2275 = vmul.f32 %v2219, %v2248
      %v2276 = vmul.f32 %v2220, %v2252
      %v2277 = vmul.f32 %v2221, %v2252
      %v2278 = vmul.f32 %v2222, %v2252
      %v2279 = vmul.f32 %v2223, %v2256
      %v2280 = vmul.f32 %v2224, %v2256
      %v2281 = vmul.f32 %v2225, %v2256
      %2306 = vrot.lane.b32.xlu0 %v2258, 96
      %v2307 = vpop.permute.xlu0 %2306
      %2308 = vrot.lane.b32.xlu0 %v2259, 96
      %v2309 = vpop.permute.xlu0 %2308
      %2310 = vrot.lane.b32.xlu0 %v2260, 96
      %v2311 = vpop.permute.xlu0 %2310
      %2312 = vrot.lane.b32.xlu0 %v2261, 96
      %v2313 = vpop.permute.xlu0 %2312
      %2314 = vrot.lane.b32.xlu0 %v2262, 96
      %v2315 = vpop.permute.xlu0 %2314
      %2316 = vrot.lane.b32.xlu0 %v2263, 96
      %v2317 = vpop.permute.xlu0 %2316
      %2318 = vrot.lane.b32.xlu0 %v2264, 96
      %v2319 = vpop.permute.xlu0 %2318
      %2320 = vrot.lane.b32.xlu0 %v2265, 96
      %v2321 = vpop.permute.xlu0 %2320
      %2322 = vrot.lane.b32.xlu0 %v2266, 96
      %v2323 = vpop.permute.xlu0 %2322
      %2324 = vrot.lane.b32.xlu0 %v2267, 96
      %v2325 = vpop.permute.xlu0 %2324
      %2326 = vrot.lane.b32.xlu0 %v2268, 96
      %v2327 = vpop.permute.xlu0 %2326
      %2328 = vrot.lane.b32.xlu0 %v2269, 96
      %v2329 = vpop.permute.xlu0 %2328
      %2330 = vrot.lane.b32.xlu0 %v2270, 96
      %v2331 = vpop.permute.xlu0 %2330
      %2332 = vrot.lane.b32.xlu0 %v2271, 96
      %v2333 = vpop.permute.xlu0 %2332
      %2334 = vrot.lane.b32.xlu0 %v2272, 96
      %v2335 = vpop.permute.xlu0 %2334
      %2336 = vrot.lane.b32.xlu0 %v2273, 96
      %v2337 = vpop.permute.xlu0 %2336
      %2338 = vrot.lane.b32.xlu0 %v2274, 96
      %v2339 = vpop.permute.xlu0 %2338
      %2340 = vrot.lane.b32.xlu0 %v2275, 96
      %v2341 = vpop.permute.xlu0 %2340
      %2342 = vrot.lane.b32.xlu0 %v2276, 96
      %v2343 = vpop.permute.xlu0 %2342
      %2344 = vrot.lane.b32.xlu0 %v2277, 96
      %v2345 = vpop.permute.xlu0 %2344
      %2346 = vrot.lane.b32.xlu0 %v2278, 96
      %v2347 = vpop.permute.xlu0 %2346
      %2348 = vrot.lane.b32.xlu0 %v2279, 96
      %v2349 = vpop.permute.xlu0 %2348
      %2350 = vrot.lane.b32.xlu0 %v2280, 96
      %v2351 = vpop.permute.xlu0 %2350
      %2352 = vrot.lane.b32.xlu0 %v2281, 96
      %v2353 = vpop.permute.xlu0 %2352
      %vm2354 = vcmask 785408
      %v2355 = vsel %vm2354, %v2307, %v2309
      %v2356 = vsel %vm2354, %v2309, %v2311
      %v2357 = vsel %vm2354, %v2313, %v2315
      %v2358 = vsel %vm2354, %v2315, %v2317
      %v2359 = vsel %vm2354, %v2319, %v2321
      %v2360 = vsel %vm2354, %v2321, %v2323
      %v2361 = vsel %vm2354, %v2325, %v2327
      %v2362 = vsel %vm2354, %v2327, %v2329
      %v2363 = vsel %vm2354, %v2331, %v2333
      %v2364 = vsel %vm2354, %v2333, %v2335
      %v2365 = vsel %vm2354, %v2337, %v2339
      %v2366 = vsel %vm2354, %v2339, %v2341
      %v2367 = vsel %vm2354, %v2343, %v2345
      %v2368 = vsel %vm2354, %v2345, %v2347
      %v2369 = vsel %vm2354, %v2349, %v2351
      %v2370 = vsel %vm2354, %v2351, %v2353
      %v2395 = vadd.f32 %v2169, %v2307
      %v2396 = vadd.f32 %v2170, %v2355
      %v2397 = vadd.f32 %v2171, %v2356
      %v2398 = vadd.f32 %v2172, %v2313
      %v2399 = vadd.f32 %v2173, %v2357
      %v2400 = vadd.f32 %v2174, %v2358
      %v2401 = vadd.f32 %v2175, %v2319
      %v2402 = vadd.f32 %v2176, %v2359
      %v2403 = vadd.f32 %v2177, %v2360
      %v2404 = vadd.f32 %v2178, %v2325
      %v2405 = vadd.f32 %v2179, %v2361
      %v2406 = vadd.f32 %v2180, %v2362
      %v2407 = vadd.f32 %v2181, %v2331
      %v2408 = vadd.f32 %v2182, %v2363
      %v2409 = vadd.f32 %v2183, %v2364
      %v2410 = vadd.f32 %v2184, %v2337
      %v2411 = vadd.f32 %v2185, %v2365
      %v2412 = vadd.f32 %v2186, %v2366
      %v2413 = vadd.f32 %v2187, %v2343
      %v2414 = vadd.f32 %v2188, %v2367
      %v2415 = vadd.f32 %v2189, %v2368
      %v2416 = vadd.f32 %v2190, %v2349
      %v2417 = vadd.f32 %v2191, %v2369
      %v2418 = vadd.f32 %v2192, %v2370
      %2419 = vset.pattern.permute.xlu0 7
      %2420 = vperm.xlu0 %2419, %v982
      %v2421 = vpop.permute.xlu0 %2420
      %2423 = vset.pattern.permute.xlu0 7
      %2424 = vperm.xlu0 %2423, %v983
      %v2425 = vpop.permute.xlu0 %2424
      %2427 = vset.pattern.permute.xlu0 7
      %2428 = vperm.xlu0 %2427, %v984
      %v2429 = vpop.permute.xlu0 %2428
      %2431 = vset.pattern.permute.xlu0 7
      %2432 = vperm.xlu0 %2431, %v985
      %v2433 = vpop.permute.xlu0 %2432
      %2435 = vset.pattern.permute.xlu0 7
      %2436 = vperm.xlu0 %2435, %v986
      %v2437 = vpop.permute.xlu0 %2436
      %2439 = vset.pattern.permute.xlu0 7
      %2440 = vperm.xlu0 %2439, %v987
      %v2441 = vpop.permute.xlu0 %2440
      %2443 = vset.pattern.permute.xlu0 7
      %2444 = vperm.xlu0 %2443, %v988
      %v2445 = vpop.permute.xlu0 %2444
      %2447 = vset.pattern.permute.xlu0 7
      %2448 = vperm.xlu0 %2447, %v989
      %v2449 = vpop.permute.xlu0 %2448
      %v2451 = vmul.f32 %v1559, %v2421
      %v2452 = vmul.f32 %v1560, %v2421
      %v2453 = vmul.f32 %v1561, %v2421
      %v2454 = vmul.f32 %v1563, %v2425
      %v2455 = vmul.f32 %v1564, %v2425
      %v2456 = vmul.f32 %v1565, %v2425
      %v2457 = vmul.f32 %v1567, %v2429
      %v2458 = vmul.f32 %v1568, %v2429
      %v2459 = vmul.f32 %v1569, %v2429
      %v2460 = vmul.f32 %v1571, %v2433
      %v2461 = vmul.f32 %v1572, %v2433
      %v2462 = vmul.f32 %v1573, %v2433
      %v2463 = vmul.f32 %v1575, %v2437
      %v2464 = vmul.f32 %v1576, %v2437
      %v2465 = vmul.f32 %v1577, %v2437
      %v2466 = vmul.f32 %v1579, %v2441
      %v2467 = vmul.f32 %v1580, %v2441
      %v2468 = vmul.f32 %v1581, %v2441
      %v2469 = vmul.f32 %v1583, %v2445
      %v2470 = vmul.f32 %v1584, %v2445
      %v2471 = vmul.f32 %v1585, %v2445
      %v2472 = vmul.f32 %v1587, %v2449
      %v2473 = vmul.f32 %v1588, %v2449
      %v2474 = vmul.f32 %v1589, %v2449
      %2499 = vrot.lane.b32.xlu0 %v2451, 95
      %v2500 = vpop.permute.xlu0 %2499
      %2501 = vrot.lane.b32.xlu0 %v2452, 95
      %v2502 = vpop.permute.xlu0 %2501
      %2503 = vrot.lane.b32.xlu0 %v2453, 95
      %v2504 = vpop.permute.xlu0 %2503
      %2505 = vrot.lane.b32.xlu0 %v2454, 95
      %v2506 = vpop.permute.xlu0 %2505
      %2507 = vrot.lane.b32.xlu0 %v2455, 95
      %v2508 = vpop.permute.xlu0 %2507
      %2509 = vrot.lane.b32.xlu0 %v2456, 95
      %v2510 = vpop.permute.xlu0 %2509
      %2511 = vrot.lane.b32.xlu0 %v2457, 95
      %v2512 = vpop.permute.xlu0 %2511
      %2513 = vrot.lane.b32.xlu0 %v2458, 95
      %v2514 = vpop.permute.xlu0 %2513
      %2515 = vrot.lane.b32.xlu0 %v2459, 95
      %v2516 = vpop.permute.xlu0 %2515
      %2517 = vrot.lane.b32.xlu0 %v2460, 95
      %v2518 = vpop.permute.xlu0 %2517
      %2519 = vrot.lane.b32.xlu0 %v2461, 95
      %v2520 = vpop.permute.xlu0 %2519
      %2521 = vrot.lane.b32.xlu0 %v2462, 95
      %v2522 = vpop.permute.xlu0 %2521
      %2523 = vrot.lane.b32.xlu0 %v2463, 95
      %v2524 = vpop.permute.xlu0 %2523
      %2525 = vrot.lane.b32.xlu0 %v2464, 95
      %v2526 = vpop.permute.xlu0 %2525
      %2527 = vrot.lane.b32.xlu0 %v2465, 95
      %v2528 = vpop.permute.xlu0 %2527
      %2529 = vrot.lane.b32.xlu0 %v2466, 95
      %v2530 = vpop.permute.xlu0 %2529
      %2531 = vrot.lane.b32.xlu0 %v2467, 95
      %v2532 = vpop.permute.xlu0 %2531
      %2533 = vrot.lane.b32.xlu0 %v2468, 95
      %v2534 = vpop.permute.xlu0 %2533
      %2535 = vrot.lane.b32.xlu0 %v2469, 95
      %v2536 = vpop.permute.xlu0 %2535
      %2537 = vrot.lane.b32.xlu0 %v2470, 95
      %v2538 = vpop.permute.xlu0 %2537
      %2539 = vrot.lane.b32.xlu0 %v2471, 95
      %v2540 = vpop.permute.xlu0 %2539
      %2541 = vrot.lane.b32.xlu0 %v2472, 95
      %v2542 = vpop.permute.xlu0 %2541
      %2543 = vrot.lane.b32.xlu0 %v2473, 95
      %v2544 = vpop.permute.xlu0 %2543
      %2545 = vrot.lane.b32.xlu0 %v2474, 95
      %v2546 = vpop.permute.xlu0 %2545
      %vm2547 = vcmask 777216
      %v2548 = vsel %vm2547, %v2500, %v2502
      %v2549 = vsel %vm2547, %v2502, %v2504
      %v2550 = vsel %vm2547, %v2506, %v2508
      %v2551 = vsel %vm2547, %v2508, %v2510
      %v2552 = vsel %vm2547, %v2512, %v2514
      %v2553 = vsel %vm2547, %v2514, %v2516
      %v2554 = vsel %vm2547, %v2518, %v2520
      %v2555 = vsel %vm2547, %v2520, %v2522
      %v2556 = vsel %vm2547, %v2524, %v2526
      %v2557 = vsel %vm2547, %v2526, %v2528
      %v2558 = vsel %vm2547, %v2530, %v2532
      %v2559 = vsel %vm2547, %v2532, %v2534
      %v2560 = vsel %vm2547, %v2536, %v2538
      %v2561 = vsel %vm2547, %v2538, %v2540
      %v2562 = vsel %vm2547, %v2542, %v2544
      %v2563 = vsel %vm2547, %v2544, %v2546
      %v2588 = vadd.f32 %v2395, %v2500
      %v2589 = vadd.f32 %v2396, %v2548
      %v2590 = vadd.f32 %v2397, %v2549
      %v2591 = vadd.f32 %v2398, %v2506
      %v2592 = vadd.f32 %v2399, %v2550
      %v2593 = vadd.f32 %v2400, %v2551
      %v2594 = vadd.f32 %v2401, %v2512
      %v2595 = vadd.f32 %v2402, %v2552
      %v2596 = vadd.f32 %v2403, %v2553
      %v2597 = vadd.f32 %v2404, %v2518
      %v2598 = vadd.f32 %v2405, %v2554
      %v2599 = vadd.f32 %v2406, %v2555
      %v2600 = vadd.f32 %v2407, %v2524
      %v2601 = vadd.f32 %v2408, %v2556
      %v2602 = vadd.f32 %v2409, %v2557
      %v2603 = vadd.f32 %v2410, %v2530
      %v2604 = vadd.f32 %v2411, %v2558
      %v2605 = vadd.f32 %v2412, %v2559
      %v2606 = vadd.f32 %v2413, %v2536
      %v2607 = vadd.f32 %v2414, %v2560
      %v2608 = vadd.f32 %v2415, %v2561
      %v2609 = vadd.f32 %v2416, %v2542
      %v2610 = vadd.f32 %v2417, %v2562
      %v2611 = vadd.f32 %v2418, %v2563
      %2612 = vrot.lane.b32.xlu0 %v980, 17
      %v2613 = vpop.permute.xlu0 %2612
      %2614 = vrot.lane.b32.xlu0 %v981, 17
      %v2615 = vpop.permute.xlu0 %2614
      %vm2616 = vcmask 138240
      %v2617 = vsel %vm2616, %v2613, %v2615
      %v2621 = vmul.f32 %v1559, %v2613
      %v2622 = vmul.f32 %v1560, %v2617
      %v2623 = vmul.f32 %v1561, %v2615
      %v2624 = vmul.f32 %v1563, %v2613
      %v2625 = vmul.f32 %v1564, %v2617
      %v2626 = vmul.f32 %v1565, %v2615
      %v2627 = vmul.f32 %v1567, %v2613
      %v2628 = vmul.f32 %v1568, %v2617
      %v2629 = vmul.f32 %v1569, %v2615
      %v2630 = vmul.f32 %v1571, %v2613
      %v2631 = vmul.f32 %v1572, %v2617
      %v2632 = vmul.f32 %v1573, %v2615
      %v2633 = vmul.f32 %v1575, %v2613
      %v2634 = vmul.f32 %v1576, %v2617
      %v2635 = vmul.f32 %v1577, %v2615
      %v2636 = vmul.f32 %v1579, %v2613
      %v2637 = vmul.f32 %v1580, %v2617
      %v2638 = vmul.f32 %v1581, %v2615
      %v2639 = vmul.f32 %v1583, %v2613
      %v2640 = vmul.f32 %v1584, %v2617
      %v2641 = vmul.f32 %v1585, %v2615
      %v2642 = vmul.f32 %v1587, %v2613
      %v2643 = vmul.f32 %v1588, %v2617
      %v2644 = vmul.f32 %v1589, %v2615
      %2645 = vset.pattern.permute.xlu0 8
      %2646 = vperm.xlu0 %2645, %v982
      %v2647 = vpop.permute.xlu0 %2646
      %2649 = vset.pattern.permute.xlu0 8
      %2650 = vperm.xlu0 %2649, %v983
      %v2651 = vpop.permute.xlu0 %2650
      %2653 = vset.pattern.permute.xlu0 8
      %2654 = vperm.xlu0 %2653, %v984
      %v2655 = vpop.permute.xlu0 %2654
      %2657 = vset.pattern.permute.xlu0 8
      %2658 = vperm.xlu0 %2657, %v985
      %v2659 = vpop.permute.xlu0 %2658
      %2661 = vset.pattern.permute.xlu0 8
      %2662 = vperm.xlu0 %2661, %v986
      %v2663 = vpop.permute.xlu0 %2662
      %2665 = vset.pattern.permute.xlu0 8
      %2666 = vperm.xlu0 %2665, %v987
      %v2667 = vpop.permute.xlu0 %2666
      %2669 = vset.pattern.permute.xlu0 8
      %2670 = vperm.xlu0 %2669, %v988
      %v2671 = vpop.permute.xlu0 %2670
      %2673 = vset.pattern.permute.xlu0 8
      %2674 = vperm.xlu0 %2673, %v989
      %v2675 = vpop.permute.xlu0 %2674
      %v2677 = vmul.f32 %v2621, %v2647
      %v2678 = vmul.f32 %v2622, %v2647
      %v2679 = vmul.f32 %v2623, %v2647
      %v2680 = vmul.f32 %v2624, %v2651
      %v2681 = vmul.f32 %v2625, %v2651
      %v2682 = vmul.f32 %v2626, %v2651
      %v2683 = vmul.f32 %v2627, %v2655
      %v2684 = vmul.f32 %v2628, %v2655
      %v2685 = vmul.f32 %v2629, %v2655
      %v2686 = vmul.f32 %v2630, %v2659
      %v2687 = vmul.f32 %v2631, %v2659
      %v2688 = vmul.f32 %v2632, %v2659
      %v2689 = vmul.f32 %v2633, %v2663
      %v2690 = vmul.f32 %v2634, %v2663
      %v2691 = vmul.f32 %v2635, %v2663
      %v2692 = vmul.f32 %v2636, %v2667
      %v2693 = vmul.f32 %v2637, %v2667
      %v2694 = vmul.f32 %v2638, %v2667
      %v2695 = vmul.f32 %v2639, %v2671
      %v2696 = vmul.f32 %v2640, %v2671
      %v2697 = vmul.f32 %v2641, %v2671
      %v2698 = vmul.f32 %v2642, %v2675
      %v2699 = vmul.f32 %v2643, %v2675
      %v2700 = vmul.f32 %v2644, %v2675
      %2725 = vrot.lane.b32.xlu0 %v2677, 94
      %v2726 = vpop.permute.xlu0 %2725
      %2727 = vrot.lane.b32.xlu0 %v2678, 94
      %v2728 = vpop.permute.xlu0 %2727
      %2729 = vrot.lane.b32.xlu0 %v2679, 94
      %v2730 = vpop.permute.xlu0 %2729
      %2731 = vrot.lane.b32.xlu0 %v2680, 94
      %v2732 = vpop.permute.xlu0 %2731
      %2733 = vrot.lane.b32.xlu0 %v2681, 94
      %v2734 = vpop.permute.xlu0 %2733
      %2735 = vrot.lane.b32.xlu0 %v2682, 94
      %v2736 = vpop.permute.xlu0 %2735
      %2737 = vrot.lane.b32.xlu0 %v2683, 94
      %v2738 = vpop.permute.xlu0 %2737
      %2739 = vrot.lane.b32.xlu0 %v2684, 94
      %v2740 = vpop.permute.xlu0 %2739
      %2741 = vrot.lane.b32.xlu0 %v2685, 94
      %v2742 = vpop.permute.xlu0 %2741
      %2743 = vrot.lane.b32.xlu0 %v2686, 94
      %v2744 = vpop.permute.xlu0 %2743
      %2745 = vrot.lane.b32.xlu0 %v2687, 94
      %v2746 = vpop.permute.xlu0 %2745
      %2747 = vrot.lane.b32.xlu0 %v2688, 94
      %v2748 = vpop.permute.xlu0 %2747
      %2749 = vrot.lane.b32.xlu0 %v2689, 94
      %v2750 = vpop.permute.xlu0 %2749
      %2751 = vrot.lane.b32.xlu0 %v2690, 94
      %v2752 = vpop.permute.xlu0 %2751
      %2753 = vrot.lane.b32.xlu0 %v2691, 94
      %v2754 = vpop.permute.xlu0 %2753
      %2755 = vrot.lane.b32.xlu0 %v2692, 94
      %v2756 = vpop.permute.xlu0 %2755
      %2757 = vrot.lane.b32.xlu0 %v2693, 94
      %v2758 = vpop.permute.xlu0 %2757
      %2759 = vrot.lane.b32.xlu0 %v2694, 94
      %v2760 = vpop.permute.xlu0 %2759
      %2761 = vrot.lane.b32.xlu0 %v2695, 94
      %v2762 = vpop.permute.xlu0 %2761
      %2763 = vrot.lane.b32.xlu0 %v2696, 94
      %v2764 = vpop.permute.xlu0 %2763
      %2765 = vrot.lane.b32.xlu0 %v2697, 94
      %v2766 = vpop.permute.xlu0 %2765
      %2767 = vrot.lane.b32.xlu0 %v2698, 94
      %v2768 = vpop.permute.xlu0 %2767
      %2769 = vrot.lane.b32.xlu0 %v2699, 94
      %v2770 = vpop.permute.xlu0 %2769
      %2771 = vrot.lane.b32.xlu0 %v2700, 94
      %v2772 = vpop.permute.xlu0 %2771
      %vm2773 = vcmask 769024
      %v2774 = vsel %vm2773, %v2726, %v2728
      %v2775 = vsel %vm2773, %v2728, %v2730
      %v2776 = vsel %vm2773, %v2732, %v2734
      %v2777 = vsel %vm2773, %v2734, %v2736
      %v2778 = vsel %vm2773, %v2738, %v2740
      %v2779 = vsel %vm2773, %v2740, %v2742
      %v2780 = vsel %vm2773, %v2744, %v2746
      %v2781 = vsel %vm2773, %v2746, %v2748
      %v2782 = vsel %vm2773, %v2750, %v2752
      %v2783 = vsel %vm2773, %v2752, %v2754
      %v2784 = vsel %vm2773, %v2756, %v2758
      %v2785 = vsel %vm2773, %v2758, %v2760
      %v2786 = vsel %vm2773, %v2762, %v2764
      %v2787 = vsel %vm2773, %v2764, %v2766
      %v2788 = vsel %vm2773, %v2768, %v2770
      %v2789 = vsel %vm2773, %v2770, %v2772
      %v2814 = vadd.f32 %v2588, %v2726
      %v2815 = vadd.f32 %v2589, %v2774
      %v2816 = vadd.f32 %v2590, %v2775
      %v2817 = vadd.f32 %v2591, %v2732
      %v2818 = vadd.f32 %v2592, %v2776
      %v2819 = vadd.f32 %v2593, %v2777
      %v2820 = vadd.f32 %v2594, %v2738
      %v2821 = vadd.f32 %v2595, %v2778
      %v2822 = vadd.f32 %v2596, %v2779
      %v2823 = vadd.f32 %v2597, %v2744
      %v2824 = vadd.f32 %v2598, %v2780
      %v2825 = vadd.f32 %v2599, %v2781
      %v2826 = vadd.f32 %v2600, %v2750
      %v2827 = vadd.f32 %v2601, %v2782
      %v2828 = vadd.f32 %v2602, %v2783
      %v2829 = vadd.f32 %v2603, %v2756
      %v2830 = vadd.f32 %v2604, %v2784
      %v2831 = vadd.f32 %v2605, %v2785
      %v2832 = vadd.f32 %v2606, %v2762
      %v2833 = vadd.f32 %v2607, %v2786
      %v2834 = vadd.f32 %v2608, %v2787
      %v2835 = vadd.f32 %v2609, %v2768
      %v2836 = vadd.f32 %v2610, %v2788
      %v2837 = vadd.f32 %v2611, %v2789
      %v2838 = vld [vmem:[%s6] sm:$0xff]
      %v2839 = vld [vmem:[%s6 + $0x8] sm:$0xff]
      %v2840 = vld [vmem:[%s6 + $0x10] sm:$0xff]
      %v2841 = vld [vmem:[%s6 + $0x18] sm:$0xff]
      %v2842 = vld [vmem:[%s6 + $0x20] sm:$0xff]
      %v2843 = vld [vmem:[%s6 + $0x28] sm:$0xff]
      %v2844 = vld [vmem:[%s6 + $0x30] sm:$0xff]
      %v2845 = vld [vmem:[%s6 + $0x38] sm:$0xff]
      %2847 = vset.pattern.permute.xlu0 0
      %2848 = vperm.xlu0 %2847, %v2838
      %v2849 = vpop.permute.xlu0 %2848
      %2852 = vset.pattern.permute.xlu0 0
      %2853 = vperm.xlu0 %2852, %v2839
      %v2854 = vpop.permute.xlu0 %2853
      %2857 = vset.pattern.permute.xlu0 0
      %2858 = vperm.xlu0 %2857, %v2840
      %v2859 = vpop.permute.xlu0 %2858
      %2862 = vset.pattern.permute.xlu0 0
      %2863 = vperm.xlu0 %2862, %v2841
      %v2864 = vpop.permute.xlu0 %2863
      %2867 = vset.pattern.permute.xlu0 0
      %2868 = vperm.xlu0 %2867, %v2842
      %v2869 = vpop.permute.xlu0 %2868
      %2872 = vset.pattern.permute.xlu0 0
      %2873 = vperm.xlu0 %2872, %v2843
      %v2874 = vpop.permute.xlu0 %2873
      %2877 = vset.pattern.permute.xlu0 0
      %2878 = vperm.xlu0 %2877, %v2844
      %v2879 = vpop.permute.xlu0 %2878
      %2882 = vset.pattern.permute.xlu0 0
      %2883 = vperm.xlu0 %2882, %v2845
      %v2884 = vpop.permute.xlu0 %2883
      %v2886 = vadd.f32 %v2814, %v2849
      %v2887 = vadd.f32 %v2815, %v2849
      %v2888 = vadd.f32 %v2816, %v2849
      %v2889 = vadd.f32 %v2817, %v2854
      %v2890 = vadd.f32 %v2818, %v2854
      %v2891 = vadd.f32 %v2819, %v2854
      %v2892 = vadd.f32 %v2820, %v2859
      %v2893 = vadd.f32 %v2821, %v2859
      %v2894 = vadd.f32 %v2822, %v2859
      %v2895 = vadd.f32 %v2823, %v2864
      %v2896 = vadd.f32 %v2824, %v2864
      %v2897 = vadd.f32 %v2825, %v2864
      %v2898 = vadd.f32 %v2826, %v2869
      %v2899 = vadd.f32 %v2827, %v2869
      %v2900 = vadd.f32 %v2828, %v2869
      %v2901 = vadd.f32 %v2829, %v2874
      %v2902 = vadd.f32 %v2830, %v2874
      %v2903 = vadd.f32 %v2831, %v2874
      %v2904 = vadd.f32 %v2832, %v2879
      %v2905 = vadd.f32 %v2833, %v2879
      %v2906 = vadd.f32 %v2834, %v2879
      %v2907 = vadd.f32 %v2835, %v2884
      %v2908 = vadd.f32 %v2836, %v2884
      %v2909 = vadd.f32 %v2837, %v2884
      %v2910 = vmul.f32 %v2886, %v2898
      %v2911 = vmul.f32 %v2887, %v2899
      %v2912 = vmul.f32 %v2888, %v2900
      %v2913 = vmul.f32 %v2889, %v2901
      %v2914 = vmul.f32 %v2890, %v2902
      %v2915 = vmul.f32 %v2891, %v2903
      %v2916 = vmul.f32 %v2892, %v2904
      %v2917 = vmul.f32 %v2893, %v2905
      %v2918 = vmul.f32 %v2894, %v2906
      %v2919 = vmul.f32 %v2895, %v2907
      %v2920 = vmul.f32 %v2896, %v2908
      %v2921 = vmul.f32 %v2897, %v2909
      %2934 = vrot.lane.b32.xlu0 %v2910, 17
      %v2935 = vpop.permute.xlu0 %2934
      %2936 = vrot.lane.b32.xlu0 %v2911, 17
      %v2937 = vpop.permute.xlu0 %2936
      %2938 = vrot.lane.b32.xlu0 %v2912, 17
      %v2939 = vpop.permute.xlu0 %2938
      %2940 = vrot.lane.b32.xlu0 %v2913, 17
      %v2941 = vpop.permute.xlu0 %2940
      %2942 = vrot.lane.b32.xlu0 %v2914, 17
      %v2943 = vpop.permute.xlu0 %2942
      %2944 = vrot.lane.b32.xlu0 %v2915, 17
      %v2945 = vpop.permute.xlu0 %2944
      %2946 = vrot.lane.b32.xlu0 %v2916, 17
      %v2947 = vpop.permute.xlu0 %2946
      %2948 = vrot.lane.b32.xlu0 %v2917, 17
      %v2949 = vpop.permute.xlu0 %2948
      %2950 = vrot.lane.b32.xlu0 %v2918, 17
      %v2951 = vpop.permute.xlu0 %2950
      %2952 = vrot.lane.b32.xlu0 %v2919, 17
      %v2953 = vpop.permute.xlu0 %2952
      %2954 = vrot.lane.b32.xlu0 %v2920, 17
      %v2955 = vpop.permute.xlu0 %2954
      %2956 = vrot.lane.b32.xlu0 %v2921, 17
      %v2957 = vpop.permute.xlu0 %2956
      %v2958 = vsel %vm2616, %v2935, %v2937
      %v2959 = vsel %vm2616, %v2937, %v2939
      %v2960 = vsel %vm2616, %v2941, %v2943
      %v2961 = vsel %vm2616, %v2943, %v2945
      %v2962 = vsel %vm2616, %v2947, %v2949
      %v2963 = vsel %vm2616, %v2949, %v2951
      %v2964 = vsel %vm2616, %v2953, %v2955
      %v2965 = vsel %vm2616, %v2955, %v2957
      %v2974 = vadd.f32 %v2958, %v2959
      %2975 = vadd.xlane.f32.xlu0 %v2974
      %v2976 = vpop.xlane.xlu0 %2975
      %v2977 = vadd.f32 %v2960, %v2961
      %2978 = vadd.xlane.f32.xlu0 %v2977
      %v2979 = vpop.xlane.xlu0 %2978
      %v2980 = vadd.f32 %v2962, %v2963
      %2981 = vadd.xlane.f32.xlu0 %v2980
      %v2982 = vpop.xlane.xlu0 %2981
      %v2983 = vadd.f32 %v2964, %v2965
      %2984 = vadd.xlane.f32.xlu0 %v2983
      %v2985 = vpop.xlane.xlu0 %2984
      %v2986 = vrcp.pop 256.0
      %v2987 = vmul.f32 %v2976, %v2986
      %v2988 = vmul.f32 %v2979, %v2986
      %v2989 = vmul.f32 %v2982, %v2986
      %v2990 = vmul.f32 %v2985, %v2986
      %v2991 = vpack.c.bf16 %v2988, %v2987
      %v2992 = vpack.c.bf16 %v2990, %v2989
      %v2993 = vld [vmem:[%s7] sm:$0xf]
      %v2994 = vld [vmem:[%s7 + $0x4] sm:$0xf]
      %v2995 = vld [vmem:[%s7 + $0x8] sm:$0xf]
      %v2996 = vld [vmem:[%s7 + $0xc] sm:$0xf]
      %v3001 = vunpack.c.l.b16 %v2993
      %v3002 = vunpack.c.l.b16 %v2994
      %v3003 = vunpack.c.l.b16 %v2995
      %v3004 = vunpack.c.l.b16 %v2996
      %v3005 = vpack.c.b16 %v3002, %v3001
      %v3006 = vpack.c.b16 %v3004, %v3003
      %v3008 = vsel %vm825, %v3005, 0
      %v3011 = vsel %vm825, %v3006, 0
      %3013 = vmatprep.subr.bf16.mxu0 0
      %3014 = vmatpush1.bf16.msra.mxu0 %v2991
      %3015 = vmatprep.subr.bf16.mxu0 0
      %3016 = vmatpush1.bf16.msra.mxu0 %v2992
      %3017 = vmatprep.subr.bf16.mxu0 0
      %3018 = vmatpush1.bf16.msra.mxu0 0
      %3019 = vmatprep.subr.bf16.mxu0 0
      %3020 = vmatpush1.bf16.msra.mxu0 0
      %3021 = vmatprep.subr.bf16.mxu0 0
      %3022 = vmatpush1.bf16.msra.mxu0 0
      %3023 = vmatprep.subr.bf16.mxu0 0
      %3024 = vmatpush1.bf16.msra.mxu0 0
      %3025 = vmatprep.subr.bf16.mxu0 0
      %3026 = vmatpush1.bf16.msra.mxu0 0
      %3027 = vmatprep.subr.bf16.mxu0 0
      %3028 = vmatpush1.bf16.msra.mxu0 0
      %3029 = vmatprep.subr.bf16.mxu0 0
      %3030 = vmatpush1.bf16.msra.mxu0 0
      %3031 = vmatprep.subr.bf16.mxu0 0
      %3032 = vmatpush1.bf16.msra.mxu0 0
      %3033 = vmatprep.subr.bf16.mxu0 0
      %3034 = vmatpush1.bf16.msra.mxu0 0
      %3035 = vmatprep.subr.bf16.mxu0 0
      %3036 = vmatpush1.bf16.msra.mxu0 0
      %3037 = vmatprep.subr.bf16.mxu0 0
      %3038 = vmatpush1.bf16.msra.mxu0 0
      %3039 = vmatprep.subr.bf16.mxu0 0
      %3040 = vmatpush1.bf16.msra.mxu0 0
      %3041 = vmatprep.subr.bf16.mxu0 0
      %3042 = vmatpush1.bf16.msra.mxu0 0
      %3043 = vmatprep.subr.bf16.mxu0 0
      %3044 = vmatpush1.bf16.msra.mxu0 0
      %3045 = vmatprep.mubr.bf16.mxu0 0
      %3046 = vmatmul.mubr.bf16.gmra.mrb[0].mxu0 %v3008
      %v3047 = vpop.f32.mrb[0].mxu0
      %v3048 = vadd.f32 0.0, %v3047
      %v3049 = vpop.f32.mrb[0].mxu0
      %v3050 = vpop.f32.mrb[0].mxu0
      %v3051 = vadd.f32 0.0, %v3050
      %v3052 = vpop.f32.mrb[0].mxu0
      %3053 = vmatprep.mubr.bf16.mxu0 0
      %3054 = vmatmul.mubr.bf16.gmra.mrb[0].mxu0 %v3011
      %v3055 = vpop.f32.mrb[0].mxu0
      %v3056 = vadd.f32 0.0, %v3055
      %v3057 = vpop.f32.mrb[0].mxu0
      %v3058 = vpop.f32.mrb[0].mxu0
      %v3059 = vadd.f32 0.0, %v3058
      %v3060 = vpop.f32.mrb[0].mxu0
      %3061 = vdwg.mxu0
      %v3062 = vld [vmem:[%s8] sm:$0xff]
      %v3063 = vld [vmem:[%s8 + $0x8] sm:$0xff]
      %v3064 = vld [vmem:[%s8 + $0x10] sm:$0xff]
      %v3065 = vld [vmem:[%s8 + $0x18] sm:$0xff]
      %v3066 = vadd.f32 %v3048, %v3062
      %v3067 = vadd.f32 %v3051, %v3063
      %v3068 = vadd.f32 %v3056, %v3064
      %v3069 = vadd.f32 %v3059, %v3065
      %3071 = vset.pattern.permute.xlu0 0
      %3072 = vperm.xlu0 %3071, %v3066
      %v3073 = vpop.permute.xlu0 %3072
      %3076 = vset.pattern.permute.xlu0 0
      %3077 = vperm.xlu0 %3076, %v3067
      %v3078 = vpop.permute.xlu0 %3077
      %3081 = vset.pattern.permute.xlu0 0
      %3082 = vperm.xlu0 %3081, %v3068
      %v3083 = vpop.permute.xlu0 %3082
      %3086 = vset.pattern.permute.xlu0 0
      %3087 = vperm.xlu0 %3086, %v3069
      %v3088 = vpop.permute.xlu0 %3087
      %v3090 = vmul.f32 %v2910, %v3073
      %v3091 = vmul.f32 %v2911, %v3073
      %v3092 = vmul.f32 %v2912, %v3073
      %v3093 = vmul.f32 %v2913, %v3078
      %v3094 = vmul.f32 %v2914, %v3078
      %v3095 = vmul.f32 %v2915, %v3078
      %v3096 = vmul.f32 %v2916, %v3083
      %v3097 = vmul.f32 %v2917, %v3083
      %v3098 = vmul.f32 %v2918, %v3083
      %v3099 = vmul.f32 %v2919, %v3088
      %v3100 = vmul.f32 %v2920, %v3088
      %v3101 = vmul.f32 %v2921, %v3088
      %v3102 = vld [vmem:[%s9] sm:$0xf]
      %v3103 = vld [vmem:[%s9 + $0x4] sm:$0xf]
      %v3104 = vld [vmem:[%s9 + $0x8] sm:$0xf]
      %v3105 = vld [vmem:[%s9 + $0xc] sm:$0xf]
      %v3106 = vpack.c.bf16 %v3093, %v3090
      %v3107 = vpack.c.bf16 %v3094, %v3091
      %v3108 = vpack.c.bf16 %v3095, %v3092
      %v3109 = vpack.c.bf16 %v3099, %v3096
      %v3110 = vpack.c.bf16 %v3100, %v3097
      %v3111 = vpack.c.bf16 %v3101, %v3098
      %v3112 = vld [vmem:[%s10] sm:$0xff]
      %v3113 = vld [vmem:[%s10 + $0x8] sm:$0xff]
      %v3114 = vld [vmem:[%s10 + $0x10] sm:$0xff]
      %v3115 = vld [vmem:[%s10 + $0x18] sm:$0xff]
      %3117 = vset.pattern.permute.xlu0 0
      %3118 = vperm.xlu0 %3117, %v3112
      %v3119 = vpop.permute.xlu0 %3118
      %3122 = vset.pattern.permute.xlu0 0
      %3123 = vperm.xlu0 %3122, %v3113
      %v3124 = vpop.permute.xlu0 %3123
      %3127 = vset.pattern.permute.xlu0 0
      %3128 = vperm.xlu0 %3127, %v3114
      %v3129 = vpop.permute.xlu0 %3128
      %3132 = vset.pattern.permute.xlu0 0
      %3133 = vperm.xlu0 %3132, %v3115
      %v3134 = vpop.permute.xlu0 %3133
      %v3140 = vunpack.c.l.b16 %v3102
      %v3141 = vunpack.c.l.b16 %v3103
      %v3142 = vunpack.c.l.b16 %v3104
      %v3143 = vunpack.c.l.b16 %v3105
      %v3144 = vpack.c.b16 %v3141, %v3140
      %v3145 = vpack.c.b16 %v3143, %v3142
      %3152 = vrot.lane.b32.xlu0 %v3106, 17
      %v3153 = vpop.permute.xlu0 %3152
      %3154 = vrot.lane.b32.xlu0 %v3107, 17
      %v3155 = vpop.permute.xlu0 %3154
      %3156 = vrot.lane.b32.xlu0 %v3108, 17
      %v3157 = vpop.permute.xlu0 %3156
      %3158 = vrot.lane.b32.xlu0 %v3109, 17
      %v3159 = vpop.permute.xlu0 %3158
      %3160 = vrot.lane.b32.xlu0 %v3110, 17
      %v3161 = vpop.permute.xlu0 %3160
      %3162 = vrot.lane.b32.xlu0 %v3111, 17
      %v3163 = vpop.permute.xlu0 %3162
      %vm3164 = vcmask 138240
      %v3165 = vsel %vm3164, %v3153, %v3155
      %v3166 = vsel %vm3164, %v3155, %v3157
      %v3167 = vsel %vm3164, %v3159, %v3161
      %v3168 = vsel %vm3164, %v3161, %v3163
      %v3174 = vsel %vm825, %v3144, 0
      %v3177 = vsel %vm825, %v3145, 0
      %3179 = vmatprep.subr.bf16.mxu0 %v3166
      %3180 = vmatpush1.bf16.msra.mxu0 %v3165
      %3181 = vmatprep.subr.bf16.mxu0 %v3168
      %3182 = vmatpush1.bf16.msra.mxu0 %v3167
      %3183 = vmatprep.subr.bf16.mxu0 0
      %3184 = vmatpush1.bf16.msra.mxu0 0
      %3185 = vmatprep.subr.bf16.mxu0 0
      %3186 = vmatpush1.bf16.msra.mxu0 0
      %3187 = vmatprep.subr.bf16.mxu0 0
      %3188 = vmatpush1.bf16.msra.mxu0 0
      %3189 = vmatprep.subr.bf16.mxu0 0
      %3190 = vmatpush1.bf16.msra.mxu0 0
      %3191 = vmatprep.subr.bf16.mxu0 0
      %3192 = vmatpush1.bf16.msra.mxu0 0
      %3193 = vmatprep.subr.bf16.mxu0 0
      %3194 = vmatpush1.bf16.msra.mxu0 0
      %3195 = vmatprep.subr.bf16.mxu0 0
      %3196 = vmatpush1.bf16.msra.mxu0 0
      %3197 = vmatprep.subr.bf16.mxu0 0
      %3198 = vmatpush1.bf16.msra.mxu0 0
      %3199 = vmatprep.subr.bf16.mxu0 0
      %3200 = vmatpush1.bf16.msra.mxu0 0
      %3201 = vmatprep.subr.bf16.mxu0 0
      %3202 = vmatpush1.bf16.msra.mxu0 0
      %3203 = vmatprep.subr.bf16.mxu0 0
      %3204 = vmatpush1.bf16.msra.mxu0 0
      %3205 = vmatprep.subr.bf16.mxu0 0
      %3206 = vmatpush1.bf16.msra.mxu0 0
      %3207 = vmatprep.subr.bf16.mxu0 0
      %3208 = vmatpush1.bf16.msra.mxu0 0
      %3209 = vmatprep.subr.bf16.mxu0 0
      %3210 = vmatpush1.bf16.msra.mxu0 0
      %3211 = vmatprep.mubr.bf16.mxu0 0
      %3212 = vmatmul.mubr.bf16.gmra.mrb[0].mxu0 %v3174
      %v3213 = vpop.f32.mrb[0].mxu0
      %v3214 = vadd.f32 %v3119, %v3213
      %v3215 = vpop.f32.mrb[0].mxu0
      %v3216 = vadd.f32 %v3119, %v3215
      %v3217 = vpop.f32.mrb[0].mxu0
      %v3218 = vadd.f32 %v3124, %v3217
      %v3219 = vpop.f32.mrb[0].mxu0
      %v3220 = vadd.f32 %v3124, %v3219
      %3221 = vmatprep.mubr.bf16.mxu0 0
      %3222 = vmatmul.mubr.bf16.gmra.mrb[0].mxu0 %v3177
      %v3223 = vpop.f32.mrb[0].mxu0
      %v3224 = vadd.f32 %v3129, %v3223
      %v3225 = vpop.f32.mrb[0].mxu0
      %v3226 = vadd.f32 %v3129, %v3225
      %v3227 = vpop.f32.mrb[0].mxu0
      %v3228 = vadd.f32 %v3134, %v3227
      %v3229 = vpop.f32.mrb[0].mxu0
      %v3230 = vadd.f32 %v3134, %v3229
      %3231 = vdwg.mxu0
      %v3232 = vld [vmem:[%s597] sm:$0xff]
      %v3233 = vld [vmem:[%s597 + $0x8] sm:$0xff]
      %v3234 = vld [vmem:[%s597 + $0x10] sm:$0xff]
      %v3235 = vld [vmem:[%s597 + $0x18] sm:$0xff]
      %v3236 = vld [vmem:[%s597 + $0x20] sm:$0xff]
      %v3237 = vld [vmem:[%s597 + $0x28] sm:$0xff]
      %v3238 = vld [vmem:[%s597 + $0x30] sm:$0xff]
      %v3239 = vld [vmem:[%s597 + $0x38] sm:$0xff]
      %v3240 = vld [vmem:[%s11] sm:$0xff]
      %v3241 = vld [vmem:[%s11 + $0x8] sm:$0xff]
      %v3242 = vld [vmem:[%s11 + $0x10] sm:$0xff]
      %v3243 = vld [vmem:[%s11 + $0x18] sm:$0xff]
      %3245 = vset.pattern.permute.xlu0 0
      %3246 = vperm.xlu0 %3245, %v3240
      %v3247 = vpop.permute.xlu0 %3246
      %3250 = vset.pattern.permute.xlu0 0
      %3251 = vperm.xlu0 %3250, %v3241
      %v3252 = vpop.permute.xlu0 %3251
      %3255 = vset.pattern.permute.xlu0 0
      %3256 = vperm.xlu0 %3255, %v3242
      %v3257 = vpop.permute.xlu0 %3256
      %3260 = vset.pattern.permute.xlu0 0
      %3261 = vperm.xlu0 %3260, %v3243
      %v3262 = vpop.permute.xlu0 %3261
      %v3264 = vmul.f32 %v3214, %v3247
      %v3265 = vmul.f32 %v3216, %v3247
      %v3266 = vmul.f32 %v3218, %v3252
      %v3267 = vmul.f32 %v3220, %v3252
      %v3268 = vmul.f32 %v3224, %v3257
      %v3269 = vmul.f32 %v3226, %v3257
      %v3270 = vmul.f32 %v3228, %v3262
      %v3271 = vmul.f32 %v3230, %v3262
      %v3272 = vadd.f32 %v3232, %v3264
      %v3273 = vadd.f32 %v3233, %v3265
      %v3274 = vadd.f32 %v3234, %v3266
      %v3275 = vadd.f32 %v3235, %v3267
      %v3276 = vadd.f32 %v3236, %v3268
      %v3277 = vadd.f32 %v3237, %v3269
      %v3278 = vadd.f32 %v3238, %v3270
      %v3279 = vadd.f32 %v3239, %v3271
      %3280 = vst [vmem:[%s602] sm:$0xff] %v3272
      %3281 = vst [vmem:[%s602 + $0x8] sm:$0xff] %v3273
      %3282 = vst [vmem:[%s602 + $0x10] sm:$0xff] %v3274
      %3283 = vst [vmem:[%s602 + $0x18] sm:$0xff] %v3275
      %3284 = vst [vmem:[%s602 + $0x20] sm:$0xff] %v3276
      %3285 = vst [vmem:[%s602 + $0x28] sm:$0xff] %v3277
      %3286 = vst [vmem:[%s602 + $0x30] sm:$0xff] %v3278
      %3287 = vst [vmem:[%s602 + $0x38] sm:$0xff] %v3279
      %v3288 = vadd.f32 %v3272, %v3274
      %v3289 = vadd.f32 %v3288, %v3276
      %v3290 = vadd.f32 %v3289, %v3278
      %v3291 = vrot.slane %v3290, 4
      %v3292 = vadd.f32 %v3290, %v3291
      %v3293 = vrot.slane %v3292, 2
      %v3294 = vadd.f32 %v3292, %v3293
      %v3295 = vrot.slane %v3294, 1
      %v3296 = vadd.f32 %v3294, %v3295
      %v3297 = vadd.f32 %v3273, %v3275
      %v3298 = vadd.f32 %v3297, %v3277
      %v3299 = vadd.f32 %v3298, %v3279
      %v3300 = vrot.slane %v3299, 4
      %v3301 = vadd.f32 %v3299, %v3300
      %v3302 = vrot.slane %v3301, 2
      %v3303 = vadd.f32 %v3301, %v3302
      %v3304 = vrot.slane %v3303, 1
      %v3305 = vadd.f32 %v3303, %v3304
      %v3306 = vmul.f32 %v3296, %v630
      %v3307 = vmul.f32 %v3305, %v630
      %v3308 = vsub.f32 %v3272, %v3306
      %v3309 = vsub.f32 %v3273, %v3307
      %v3310 = vsub.f32 %v3274, %v3306
      %v3311 = vsub.f32 %v3275, %v3307
      %v3312 = vsub.f32 %v3276, %v3306
      %v3313 = vsub.f32 %v3277, %v3307
      %v3314 = vsub.f32 %v3278, %v3306
      %v3315 = vsub.f32 %v3279, %v3307
      %v3316 = vmul.f32 %v3308, %v3308
      %v3317 = vmul.f32 %v3309, %v3309
      %v3318 = vmul.f32 %v3310, %v3310
      %v3319 = vmul.f32 %v3311, %v3311
      %v3320 = vmul.f32 %v3312, %v3312
      %v3321 = vmul.f32 %v3313, %v3313
      %v3322 = vmul.f32 %v3314, %v3314
      %v3323 = vmul.f32 %v3315, %v3315
      %v3324 = vadd.f32 %v3316, %v3318
      %v3325 = vadd.f32 %v3324, %v3320
      %v3326 = vadd.f32 %v3325, %v3322
      %v3327 = vrot.slane %v3326, 4
      %v3328 = vadd.f32 %v3326, %v3327
      %v3329 = vrot.slane %v3328, 2
      %v3330 = vadd.f32 %v3328, %v3329
      %v3331 = vrot.slane %v3330, 1
      %v3332 = vadd.f32 %v3330, %v3331
      %v3333 = vadd.f32 %v3317, %v3319
      %v3334 = vadd.f32 %v3333, %v3321
      %v3335 = vadd.f32 %v3334, %v3323
      %v3336 = vrot.slane %v3335, 4
      %v3337 = vadd.f32 %v3335, %v3336
      %v3338 = vrot.slane %v3337, 2
      %v3339 = vadd.f32 %v3337, %v3338
      %v3340 = vrot.slane %v3339, 1
      %v3341 = vadd.f32 %v3339, %v3340
      %v3342 = vmul.f32 %v3332, %v630
      %v3343 = vmul.f32 %v3341, %v630
      %v3344 = vadd.f32 %v3342, 1e-06
      %v3345 = vadd.f32 %v3343, 1e-06
      %v3346 = vrsqrt.pop %v3344
      %v3347 = vrsqrt.pop %v3345
      %v3348 = vmul.f32 %v3308, %v3346
      %v3349 = vmul.f32 %v3309, %v3347
      %v3350 = vmul.f32 %v3310, %v3346
      %v3351 = vmul.f32 %v3311, %v3347
      %v3352 = vmul.f32 %v3312, %v3346
      %v3353 = vmul.f32 %v3313, %v3347
      %v3354 = vmul.f32 %v3314, %v3346
      %v3355 = vmul.f32 %v3315, %v3347
      %v3356 = vld [vmem:[%s12] sm:$0xff]
      %v3357 = vld [vmem:[%s12 + $0x8] sm:$0xff]
      %v3358 = vld [vmem:[%s12 + $0x10] sm:$0xff]
      %v3359 = vld [vmem:[%s12 + $0x18] sm:$0xff]
      %3361 = vset.pattern.permute.xlu0 0
      %3362 = vperm.xlu0 %3361, %v3356
      %v3363 = vpop.permute.xlu0 %3362
      %3366 = vset.pattern.permute.xlu0 0
      %3367 = vperm.xlu0 %3366, %v3357
      %v3368 = vpop.permute.xlu0 %3367
      %3371 = vset.pattern.permute.xlu0 0
      %3372 = vperm.xlu0 %3371, %v3358
      %v3373 = vpop.permute.xlu0 %3372
      %3376 = vset.pattern.permute.xlu0 0
      %3377 = vperm.xlu0 %3376, %v3359
      %v3378 = vpop.permute.xlu0 %3377
      %v3380 = vmul.f32 %v3348, %v3363
      %v3381 = vmul.f32 %v3349, %v3363
      %v3382 = vmul.f32 %v3350, %v3368
      %v3383 = vmul.f32 %v3351, %v3368
      %v3384 = vmul.f32 %v3352, %v3373
      %v3385 = vmul.f32 %v3353, %v3373
      %v3386 = vmul.f32 %v3354, %v3378
      %v3387 = vmul.f32 %v3355, %v3378
      %v3388 = vld [vmem:[%s13] sm:$0xff]
      %v3389 = vld [vmem:[%s13 + $0x8] sm:$0xff]
      %v3390 = vld [vmem:[%s13 + $0x10] sm:$0xff]
      %v3391 = vld [vmem:[%s13 + $0x18] sm:$0xff]
      %3393 = vset.pattern.permute.xlu0 0
      %3394 = vperm.xlu0 %3393, %v3388
      %v3395 = vpop.permute.xlu0 %3394
      %3398 = vset.pattern.permute.xlu0 0
      %3399 = vperm.xlu0 %3398, %v3389
      %v3400 = vpop.permute.xlu0 %3399
      %3403 = vset.pattern.permute.xlu0 0
      %3404 = vperm.xlu0 %3403, %v3390
      %v3405 = vpop.permute.xlu0 %3404
      %3408 = vset.pattern.permute.xlu0 0
      %3409 = vperm.xlu0 %3408, %v3391
      %v3410 = vpop.permute.xlu0 %3409
      %v3412 = vadd.f32 %v3380, %v3395
      %v3413 = vadd.f32 %v3381, %v3395
      %v3414 = vadd.f32 %v3382, %v3400
      %v3415 = vadd.f32 %v3383, %v3400
      %v3416 = vadd.f32 %v3384, %v3405
      %v3417 = vadd.f32 %v3385, %v3405
      %v3418 = vadd.f32 %v3386, %v3410
      %v3419 = vadd.f32 %v3387, %v3410
      %v3420 = vld [vmem:[%s14] sm:$0xf]
      %v3421 = vld [vmem:[%s14 + $0x4] sm:$0xf]
      %v3422 = vld [vmem:[%s14 + $0x8] sm:$0xf]
      %v3423 = vld [vmem:[%s14 + $0xc] sm:$0xf]
      %v3424 = vld [vmem:[%s14 + $0x10] sm:$0xf]
      %v3425 = vld [vmem:[%s14 + $0x14] sm:$0xf]
      %v3426 = vld [vmem:[%s14 + $0x18] sm:$0xf]
      %v3427 = vld [vmem:[%s14 + $0x1c] sm:$0xf]
      %v3428 = vpack.c.bf16 %v3414, %v3412
      %v3429 = vpack.c.bf16 %v3415, %v3413
      %v3430 = vpack.c.bf16 %v3418, %v3416
      %v3431 = vpack.c.bf16 %v3419, %v3417
      %v3432 = vld [vmem:[%s15] sm:$0xff]
      %v3433 = vld [vmem:[%s15 + $0x8] sm:$0xff]
      %v3434 = vld [vmem:[%s15 + $0x10] sm:$0xff]
      %v3435 = vld [vmem:[%s15 + $0x18] sm:$0xff]
      %v3436 = vld [vmem:[%s15 + $0x20] sm:$0xff]
      %v3437 = vld [vmem:[%s15 + $0x28] sm:$0xff]
      %v3438 = vld [vmem:[%s15 + $0x30] sm:$0xff]
      %v3439 = vld [vmem:[%s15 + $0x38] sm:$0xff]
      %3441 = vset.pattern.permute.xlu0 0
      %3442 = vperm.xlu0 %3441, %v3432
      %v3443 = vpop.permute.xlu0 %3442
      %3446 = vset.pattern.permute.xlu0 0
      %3447 = vperm.xlu0 %3446, %v3433
      %v3448 = vpop.permute.xlu0 %3447
      %3451 = vset.pattern.permute.xlu0 0
      %3452 = vperm.xlu0 %3451, %v3434
      %v3453 = vpop.permute.xlu0 %3452
      %3456 = vset.pattern.permute.xlu0 0
      %3457 = vperm.xlu0 %3456, %v3435
      %v3458 = vpop.permute.xlu0 %3457
      %3461 = vset.pattern.permute.xlu0 0
      %3462 = vperm.xlu0 %3461, %v3436
      %v3463 = vpop.permute.xlu0 %3462
      %3466 = vset.pattern.permute.xlu0 0
      %3467 = vperm.xlu0 %3466, %v3437
      %v3468 = vpop.permute.xlu0 %3467
      %3471 = vset.pattern.permute.xlu0 0
      %3472 = vperm.xlu0 %3471, %v3438
      %v3473 = vpop.permute.xlu0 %3472
      %3476 = vset.pattern.permute.xlu0 0
      %3477 = vperm.xlu0 %3476, %v3439
      %v3478 = vpop.permute.xlu0 %3477
      %v3488 = vunpack.c.l.b16 %v3420
      %v3489 = vunpack.c.l.b16 %v3421
      %v3490 = vunpack.c.l.b16 %v3422
      %v3491 = vunpack.c.l.b16 %v3423
      %v3492 = vunpack.c.l.b16 %v3424
      %v3493 = vunpack.c.l.b16 %v3425
      %v3494 = vunpack.c.l.b16 %v3426
      %v3495 = vunpack.c.l.b16 %v3427
      %v3496 = vpack.c.b16 %v3489, %v3488
      %v3497 = vpack.c.b16 %v3491, %v3490
      %v3498 = vpack.c.b16 %v3493, %v3492
      %v3499 = vpack.c.b16 %v3495, %v3494
      %v3501 = vsel %vm825, %v3496, 0
      %v3504 = vsel %vm825, %v3497, 0
      %v3507 = vsel %vm825, %v3498, 0
      %v3510 = vsel %vm825, %v3499, 0
      %3512 = vmatprep.subr.bf16.mxu0 %v3429
      %3513 = vmatpush1.bf16.msra.mxu0 %v3428
      %3514 = vmatprep.subr.bf16.mxu0 %v3431
      %3515 = vmatpush1.bf16.msra.mxu0 %v3430
      %3516 = vmatprep.subr.bf16.mxu0 0
      %3517 = vmatpush1.bf16.msra.mxu0 0
      %3518 = vmatprep.subr.bf16.mxu0 0
      %3519 = vmatpush1.bf16.msra.mxu0 0
      %3520 = vmatprep.subr.bf16.mxu0 0
      %3521 = vmatpush1.bf16.msra.mxu0 0
      %3522 = vmatprep.subr.bf16.mxu0 0
      %3523 = vmatpush1.bf16.msra.mxu0 0
      %3524 = vmatprep.subr.bf16.mxu0 0
      %3525 = vmatpush1.bf16.msra.mxu0 0
      %3526 = vmatprep.subr.bf16.mxu0 0
      %3527 = vmatpush1.bf16.msra.mxu0 0
      %3528 = vmatprep.subr.bf16.mxu0 0
      %3529 = vmatpush1.bf16.msra.mxu0 0
      %3530 = vmatprep.subr.bf16.mxu0 0
      %3531 = vmatpush1.bf16.msra.mxu0 0
      %3532 = vmatprep.subr.bf16.mxu0 0
      %3533 = vmatpush1.bf16.msra.mxu0 0
      %3534 = vmatprep.subr.bf16.mxu0 0
      %3535 = vmatpush1.bf16.msra.mxu0 0
      %3536 = vmatprep.subr.bf16.mxu0 0
      %3537 = vmatpush1.bf16.msra.mxu0 0
      %3538 = vmatprep.subr.bf16.mxu0 0
      %3539 = vmatpush1.bf16.msra.mxu0 0
      %3540 = vmatprep.subr.bf16.mxu0 0
      %3541 = vmatpush1.bf16.msra.mxu0 0
      %3542 = vmatprep.subr.bf16.mxu0 0
      %3543 = vmatpush1.bf16.msra.mxu0 0
      %3544 = vmatprep.mubr.bf16.mxu0 0
      %3545 = vmatmul.mubr.bf16.gmra.mrb[0].mxu0 %v3501
      %v3546 = vpop.f32.mrb[0].mxu0
      %v3547 = vadd.f32 %v3443, %v3546
      %v3548 = vpop.f32.mrb[0].mxu0
      %v3549 = vadd.f32 %v3443, %v3548
      %v3550 = vpop.f32.mrb[0].mxu0
      %v3551 = vadd.f32 %v3448, %v3550
      %v3552 = vpop.f32.mrb[0].mxu0
      %v3553 = vadd.f32 %v3448, %v3552
      %3554 = vmatprep.mubr.bf16.mxu0 0
      %3555 = vmatmul.mubr.bf16.gmra.mrb[0].mxu0 %v3504
      %v3556 = vpop.f32.mrb[0].mxu0
      %v3557 = vadd.f32 %v3453, %v3556
      %v3558 = vpop.f32.mrb[0].mxu0
      %v3559 = vadd.f32 %v3453, %v3558
      %v3560 = vpop.f32.mrb[0].mxu0
      %v3561 = vadd.f32 %v3458, %v3560
      %v3562 = vpop.f32.mrb[0].mxu0
      %v3563 = vadd.f32 %v3458, %v3562
      %3564 = vmatprep.mubr.bf16.mxu0 0
      %3565 = vmatmul.mubr.bf16.gmra.mrb[0].mxu0 %v3507
      %v3566 = vpop.f32.mrb[0].mxu0
      %v3567 = vadd.f32 %v3463, %v3566
      %v3568 = vpop.f32.mrb[0].mxu0
      %v3569 = vadd.f32 %v3463, %v3568
      %v3570 = vpop.f32.mrb[0].mxu0
      %v3571 = vadd.f32 %v3468, %v3570
      %v3572 = vpop.f32.mrb[0].mxu0
      %v3573 = vadd.f32 %v3468, %v3572
      %3574 = vmatprep.mubr.bf16.mxu0 0
      %3575 = vmatmul.mubr.bf16.gmra.mrb[0].mxu0 %v3510
      %v3576 = vpop.f32.mrb[0].mxu0
      %v3577 = vadd.f32 %v3473, %v3576
      %v3578 = vpop.f32.mrb[0].mxu0
      %v3579 = vadd.f32 %v3473, %v3578
      %v3580 = vpop.f32.mrb[0].mxu0
      %v3581 = vadd.f32 %v3478, %v3580
      %v3582 = vpop.f32.mrb[0].mxu0
      %v3583 = vadd.f32 %v3478, %v3582
      %3584 = vdwg.mxu0
      %v3585 = vmul.f32 %v3547, %v3567
      %v3586 = vmul.f32 %v3549, %v3569
      %v3587 = vmul.f32 %v3551, %v3571
      %v3588 = vmul.f32 %v3553, %v3573
      %v3589 = vmul.f32 %v3557, %v3577
      %v3590 = vmul.f32 %v3559, %v3579
      %v3591 = vmul.f32 %v3561, %v3581
      %v3592 = vmul.f32 %v3563, %v3583
      %v3593 = vld [vmem:[%s16] sm:$0xf]
      %v3594 = vld [vmem:[%s16 + $0x4] sm:$0xf]
      %v3595 = vld [vmem:[%s16 + $0x8] sm:$0xf]
      %v3596 = vld [vmem:[%s16 + $0xc] sm:$0xf]
      %v3597 = vpack.c.bf16 %v3587, %v3585
      %v3598 = vpack.c.bf16 %v3588, %v3586
      %v3599 = vpack.c.bf16 %v3591, %v3589
      %v3600 = vpack.c.bf16 %v3592, %v3590
      %v3601 = vld [vmem:[%s17] sm:$0xff]
      %v3602 = vld [vmem:[%s17 + $0x8] sm:$0xff]
      %v3603 = vld [vmem:[%s17 + $0x10] sm:$0xff]
      %v3604 = vld [vmem:[%s17 + $0x18] sm:$0xff]
      %3606 = vset.pattern.permute.xlu0 0
      %3607 = vperm.xlu0 %3606, %v3601
      %v3608 = vpop.permute.xlu0 %3607
      %3611 = vset.pattern.permute.xlu0 0
      %3612 = vperm.xlu0 %3611, %v3602
      %v3613 = vpop.permute.xlu0 %3612
      %3616 = vset.pattern.permute.xlu0 0
      %3617 = vperm.xlu0 %3616, %v3603
      %v3618 = vpop.permute.xlu0 %3617
      %3621 = vset.pattern.permute.xlu0 0
      %3622 = vperm.xlu0 %3621, %v3604
      %v3623 = vpop.permute.xlu0 %3622
      %v3629 = vunpack.c.l.b16 %v3593
      %v3630 = vunpack.c.l.b16 %v3594
      %v3631 = vunpack.c.l.b16 %v3595
      %v3632 = vunpack.c.l.b16 %v3596
      %v3633 = vpack.c.b16 %v3630, %v3629
      %v3634 = vpack.c.b16 %v3632, %v3631
      %v3636 = vsel %vm825, %v3633, 0
      %v3639 = vsel %vm825, %v3634, 0
      %3641 = vmatprep.subr.bf16.mxu0 %v3598
      %3642 = vmatpush1.bf16.msra.mxu0 %v3597
      %3643 = vmatprep.subr.bf16.mxu0 %v3600
      %3644 = vmatpush1.bf16.msra.mxu0 %v3599
      %3645 = vmatprep.subr.bf16.mxu0 0
      %3646 = vmatpush1.bf16.msra.mxu0 0
      %3647 = vmatprep.subr.bf16.mxu0 0
      %3648 = vmatpush1.bf16.msra.mxu0 0
      %3649 = vmatprep.subr.bf16.mxu0 0
      %3650 = vmatpush1.bf16.msra.mxu0 0
      %3651 = vmatprep.subr.bf16.mxu0 0
      %3652 = vmatpush1.bf16.msra.mxu0 0
      %3653 = vmatprep.subr.bf16.mxu0 0
      %3654 = vmatpush1.bf16.msra.mxu0 0
      %3655 = vmatprep.subr.bf16.mxu0 0
      %3656 = vmatpush1.bf16.msra.mxu0 0
      %3657 = vmatprep.subr.bf16.mxu0 0
      %3658 = vmatpush1.bf16.msra.mxu0 0
      %3659 = vmatprep.subr.bf16.mxu0 0
      %3660 = vmatpush1.bf16.msra.mxu0 0
      %3661 = vmatprep.subr.bf16.mxu0 0
      %3662 = vmatpush1.bf16.msra.mxu0 0
      %3663 = vmatprep.subr.bf16.mxu0 0
      %3664 = vmatpush1.bf16.msra.mxu0 0
      %3665 = vmatprep.subr.bf16.mxu0 0
      %3666 = vmatpush1.bf16.msra.mxu0 0
      %3667 = vmatprep.subr.bf16.mxu0 0
      %3668 = vmatpush1.bf16.msra.mxu0 0
      %3669 = vmatprep.subr.bf16.mxu0 0
      %3670 = vmatpush1.bf16.msra.mxu0 0
      %3671 = vmatprep.subr.bf16.mxu0 0
      %3672 = vmatpush1.bf16.msra.mxu0 0
      %3673 = vmatprep.mubr.bf16.mxu0 0
      %3674 = vmatmul.mubr.bf16.gmra.mrb[0].mxu0 %v3636
      %v3675 = vpop.f32.mrb[0].mxu0
      %v3676 = vadd.f32 %v3608, %v3675
      %v3677 = vpop.f32.mrb[0].mxu0
      %v3678 = vadd.f32 %v3608, %v3677
      %v3679 = vpop.f32.mrb[0].mxu0
      %v3680 = vadd.f32 %v3613, %v3679
      %v3681 = vpop.f32.mrb[0].mxu0
      %v3682 = vadd.f32 %v3613, %v3681
      %3683 = vmatprep.mubr.bf16.mxu0 0
      %3684 = vmatmul.mubr.bf16.gmra.mrb[0].mxu0 %v3639
      %v3685 = vpop.f32.mrb[0].mxu0
      %v3686 = vadd.f32 %v3618, %v3685
      %v3687 = vpop.f32.mrb[0].mxu0
      %v3688 = vadd.f32 %v3618, %v3687
      %v3689 = vpop.f32.mrb[0].mxu0
      %v3690 = vadd.f32 %v3623, %v3689
      %v3691 = vpop.f32.mrb[0].mxu0
      %v3692 = vadd.f32 %v3623, %v3691
      %3693 = vdwg.mxu0
      %v3694 = vld [vmem:[%s602] sm:$0xff]
      %v3695 = vld [vmem:[%s602 + $0x8] sm:$0xff]
      %v3696 = vld [vmem:[%s602 + $0x10] sm:$0xff]
      %v3697 = vld [vmem:[%s602 + $0x18] sm:$0xff]
      %v3698 = vld [vmem:[%s602 + $0x20] sm:$0xff]
      %v3699 = vld [vmem:[%s602 + $0x28] sm:$0xff]
      %v3700 = vld [vmem:[%s602 + $0x30] sm:$0xff]
      %v3701 = vld [vmem:[%s602 + $0x38] sm:$0xff]
      %v3702 = vld [vmem:[%s18] sm:$0xff]
      %v3703 = vld [vmem:[%s18 + $0x8] sm:$0xff]
      %v3704 = vld [vmem:[%s18 + $0x10] sm:$0xff]
      %v3705 = vld [vmem:[%s18 + $0x18] sm:$0xff]
      %3707 = vset.pattern.permute.xlu0 0
      %3708 = vperm.xlu0 %3707, %v3702
      %v3709 = vpop.permute.xlu0 %3708
      %3712 = vset.pattern.permute.xlu0 0
      %3713 = vperm.xlu0 %3712, %v3703
      %v3714 = vpop.permute.xlu0 %3713
      %3717 = vset.pattern.permute.xlu0 0
      %3718 = vperm.xlu0 %3717, %v3704
      %v3719 = vpop.permute.xlu0 %3718
      %3722 = vset.pattern.permute.xlu0 0
      %3723 = vperm.xlu0 %3722, %v3705
      %v3724 = vpop.permute.xlu0 %3723
      %v3726 = vmul.f32 %v3676, %v3709
      %v3727 = vmul.f32 %v3678, %v3709
      %v3728 = vmul.f32 %v3680, %v3714
      %v3729 = vmul.f32 %v3682, %v3714
      %v3730 = vmul.f32 %v3686, %v3719
      %v3731 = vmul.f32 %v3688, %v3719
      %v3732 = vmul.f32 %v3690, %v3724
      %v3733 = vmul.f32 %v3692, %v3724
      %v3734 = vadd.f32 %v3694, %v3726
      %v3735 = vadd.f32 %v3695, %v3727
      %v3736 = vadd.f32 %v3696, %v3728
      %v3737 = vadd.f32 %v3697, %v3729
      %v3738 = vadd.f32 %v3698, %v3730
      %v3739 = vadd.f32 %v3699, %v3731
      %v3740 = vadd.f32 %v3700, %v3732
      %v3741 = vadd.f32 %v3701, %v3733
      %3742 = vst [vmem:[%s602] sm:$0xff] %v3734
      %3743 = vst [vmem:[%s602 + $0x8] sm:$0xff] %v3735
      %3744 = vst [vmem:[%s602 + $0x10] sm:$0xff] %v3736
      %3745 = vst [vmem:[%s602 + $0x18] sm:$0xff] %v3737
      %3746 = vst [vmem:[%s602 + $0x20] sm:$0xff] %v3738
      %3747 = vst [vmem:[%s602 + $0x28] sm:$0xff] %v3739
      %3748 = vst [vmem:[%s602 + $0x30] sm:$0xff] %v3740
      %3749 = vst [vmem:[%s602 + $0x38] sm:$0xff] %v3741
      %p3750 = scmp.lt.s32.totalorder %s30, 1
      %s3751 = scalar_select %p3750, %s30, 1
      %s3752 = smul.addr %s3751, 8
      %s3753 = smul.addr %s3752, 8
      %s3754 = scalar_lea.vmem %s19, %s3753
      // Predicated region
      $region97: #{nafblock_forward.1} parent=95 // pred_check
        %p3755 = pneg %p452
      $region98: #{nafblock_forward.1} parent=95 // pred_check_branch
        %3757 = sbr.rel (%p3755) target = $region100
      $region99: #{nafblock_forward.1} parent=95 // pred_region
        _
      $region100: #{nafblock_forward.1} parent=95 // pred_fallthru
        _
    $region96: #{nafblock_forward.1} parent=5 // pred_fallthru
      _
    %p3758 = scmp.le.s32.totalorder 2, %s25
    // Predicated region
    $region101: #{nafblock_forward.1} parent=5 // pred_check
      %p3759 = pneg %p3758
    $region102: #{nafblock_forward.1} parent=5 // pred_check_branch
      %3761 = sbr.rel (%p3759) target = $region104
    $region103: #{nafblock_forward.1} parent=5 // pred_region
      %s3762 = ssub.s32 %s25, 2
      // Predicated region
      $region105: #{nafblock_forward.1} parent=103 // pred_check
        %p3763 = pneg %p458
      $region106: #{nafblock_forward.1} parent=103 // pred_check_branch
        %3765 = sbr.rel (%p3763) target = $region108
      $region107: #{nafblock_forward.1} parent=103 // pred_region
        %p3766 = scmp.lt.s32.totalorder %s31, 1
        %s3767 = scalar_select %p3766, %s31, 1
        %s3768 = smul.addr %s3767, 8
        %s3769 = smul.addr %s3768, 8
        %s3770 = scalar_lea.vmem %s19, %s3769
      $region108: #{nafblock_forward.1} parent=103 // pred_fallthru
        _
    $region104: #{nafblock_forward.1} parent=5 // pred_fallthru
      _
  $region6: #{nafblock_forward.1} parent=0 // loop_footer
    %s29 = sadd.s32 1, %s25
  $region7: #{nafblock_forward.1} parent=0 // loop_footer_branch
    %24 = sbr.rel target = $region3
  $region8: #{nafblock_forward.1} parent=0 // loop_exit
    _

</llo_original>
